<compile_context>
chip_gen: v6e
topology: v6e:2x2x1
jax: 0.10.0
libtpu: 0.0.40
codegen_flags: <defaults>
</compile_context>

<pallas_src>
import functools

import jax
import jax.numpy as jnp
from jax.experimental import pallas as pl
from jax.experimental.pallas import tpu as pltpu


def _lstm_kernel(x0g_ref, w_hh0_ref, w_ih_ref, w_hh_ref, b_ref, w_fc_ref,
                 b_fc_ref, out_ref, h_scr, c_scr, *, num_layers, latent_dim,
                 time_block):
    """One (batch-block, time-block) grid step of the stacked LSTM."""
    tb = pl.program_id(1)  # time-block index (recurrent axis)

    @pl.when(tb == 0)
    def _():
        h_scr[...] = jnp.zeros_like(h_scr)
        c_scr[...] = jnp.zeros_like(c_scr)

    L = latent_dim
    w_dt = w_hh0_ref.dtype

    def _cell(gates, c_prev):
        # PyTorch gate order: i, f, g, o.  Nonlinearities kept in f32 (EUP).
        i_g = jax.nn.sigmoid(gates[:, 0 * L:1 * L])
        f_g = jax.nn.sigmoid(gates[:, 1 * L:2 * L])
        g_g = jnp.tanh(gates[:, 2 * L:3 * L])
        o_g = jax.nn.sigmoid(gates[:, 3 * L:4 * L])
        c_new = f_g * c_prev + i_g * g_g
        h_new = o_g * jnp.tanh(c_new)
        return h_new, c_new

    inp = None
    # Static unroll of the time block (time_block is small: <= 16).
    for s in range(time_block):
        # ---- layer 0: the input contribution (input_mapping folded into
        # W_ih[0], plus biases) was precomputed outside the recurrence, so a
        # single recurrent matmul remains on the critical path.
        h_prev = h_scr[0]
        gates0 = x0g_ref[s] + jnp.dot(h_prev.astype(w_dt), w_hh0_ref[...],
                                      preferred_element_type=jnp.float32)
        h_new, c_new = _cell(gates0, c_scr[0])
        h_scr[0] = h_new
        c_scr[0] = c_new
        inp = h_new

        # ---- layers 1..: two small MXU dots (x @ W_ih^T, h @ W_hh^T) + bias.
        for layer in range(1, num_layers):
            h_prev = h_scr[layer]
            gates = (jnp.dot(inp.astype(w_dt), w_ih_ref[layer - 1],
                             preferred_element_type=jnp.float32)
                     + jnp.dot(h_prev.astype(w_dt), w_hh_ref[layer - 1],
                               preferred_element_type=jnp.float32)
                     + b_ref[layer - 1])
            h_new, c_new = _cell(gates, c_scr[layer])
            h_scr[layer] = h_new
            c_scr[layer] = c_new
            inp = h_new

    # Final fc on the very last timestep's top-layer hidden state.
    @pl.when(tb == pl.num_programs(1) - 1)
    def _():
        out_ref[...] = (jnp.dot(inp.astype(w_fc_ref.dtype), w_fc_ref[...],
                                preferred_element_type=jnp.float32)
                        + b_fc_ref[...]).astype(out_ref.dtype)


def _largest_divisor_leq(n, cap):
    best = 1
    for d in range(1, min(n, cap) + 1):
        if n % d == 0:
            best = d
    return best


def lstm_forward(x, params, *, num_layers, latent_dim, num_classes,
                 time_block=None, batch_block=None, weight_dtype=jnp.float32):
    """x: (B, T, input_dim) float32 (batch_first).  Returns (B, num_classes)."""
    B, T, D_in = x.shape
    L = latent_dim
    w_in, b_in, w_ih, w_hh, b_lstm, w_fc, b_fc = params

    # ---------------- wrapper-side weight prep (one-shot, trace time) -------
    # Fold input_mapping into layer-0 and hoist the non-recurrent input matmul
    # out of the time loop as one big MXU-efficient matmul:
    #   (x @ W_in.T + b_in) @ W_ih0.T + b0
    #     = x @ (W_ih0 @ W_in).T + (b_in @ W_ih0.T + b0)
    w0 = jnp.transpose(w_ih[0] @ w_in)                    # (D_in, 4L)
    b0 = b_in @ jnp.transpose(w_ih[0]) + b_lstm[0]        # (1, 4L)
    x0g = jnp.einsum('btd,dg->tbg', x.astype(jnp.float32), w0) + b0  # (T, B, 4L)

    # Pre-transposed recurrent weights (no in-kernel transposes / concats).
    w_hh0 = jnp.transpose(w_hh[0]).astype(weight_dtype)   # (L, 4L)
    if num_layers > 1:
        w_ih_t = jnp.transpose(w_ih[1:], (0, 2, 1))        # (NL-1, L, 4L)
        w_hh_t = jnp.transpose(w_hh[1:], (0, 2, 1))        # (NL-1, L, 4L)
        b_up = b_lstm[1:]                                  # (NL-1, 1, 4L)
    else:
        # Dummies (never read in the kernel when num_layers == 1).
        w_ih_t = jnp.zeros((1, L, 4 * L), jnp.float32)
        w_hh_t = jnp.zeros((1, L, 4 * L), jnp.float32)
        b_up = jnp.zeros((1, 1, 4 * L), jnp.float32)
    w_ih_t = w_ih_t.astype(weight_dtype)
    w_hh_t = w_hh_t.astype(weight_dtype)
    b_up = b_up.astype(jnp.float32)
    w_fc_t = jnp.transpose(w_fc).astype(weight_dtype)      # (L, C)
    b_fc = b_fc.astype(jnp.float32)
    nl1 = w_ih_t.shape[0]

    # ---------------- tiling -------------------------------------------------
    if time_block is None:
        time_block = _largest_divisor_leq(T, 16)
    assert T % time_block == 0, "ragged time blocks not supported"
    # TODO(synk): ragged T (T % time_block != 0) would need per-step masking.
    if batch_block is None:
        batch_block = B          # split only when B is a large multiple of 8
    assert B % batch_block == 0
    n_bb = B // batch_block
    n_tb = T // time_block

    # ---------------- VMEM budget -------------------------------------------
    wbytes = jnp.dtype(weight_dtype).itemsize
    est_bytes = 2 * (
        time_block * batch_block * 4 * L * 4                       # x0g block
        + (L * 4 * L + 2 * nl1 * L * 4 * L + L * num_classes) * wbytes
        + (nl1 + 1) * 4 * L * 4 + num_classes * 4                  # biases
        + batch_block * num_classes * 4                            # out block
    ) + 2 * num_layers * batch_block * L * 4                       # h/c scratch
    vmem_limit = int(min(100 * 2**20, max(32 * 2**20, 4 * est_bytes)))

    kernel = functools.partial(_lstm_kernel, num_layers=num_layers,
                               latent_dim=L, time_block=time_block)

    grid_spec = pltpu.PrefetchScalarGridSpec(
        num_scalar_prefetch=0,
        grid=(n_bb, n_tb),
        in_specs=[
            pl.BlockSpec((time_block, batch_block, 4 * L),
                         lambda b, t: (t, b, 0)),                    # x0g
            pl.BlockSpec((L, 4 * L), lambda b, t: (0, 0)),           # w_hh0
            pl.BlockSpec((nl1, L, 4 * L), lambda b, t: (0, 0, 0)),   # w_ih 1..
            pl.BlockSpec((nl1, L, 4 * L), lambda b, t: (0, 0, 0)),   # w_hh 1..
            pl.BlockSpec((nl1, 1, 4 * L), lambda b, t: (0, 0, 0)),   # bias 1..
            pl.BlockSpec((L, num_classes), lambda b, t: (0, 0)),     # w_fc
            pl.BlockSpec((1, num_classes), lambda b, t: (0, 0)),     # b_fc
        ],
        out_specs=pl.BlockSpec((batch_block, num_classes),
                               lambda b, t: (b, 0)),
        scratch_shapes=[
            pltpu.VMEM((num_layers, batch_block, L), jnp.float32),   # h
            pltpu.VMEM((num_layers, batch_block, L), jnp.float32),   # c
        ],
    )

    return pl.pallas_call(
        kernel,
        out_shape=jax.ShapeDtypeStruct((B, num_classes), jnp.float32),
        grid_spec=grid_spec,
        compiler_params=pltpu.CompilerParams(
            dimension_semantics=("parallel", "arbitrary"),  # time = recurrence
            vmem_limit_bytes=vmem_limit),
    )(x0g, w_hh0, w_ih_t, w_hh_t, b_up, w_fc_t, b_fc)


def lstm_reference(x, params, *, num_layers, latent_dim, num_classes):
    """Pure-JAX reference matching PyTorch LSTM semantics (for checking)."""
    w_in, b_in, w_ih, w_hh, b_lstm, w_fc, b_fc = params
    B, T, _ = x.shape
    L = latent_dim
    inp_seq = jnp.einsum('btd,ld->btl', x, w_in) + b_in[0]
    h = jnp.zeros((num_layers, B, L), jnp.float32)
    c = jnp.zeros((num_layers, B, L), jnp.float32)

    def step(carry, x_t):
        h, c = carry
        layer_in = x_t
        h_new, c_new = [], []
        for l in range(num_layers):
            gates = (layer_in @ w_ih[l].T + h[l] @ w_hh[l].T + b_lstm[l, 0])
            i = jax.nn.sigmoid(gates[:, 0 * L:1 * L])
            f = jax.nn.sigmoid(gates[:, 1 * L:2 * L])
            g = jnp.tanh(gates[:, 2 * L:3 * L])
            o = jax.nn.sigmoid(gates[:, 3 * L:4 * L])
            cl = f * c[l] + i * g
            hl = o * jnp.tanh(cl)
            h_new.append(hl)
            c_new.append(cl)
            layer_in = hl
        return (jnp.stack(h_new), jnp.stack(c_new)), layer_in

    (h, c), _ = jax.lax.scan(step, (h, c), jnp.transpose(inp_seq, (1, 0, 2)))
    last = h[-1]  # top layer hidden at last time step
    return last @ w_fc.T + b_fc[0]


def init_params(key, input_dim, latent_dim, num_layers, num_classes):
    L = latent_dim
    ks = jax.random.split(key, 7)
    scale = 0.1
    w_in = scale * jax.random.normal(ks[0], (L, input_dim), jnp.float32)
    b_in = scale * jax.random.normal(ks[1], (1, L), jnp.float32)
    # nn.LSTM: per layer weight_ih (4L, L_in), weight_hh (4L, L), b_ih + b_hh
    # (modelled as one combined bias).  Layer 0 input is latent_dim (after
    # input_mapping), so all layers are (4L, L).
    w_ih = scale * jax.random.normal(ks[2], (num_layers, 4 * L, L), jnp.float32)
    w_hh = scale * jax.random.normal(ks[3], (num_layers, 4 * L, L), jnp.float32)
    b_lstm = scale * jax.random.normal(ks[4], (num_layers, 1, 4 * L), jnp.float32)
    w_fc = scale * jax.random.normal(ks[5], (num_classes, L), jnp.float32)
    b_fc = scale * jax.random.normal(ks[6], (1, num_classes), jnp.float32)
    return (w_in, b_in, w_ih, w_hh, b_lstm, w_fc, b_fc)


if __name__ == "__main__":
    # TODO(synk): PackedSequence / static_input / use_all_seq branches of the
    # PyTorch forward are ragged-sequence glue; only the dense-tensor path
    # (batch_first tensor in -> logits of last timestep) is implemented.
    B, T = 2, 8
    input_dim, latent_dim, num_layers, num_classes = 16, 32, 2, 8

    key = jax.random.PRNGKey(0)
    k_x, k_p = jax.random.split(key)
    x = jax.random.normal(k_x, (B, T, input_dim), jnp.float32)
    params = init_params(k_p, input_dim, latent_dim, num_layers, num_classes)

    # f32 weights here so the demo is also correct-regime on v5e; pass
    # weight_dtype=jnp.bfloat16 on v6e/v7x for 2x MXU throughput.
    out = lstm_forward(x, params, num_layers=num_layers,
                       latent_dim=latent_dim, num_classes=num_classes)
    out = jax.block_until_ready(out)

    ref = lstm_reference(x, params, num_layers=num_layers,
                         latent_dim=latent_dim, num_classes=num_classes)
    ref = jax.block_until_ready(ref)

    assert out.shape == (B, num_classes)
    assert jnp.allclose(out, ref, atol=1e-4, rtol=1e-4), (out, ref)
    print("KERNEL_OK")
</pallas_src>

<mosaic_0001>
module attributes {stable_mosaic.version = 11 : i64} {
  func.func @_lstm_kernel(%arg0: i32, %arg1: i32, %arg2: memref<8x2x128xf32, #tpu.memory_space<vmem>>, %arg3: memref<32x128xf32, #tpu.memory_space<vmem>>, %arg4: memref<1x32x128xf32, #tpu.memory_space<vmem>>, %arg5: memref<1x32x128xf32, #tpu.memory_space<vmem>>, %arg6: memref<1x1x128xf32, #tpu.memory_space<vmem>>, %arg7: memref<32x8xf32, #tpu.memory_space<vmem>>, %arg8: memref<1x8xf32, #tpu.memory_space<vmem>>, %arg9: memref<2x8xf32, #tpu.memory_space<vmem>>, %arg10: memref<2x2x32xf32, #tpu.memory_space<vmem>>, %arg11: memref<2x2x32xf32, #tpu.memory_space<vmem>>) attributes {dimension_semantics = [#tpu.dimension_semantics<parallel>, #tpu.dimension_semantics<arbitrary>], iteration_bounds = array<i64: 1, 1>, scalar_prefetch = 0 : i64, scratch_operands = 2 : i64, tpu.core_type = #tpu.core_type<tc>, window_params = [{transform_indices = @transform_0, window_bounds = array<i64: 8, 2, 128>}, {pipeline_mode = #tpu.pipeline_mode<synchronous>, transform_indices = @transform_1, window_bounds = array<i64: 32, 128>}, {pipeline_mode = #tpu.pipeline_mode<synchronous>, transform_indices = @transform_2, window_bounds = array<i64: 1, 32, 128>}, {pipeline_mode = #tpu.pipeline_mode<synchronous>, transform_indices = @transform_3, window_bounds = array<i64: 1, 32, 128>}, {pipeline_mode = #tpu.pipeline_mode<synchronous>, transform_indices = @transform_4, window_bounds = array<i64: 1, 1, 128>}, {pipeline_mode = #tpu.pipeline_mode<synchronous>, transform_indices = @transform_5, window_bounds = array<i64: 32, 8>}, {pipeline_mode = #tpu.pipeline_mode<synchronous>, transform_indices = @transform_6, window_bounds = array<i64: 1, 8>}, {transform_indices = @transform_7, window_bounds = array<i64: 2, 8>}]} {
    %c0_i32 = arith.constant 0 : i32
    %0 = arith.cmpi eq, %arg1, %c0_i32 : i32
    %1 = arith.extui %0 : i1 to i32
    %c0_i32_0 = arith.constant 0 : i32
    %2 = arith.cmpi ne, %1, %c0_i32_0 : i32
    scf.if %2 {
      %cst_370 = arith.constant 0.000000e+00 : f32
      %694 = vector.broadcast %cst_370 : f32 to vector<2x2x32xf32>
      %c0_371 = arith.constant 0 : index
      %c0_372 = arith.constant 0 : index
      %c0_373 = arith.constant 0 : index
      %695 = vector.load %arg10[%c0_371, %c0_372, %c0_373] : memref<2x2x32xf32, #tpu.memory_space<vmem>>, vector<2x2x32xf32>
      tpu.vector_store %arg10[%c0_371, %c0_372, %c0_373], %694 {strides = array<i32>} : memref<2x2x32xf32, #tpu.memory_space<vmem>>, vector<2x2x32xf32>,
      %cst_374 = arith.constant 0.000000e+00 : f32
      %696 = vector.broadcast %cst_374 : f32 to vector<2x2x32xf32>
      %c0_375 = arith.constant 0 : index
      %c0_376 = arith.constant 0 : index
      %c0_377 = arith.constant 0 : index
      %697 = vector.load %arg11[%c0_375, %c0_376, %c0_377] : memref<2x2x32xf32, #tpu.memory_space<vmem>>, vector<2x2x32xf32>
      tpu.vector_store %arg11[%c0_375, %c0_376, %c0_377], %696 {strides = array<i32>} : memref<2x2x32xf32, #tpu.memory_space<vmem>>, vector<2x2x32xf32>,
    } else {
    }
    %c0 = arith.constant 0 : index
    %c0_1 = arith.constant 0 : index
    %c0_2 = arith.constant 0 : index
    %3 = vector.load %arg10[%c0, %c0_1, %c0_2] : memref<2x2x32xf32, #tpu.memory_space<vmem>>, vector<1x2x32xf32>
    %4 = vector.shape_cast %3 : vector<1x2x32xf32> to vector<2x32xf32>
    %c0_3 = arith.constant 0 : index
    %c0_4 = arith.constant 0 : index
    %c0_5 = arith.constant 0 : index
    %5 = vector.load %arg2[%c0_3, %c0_4, %c0_5] : memref<8x2x128xf32, #tpu.memory_space<vmem>>, vector<1x2x128xf32>
    %6 = vector.shape_cast %5 : vector<1x2x128xf32> to vector<2x128xf32>
    %c0_6 = arith.constant 0 : index
    %c0_7 = arith.constant 0 : index
    %7 = vector.load %arg3[%c0_6, %c0_7] : memref<32x128xf32, #tpu.memory_space<vmem>>, vector<32x128xf32>
    %cst = arith.constant dense<0.000000e+00> : vector<2x128xf32>
    %8 = tpu.matmul %4, %7, %cst {dimension_numbers = #tpu.dot_dimension_numbers<[1], [0], [0], [1], [0, 0, 1, 1], [], []>} : vector<2x32xf32>, vector<32x128xf32>, vector<2x128xf32> -> vector<2x128xf32>
    %9 = arith.addf %6, %8 : vector<2x128xf32>
    %c0_8 = arith.constant 0 : index
    %c0_9 = arith.constant 0 : index
    %c0_10 = arith.constant 0 : index
    %10 = vector.load %arg11[%c0_8, %c0_9, %c0_10] : memref<2x2x32xf32, #tpu.memory_space<vmem>>, vector<1x2x32xf32>
    %11 = vector.shape_cast %10 : vector<1x2x32xf32> to vector<2x32xf32>
    %12 = vector.extract_strided_slice %9 {offsets = [0, 0], sizes = [2, 32], strides = [1, 1]} : vector<2x128xf32> to vector<2x32xf32>
    %13 = arith.negf %12 : vector<2x32xf32>
    %14 = math.exp %13 : vector<2x32xf32>
    %cst_11 = arith.constant 1.000000e+00 : f32
    %15 = vector.broadcast %cst_11 : f32 to vector<2x32xf32>
    %16 = arith.addf %15, %14 : vector<2x32xf32>
    %17 = arith.divf %15, %16 : vector<2x32xf32>
    %18 = vector.extract_strided_slice %9 {offsets = [0, 32], sizes = [2, 32], strides = [1, 1]} : vector<2x128xf32> to vector<2x32xf32>
    %19 = arith.negf %18 : vector<2x32xf32>
    %20 = math.exp %19 : vector<2x32xf32>
    %cst_12 = arith.constant 1.000000e+00 : f32
    %21 = vector.broadcast %cst_12 : f32 to vector<2x32xf32>
    %22 = arith.addf %21, %20 : vector<2x32xf32>
    %23 = arith.divf %21, %22 : vector<2x32xf32>
    %24 = vector.extract_strided_slice %9 {offsets = [0, 64], sizes = [2, 32], strides = [1, 1]} : vector<2x128xf32> to vector<2x32xf32>
    %25 = math.tanh %24 : vector<2x32xf32>
    %26 = vector.extract_strided_slice %9 {offsets = [0, 96], sizes = [2, 32], strides = [1, 1]} : vector<2x128xf32> to vector<2x32xf32>
    %27 = arith.negf %26 : vector<2x32xf32>
    %28 = math.exp %27 : vector<2x32xf32>
    %cst_13 = arith.constant 1.000000e+00 : f32
    %29 = vector.broadcast %cst_13 : f32 to vector<2x32xf32>
    %30 = arith.addf %29, %28 : vector<2x32xf32>
    %31 = arith.divf %29, %30 : vector<2x32xf32>
    %32 = arith.mulf %23, %11 : vector<2x32xf32>
    %33 = arith.mulf %17, %25 : vector<2x32xf32>
    %34 = arith.addf %32, %33 : vector<2x32xf32>
    %35 = math.tanh %34 : vector<2x32xf32>
    %36 = arith.mulf %31, %35 : vector<2x32xf32>
    %c0_14 = arith.constant 0 : index
    %c0_15 = arith.constant 0 : index
    %c0_16 = arith.constant 0 : index
    %37 = vector.load %arg10[%c0_14, %c0_15, %c0_16] : memref<2x2x32xf32, #tpu.memory_space<vmem>>, vector<1x2x32xf32>
    %38 = vector.shape_cast %37 : vector<1x2x32xf32> to vector<2x32xf32>
    %39 = vector.shape_cast %36 : vector<2x32xf32> to vector<1x2x32xf32>
    tpu.vector_store %arg10[%c0_14, %c0_15, %c0_16], %39 {strides = array<i32>} : memref<2x2x32xf32, #tpu.memory_space<vmem>>, vector<1x2x32xf32>,
    %c0_17 = arith.constant 0 : index
    %c0_18 = arith.constant 0 : index
    %c0_19 = arith.constant 0 : index
    %40 = vector.load %arg11[%c0_17, %c0_18, %c0_19] : memref<2x2x32xf32, #tpu.memory_space<vmem>>, vector<1x2x32xf32>
    %41 = vector.shape_cast %40 : vector<1x2x32xf32> to vector<2x32xf32>
    %42 = vector.shape_cast %34 : vector<2x32xf32> to vector<1x2x32xf32>
    tpu.vector_store %arg11[%c0_17, %c0_18, %c0_19], %42 {strides = array<i32>} : memref<2x2x32xf32, #tpu.memory_space<vmem>>, vector<1x2x32xf32>,
    %c1 = arith.constant 1 : index
    %c0_20 = arith.constant 0 : index
    %c0_21 = arith.constant 0 : index
    %43 = vector.load %arg10[%c1, %c0_20, %c0_21] : memref<2x2x32xf32, #tpu.memory_space<vmem>>, vector<1x2x32xf32>
    %44 = vector.shape_cast %43 : vector<1x2x32xf32> to vector<2x32xf32>
    %c0_22 = arith.constant 0 : index
    %c0_23 = arith.constant 0 : index
    %c0_24 = arith.constant 0 : index
    %45 = vector.load %arg4[%c0_22, %c0_23, %c0_24] : memref<1x32x128xf32, #tpu.memory_space<vmem>>, vector<1x32x128xf32>
    %46 = vector.shape_cast %45 : vector<1x32x128xf32> to vector<32x128xf32>
    %cst_25 = arith.constant dense<0.000000e+00> : vector<2x128xf32>
    %47 = tpu.matmul %36, %46, %cst_25 {dimension_numbers = #tpu.dot_dimension_numbers<[1], [0], [0], [1], [0, 0, 1, 1], [], []>} : vector<2x32xf32>, vector<32x128xf32>, vector<2x128xf32> -> vector<2x128xf32>
    %c0_26 = arith.constant 0 : index
    %c0_27 = arith.constant 0 : index
    %c0_28 = arith.constant 0 : index
    %48 = vector.load %arg5[%c0_26, %c0_27, %c0_28] : memref<1x32x128xf32, #tpu.memory_space<vmem>>, vector<1x32x128xf32>
    %49 = vector.shape_cast %48 : vector<1x32x128xf32> to vector<32x128xf32>
    %cst_29 = arith.constant dense<0.000000e+00> : vector<2x128xf32>
    %50 = tpu.matmul %44, %49, %cst_29 {dimension_numbers = #tpu.dot_dimension_numbers<[1], [0], [0], [1], [0, 0, 1, 1], [], []>} : vector<2x32xf32>, vector<32x128xf32>, vector<2x128xf32> -> vector<2x128xf32>
    %51 = arith.addf %47, %50 : vector<2x128xf32>
    %c0_30 = arith.constant 0 : index
    %c0_31 = arith.constant 0 : index
    %c0_32 = arith.constant 0 : index
    %52 = vector.load %arg6[%c0_30, %c0_31, %c0_32] : memref<1x1x128xf32, #tpu.memory_space<vmem>>, vector<1x1x128xf32>
    %53 = vector.shape_cast %52 : vector<1x1x128xf32> to vector<1x128xf32>
    %54 = vector.broadcast %53 : vector<1x128xf32> to vector<2x128xf32>
    %55 = arith.addf %51, %54 : vector<2x128xf32>
    %c1_33 = arith.constant 1 : index
    %c0_34 = arith.constant 0 : index
    %c0_35 = arith.constant 0 : index
    %56 = vector.load %arg11[%c1_33, %c0_34, %c0_35] : memref<2x2x32xf32, #tpu.memory_space<vmem>>, vector<1x2x32xf32>
    %57 = vector.shape_cast %56 : vector<1x2x32xf32> to vector<2x32xf32>
    %58 = vector.extract_strided_slice %55 {offsets = [0, 0], sizes = [2, 32], strides = [1, 1]} : vector<2x128xf32> to vector<2x32xf32>
    %59 = arith.negf %58 : vector<2x32xf32>
    %60 = math.exp %59 : vector<2x32xf32>
    %cst_36 = arith.constant 1.000000e+00 : f32
    %61 = vector.broadcast %cst_36 : f32 to vector<2x32xf32>
    %62 = arith.addf %61, %60 : vector<2x32xf32>
    %63 = arith.divf %61, %62 : vector<2x32xf32>
    %64 = vector.extract_strided_slice %55 {offsets = [0, 32], sizes = [2, 32], strides = [1, 1]} : vector<2x128xf32> to vector<2x32xf32>
    %65 = arith.negf %64 : vector<2x32xf32>
    %66 = math.exp %65 : vector<2x32xf32>
    %cst_37 = arith.constant 1.000000e+00 : f32
    %67 = vector.broadcast %cst_37 : f32 to vector<2x32xf32>
    %68 = arith.addf %67, %66 : vector<2x32xf32>
    %69 = arith.divf %67, %68 : vector<2x32xf32>
    %70 = vector.extract_strided_slice %55 {offsets = [0, 64], sizes = [2, 32], strides = [1, 1]} : vector<2x128xf32> to vector<2x32xf32>
    %71 = math.tanh %70 : vector<2x32xf32>
    %72 = vector.extract_strided_slice %55 {offsets = [0, 96], sizes = [2, 32], strides = [1, 1]} : vector<2x128xf32> to vector<2x32xf32>
    %73 = arith.negf %72 : vector<2x32xf32>
    %74 = math.exp %73 : vector<2x32xf32>
    %cst_38 = arith.constant 1.000000e+00 : f32
    %75 = vector.broadcast %cst_38 : f32 to vector<2x32xf32>
    %76 = arith.addf %75, %74 : vector<2x32xf32>
    %77 = arith.divf %75, %76 : vector<2x32xf32>
    %78 = arith.mulf %69, %57 : vector<2x32xf32>
    %79 = arith.mulf %63, %71 : vector<2x32xf32>
    %80 = arith.addf %78, %79 : vector<2x32xf32>
    %81 = math.tanh %80 : vector<2x32xf32>
    %82 = arith.mulf %77, %81 : vector<2x32xf32>
    %c1_39 = arith.constant 1 : index
    %c0_40 = arith.constant 0 : index
    %c0_41 = arith.constant 0 : index
    %83 = vector.load %arg10[%c1_39, %c0_40, %c0_41] : memref<2x2x32xf32, #tpu.memory_space<vmem>>, vector<1x2x32xf32>
    %84 = vector.shape_cast %83 : vector<1x2x32xf32> to vector<2x32xf32>
    %85 = vector.shape_cast %82 : vector<2x32xf32> to vector<1x2x32xf32>
    tpu.vector_store %arg10[%c1_39, %c0_40, %c0_41], %85 {strides = array<i32>} : memref<2x2x32xf32, #tpu.memory_space<vmem>>, vector<1x2x32xf32>,
    %c1_42 = arith.constant 1 : index
    %c0_43 = arith.constant 0 : index
    %c0_44 = arith.constant 0 : index
    %86 = vector.load %arg11[%c1_42, %c0_43, %c0_44] : memref<2x2x32xf32, #tpu.memory_space<vmem>>, vector<1x2x32xf32>
    %87 = vector.shape_cast %86 : vector<1x2x32xf32> to vector<2x32xf32>
    %88 = vector.shape_cast %80 : vector<2x32xf32> to vector<1x2x32xf32>
    tpu.vector_store %arg11[%c1_42, %c0_43, %c0_44], %88 {strides = array<i32>} : memref<2x2x32xf32, #tpu.memory_space<vmem>>, vector<1x2x32xf32>,
    %c0_45 = arith.constant 0 : index
    %c0_46 = arith.constant 0 : index
    %c0_47 = arith.constant 0 : index
    %89 = vector.load %arg10[%c0_45, %c0_46, %c0_47] : memref<2x2x32xf32, #tpu.memory_space<vmem>>, vector<1x2x32xf32>
    %90 = vector.shape_cast %89 : vector<1x2x32xf32> to vector<2x32xf32>
    %c1_48 = arith.constant 1 : index
    %c0_49 = arith.constant 0 : index
    %c0_50 = arith.constant 0 : index
    %91 = vector.load %arg2[%c1_48, %c0_49, %c0_50] : memref<8x2x128xf32, #tpu.memory_space<vmem>>, vector<1x2x128xf32>
    %92 = vector.shape_cast %91 : vector<1x2x128xf32> to vector<2x128xf32>
    %c0_51 = arith.constant 0 : index
    %c0_52 = arith.constant 0 : index
    %93 = vector.load %arg3[%c0_51, %c0_52] : memref<32x128xf32, #tpu.memory_space<vmem>>, vector<32x128xf32>
    %cst_53 = arith.constant dense<0.000000e+00> : vector<2x128xf32>
    %94 = tpu.matmul %90, %93, %cst_53 {dimension_numbers = #tpu.dot_dimension_numbers<[1], [0], [0], [1], [0, 0, 1, 1], [], []>} : vector<2x32xf32>, vector<32x128xf32>, vector<2x128xf32> -> vector<2x128xf32>
    %95 = arith.addf %92, %94 : vector<2x128xf32>
    %c0_54 = arith.constant 0 : index
    %c0_55 = arith.constant 0 : index
    %c0_56 = arith.constant 0 : index
    %96 = vector.load %arg11[%c0_54, %c0_55, %c0_56] : memref<2x2x32xf32, #tpu.memory_space<vmem>>, vector<1x2x32xf32>
    %97 = vector.shape_cast %96 : vector<1x2x32xf32> to vector<2x32xf32>
    %98 = vector.extract_strided_slice %95 {offsets = [0, 0], sizes = [2, 32], strides = [1, 1]} : vector<2x128xf32> to vector<2x32xf32>
    %99 = arith.negf %98 : vector<2x32xf32>
    %100 = math.exp %99 : vector<2x32xf32>
    %cst_57 = arith.constant 1.000000e+00 : f32
    %101 = vector.broadcast %cst_57 : f32 to vector<2x32xf32>
    %102 = arith.addf %101, %100 : vector<2x32xf32>
    %103 = arith.divf %101, %102 : vector<2x32xf32>
    %104 = vector.extract_strided_slice %95 {offsets = [0, 32], sizes = [2, 32], strides = [1, 1]} : vector<2x128xf32> to vector<2x32xf32>
    %105 = arith.negf %104 : vector<2x32xf32>
    %106 = math.exp %105 : vector<2x32xf32>
    %cst_58 = arith.constant 1.000000e+00 : f32
    %107 = vector.broadcast %cst_58 : f32 to vector<2x32xf32>
    %108 = arith.addf %107, %106 : vector<2x32xf32>
    %109 = arith.divf %107, %108 : vector<2x32xf32>
    %110 = vector.extract_strided_slice %95 {offsets = [0, 64], sizes = [2, 32], strides = [1, 1]} : vector<2x128xf32> to vector<2x32xf32>
    %111 = math.tanh %110 : vector<2x32xf32>
    %112 = vector.extract_strided_slice %95 {offsets = [0, 96], sizes = [2, 32], strides = [1, 1]} : vector<2x128xf32> to vector<2x32xf32>
    %113 = arith.negf %112 : vector<2x32xf32>
    %114 = math.exp %113 : vector<2x32xf32>
    %cst_59 = arith.constant 1.000000e+00 : f32
    %115 = vector.broadcast %cst_59 : f32 to vector<2x32xf32>
    %116 = arith.addf %115, %114 : vector<2x32xf32>
    %117 = arith.divf %115, %116 : vector<2x32xf32>
    %118 = arith.mulf %109, %97 : vector<2x32xf32>
    %119 = arith.mulf %103, %111 : vector<2x32xf32>
    %120 = arith.addf %118, %119 : vector<2x32xf32>
    %121 = math.tanh %120 : vector<2x32xf32>
    %122 = arith.mulf %117, %121 : vector<2x32xf32>
    %c0_60 = arith.constant 0 : index
    %c0_61 = arith.constant 0 : index
    %c0_62 = arith.constant 0 : index
    %123 = vector.load %arg10[%c0_60, %c0_61, %c0_62] : memref<2x2x32xf32, #tpu.memory_space<vmem>>, vector<1x2x32xf32>
    %124 = vector.shape_cast %123 : vector<1x2x32xf32> to vector<2x32xf32>
    %125 = vector.shape_cast %122 : vector<2x32xf32> to vector<1x2x32xf32>
    tpu.vector_store %arg10[%c0_60, %c0_61, %c0_62], %125 {strides = array<i32>} : memref<2x2x32xf32, #tpu.memory_space<vmem>>, vector<1x2x32xf32>,
    %c0_63 = arith.constant 0 : index
    %c0_64 = arith.constant 0 : index
    %c0_65 = arith.constant 0 : index
    %126 = vector.load %arg11[%c0_63, %c0_64, %c0_65] : memref<2x2x32xf32, #tpu.memory_space<vmem>>, vector<1x2x32xf32>
    %127 = vector.shape_cast %126 : vector<1x2x32xf32> to vector<2x32xf32>
    %128 = vector.shape_cast %120 : vector<2x32xf32> to vector<1x2x32xf32>
    tpu.vector_store %arg11[%c0_63, %c0_64, %c0_65], %128 {strides = array<i32>} : memref<2x2x32xf32, #tpu.memory_space<vmem>>, vector<1x2x32xf32>,
    %c1_66 = arith.constant 1 : index
    %c0_67 = arith.constant 0 : index
    %c0_68 = arith.constant 0 : index
    %129 = vector.load %arg10[%c1_66, %c0_67, %c0_68] : memref<2x2x32xf32, #tpu.memory_space<vmem>>, vector<1x2x32xf32>
    %130 = vector.shape_cast %129 : vector<1x2x32xf32> to vector<2x32xf32>
    %c0_69 = arith.constant 0 : index
    %c0_70 = arith.constant 0 : index
    %c0_71 = arith.constant 0 : index
    %131 = vector.load %arg4[%c0_69, %c0_70, %c0_71] : memref<1x32x128xf32, #tpu.memory_space<vmem>>, vector<1x32x128xf32>
    %132 = vector.shape_cast %131 : vector<1x32x128xf32> to vector<32x128xf32>
    %cst_72 = arith.constant dense<0.000000e+00> : vector<2x128xf32>
    %133 = tpu.matmul %122, %132, %cst_72 {dimension_numbers = #tpu.dot_dimension_numbers<[1], [0], [0], [1], [0, 0, 1, 1], [], []>} : vector<2x32xf32>, vector<32x128xf32>, vector<2x128xf32> -> vector<2x128xf32>
    %c0_73 = arith.constant 0 : index
    %c0_74 = arith.constant 0 : index
    %c0_75 = arith.constant 0 : index
    %134 = vector.load %arg5[%c0_73, %c0_74, %c0_75] : memref<1x32x128xf32, #tpu.memory_space<vmem>>, vector<1x32x128xf32>
    %135 = vector.shape_cast %134 : vector<1x32x128xf32> to vector<32x128xf32>
    %cst_76 = arith.constant dense<0.000000e+00> : vector<2x128xf32>
    %136 = tpu.matmul %130, %135, %cst_76 {dimension_numbers = #tpu.dot_dimension_numbers<[1], [0], [0], [1], [0, 0, 1, 1], [], []>} : vector<2x32xf32>, vector<32x128xf32>, vector<2x128xf32> -> vector<2x128xf32>
    %137 = arith.addf %133, %136 : vector<2x128xf32>
    %c0_77 = arith.constant 0 : index
    %c0_78 = arith.constant 0 : index
    %c0_79 = arith.constant 0 : index
    %138 = vector.load %arg6[%c0_77, %c0_78, %c0_79] : memref<1x1x128xf32, #tpu.memory_space<vmem>>, vector<1x1x128xf32>
    %139 = vector.shape_cast %138 : vector<1x1x128xf32> to vector<1x128xf32>
    %140 = vector.broadcast %139 : vector<1x128xf32> to vector<2x128xf32>
    %141 = arith.addf %137, %140 : vector<2x128xf32>
    %c1_80 = arith.constant 1 : index
    %c0_81 = arith.constant 0 : index
    %c0_82 = arith.constant 0 : index
    %142 = vector.load %arg11[%c1_80, %c0_81, %c0_82] : memref<2x2x32xf32, #tpu.memory_space<vmem>>, vector<1x2x32xf32>
    %143 = vector.shape_cast %142 : vector<1x2x32xf32> to vector<2x32xf32>
    %144 = vector.extract_strided_slice %141 {offsets = [0, 0], sizes = [2, 32], strides = [1, 1]} : vector<2x128xf32> to vector<2x32xf32>
    %145 = arith.negf %144 : vector<2x32xf32>
    %146 = math.exp %145 : vector<2x32xf32>
    %cst_83 = arith.constant 1.000000e+00 : f32
    %147 = vector.broadcast %cst_83 : f32 to vector<2x32xf32>
    %148 = arith.addf %147, %146 : vector<2x32xf32>
    %149 = arith.divf %147, %148 : vector<2x32xf32>
    %150 = vector.extract_strided_slice %141 {offsets = [0, 32], sizes = [2, 32], strides = [1, 1]} : vector<2x128xf32> to vector<2x32xf32>
    %151 = arith.negf %150 : vector<2x32xf32>
    %152 = math.exp %151 : vector<2x32xf32>
    %cst_84 = arith.constant 1.000000e+00 : f32
    %153 = vector.broadcast %cst_84 : f32 to vector<2x32xf32>
    %154 = arith.addf %153, %152 : vector<2x32xf32>
    %155 = arith.divf %153, %154 : vector<2x32xf32>
    %156 = vector.extract_strided_slice %141 {offsets = [0, 64], sizes = [2, 32], strides = [1, 1]} : vector<2x128xf32> to vector<2x32xf32>
    %157 = math.tanh %156 : vector<2x32xf32>
    %158 = vector.extract_strided_slice %141 {offsets = [0, 96], sizes = [2, 32], strides = [1, 1]} : vector<2x128xf32> to vector<2x32xf32>
    %159 = arith.negf %158 : vector<2x32xf32>
    %160 = math.exp %159 : vector<2x32xf32>
    %cst_85 = arith.constant 1.000000e+00 : f32
    %161 = vector.broadcast %cst_85 : f32 to vector<2x32xf32>
    %162 = arith.addf %161, %160 : vector<2x32xf32>
    %163 = arith.divf %161, %162 : vector<2x32xf32>
    %164 = arith.mulf %155, %143 : vector<2x32xf32>
    %165 = arith.mulf %149, %157 : vector<2x32xf32>
    %166 = arith.addf %164, %165 : vector<2x32xf32>
    %167 = math.tanh %166 : vector<2x32xf32>
    %168 = arith.mulf %163, %167 : vector<2x32xf32>
    %c1_86 = arith.constant 1 : index
    %c0_87 = arith.constant 0 : index
    %c0_88 = arith.constant 0 : index
    %169 = vector.load %arg10[%c1_86, %c0_87, %c0_88] : memref<2x2x32xf32, #tpu.memory_space<vmem>>, vector<1x2x32xf32>
    %170 = vector.shape_cast %169 : vector<1x2x32xf32> to vector<2x32xf32>
    %171 = vector.shape_cast %168 : vector<2x32xf32> to vector<1x2x32xf32>
    tpu.vector_store %arg10[%c1_86, %c0_87, %c0_88], %171 {strides = array<i32>} : memref<2x2x32xf32, #tpu.memory_space<vmem>>, vector<1x2x32xf32>,
    %c1_89 = arith.constant 1 : index
    %c0_90 = arith.constant 0 : index
    %c0_91 = arith.constant 0 : index
    %172 = vector.load %arg11[%c1_89, %c0_90, %c0_91] : memref<2x2x32xf32, #tpu.memory_space<vmem>>, vector<1x2x32xf32>
    %173 = vector.shape_cast %172 : vector<1x2x32xf32> to vector<2x32xf32>
    %174 = vector.shape_cast %166 : vector<2x32xf32> to vector<1x2x32xf32>
    tpu.vector_store %arg11[%c1_89, %c0_90, %c0_91], %174 {strides = array<i32>} : memref<2x2x32xf32, #tpu.memory_space<vmem>>, vector<1x2x32xf32>,
    %c0_92 = arith.constant 0 : index
    %c0_93 = arith.constant 0 : index
    %c0_94 = arith.constant 0 : index
    %175 = vector.load %arg10[%c0_92, %c0_93, %c0_94] : memref<2x2x32xf32, #tpu.memory_space<vmem>>, vector<1x2x32xf32>
    %176 = vector.shape_cast %175 : vector<1x2x32xf32> to vector<2x32xf32>
    %c2 = arith.constant 2 : index
    %c0_95 = arith.constant 0 : index
    %c0_96 = arith.constant 0 : index
    %177 = vector.load %arg2[%c2, %c0_95, %c0_96] : memref<8x2x128xf32, #tpu.memory_space<vmem>>, vector<1x2x128xf32>
    %178 = vector.shape_cast %177 : vector<1x2x128xf32> to vector<2x128xf32>
    %c0_97 = arith.constant 0 : index
    %c0_98 = arith.constant 0 : index
    %179 = vector.load %arg3[%c0_97, %c0_98] : memref<32x128xf32, #tpu.memory_space<vmem>>, vector<32x128xf32>
    %cst_99 = arith.constant dense<0.000000e+00> : vector<2x128xf32>
    %180 = tpu.matmul %176, %179, %cst_99 {dimension_numbers = #tpu.dot_dimension_numbers<[1], [0], [0], [1], [0, 0, 1, 1], [], []>} : vector<2x32xf32>, vector<32x128xf32>, vector<2x128xf32> -> vector<2x128xf32>
    %181 = arith.addf %178, %180 : vector<2x128xf32>
    %c0_100 = arith.constant 0 : index
    %c0_101 = arith.constant 0 : index
    %c0_102 = arith.constant 0 : index
    %182 = vector.load %arg11[%c0_100, %c0_101, %c0_102] : memref<2x2x32xf32, #tpu.memory_space<vmem>>, vector<1x2x32xf32>
    %183 = vector.shape_cast %182 : vector<1x2x32xf32> to vector<2x32xf32>
    %184 = vector.extract_strided_slice %181 {offsets = [0, 0], sizes = [2, 32], strides = [1, 1]} : vector<2x128xf32> to vector<2x32xf32>
    %185 = arith.negf %184 : vector<2x32xf32>
    %186 = math.exp %185 : vector<2x32xf32>
    %cst_103 = arith.constant 1.000000e+00 : f32
    %187 = vector.broadcast %cst_103 : f32 to vector<2x32xf32>
    %188 = arith.addf %187, %186 : vector<2x32xf32>
    %189 = arith.divf %187, %188 : vector<2x32xf32>
    %190 = vector.extract_strided_slice %181 {offsets = [0, 32], sizes = [2, 32], strides = [1, 1]} : vector<2x128xf32> to vector<2x32xf32>
    %191 = arith.negf %190 : vector<2x32xf32>
    %192 = math.exp %191 : vector<2x32xf32>
    %cst_104 = arith.constant 1.000000e+00 : f32
    %193 = vector.broadcast %cst_104 : f32 to vector<2x32xf32>
    %194 = arith.addf %193, %192 : vector<2x32xf32>
    %195 = arith.divf %193, %194 : vector<2x32xf32>
    %196 = vector.extract_strided_slice %181 {offsets = [0, 64], sizes = [2, 32], strides = [1, 1]} : vector<2x128xf32> to vector<2x32xf32>
    %197 = math.tanh %196 : vector<2x32xf32>
    %198 = vector.extract_strided_slice %181 {offsets = [0, 96], sizes = [2, 32], strides = [1, 1]} : vector<2x128xf32> to vector<2x32xf32>
    %199 = arith.negf %198 : vector<2x32xf32>
    %200 = math.exp %199 : vector<2x32xf32>
    %cst_105 = arith.constant 1.000000e+00 : f32
    %201 = vector.broadcast %cst_105 : f32 to vector<2x32xf32>
    %202 = arith.addf %201, %200 : vector<2x32xf32>
    %203 = arith.divf %201, %202 : vector<2x32xf32>
    %204 = arith.mulf %195, %183 : vector<2x32xf32>
    %205 = arith.mulf %189, %197 : vector<2x32xf32>
    %206 = arith.addf %204, %205 : vector<2x32xf32>
    %207 = math.tanh %206 : vector<2x32xf32>
    %208 = arith.mulf %203, %207 : vector<2x32xf32>
    %c0_106 = arith.constant 0 : index
    %c0_107 = arith.constant 0 : index
    %c0_108 = arith.constant 0 : index
    %209 = vector.load %arg10[%c0_106, %c0_107, %c0_108] : memref<2x2x32xf32, #tpu.memory_space<vmem>>, vector<1x2x32xf32>
    %210 = vector.shape_cast %209 : vector<1x2x32xf32> to vector<2x32xf32>
    %211 = vector.shape_cast %208 : vector<2x32xf32> to vector<1x2x32xf32>
    tpu.vector_store %arg10[%c0_106, %c0_107, %c0_108], %211 {strides = array<i32>} : memref<2x2x32xf32, #tpu.memory_space<vmem>>, vector<1x2x32xf32>,
    %c0_109 = arith.constant 0 : index
    %c0_110 = arith.constant 0 : index
    %c0_111 = arith.constant 0 : index
    %212 = vector.load %arg11[%c0_109, %c0_110, %c0_111] : memref<2x2x32xf32, #tpu.memory_space<vmem>>, vector<1x2x32xf32>
    %213 = vector.shape_cast %212 : vector<1x2x32xf32> to vector<2x32xf32>
    %214 = vector.shape_cast %206 : vector<2x32xf32> to vector<1x2x32xf32>
    tpu.vector_store %arg11[%c0_109, %c0_110, %c0_111], %214 {strides = array<i32>} : memref<2x2x32xf32, #tpu.memory_space<vmem>>, vector<1x2x32xf32>,
    %c1_112 = arith.constant 1 : index
    %c0_113 = arith.constant 0 : index
    %c0_114 = arith.constant 0 : index
    %215 = vector.load %arg10[%c1_112, %c0_113, %c0_114] : memref<2x2x32xf32, #tpu.memory_space<vmem>>, vector<1x2x32xf32>
    %216 = vector.shape_cast %215 : vector<1x2x32xf32> to vector<2x32xf32>
    %c0_115 = arith.constant 0 : index
    %c0_116 = arith.constant 0 : index
    %c0_117 = arith.constant 0 : index
    %217 = vector.load %arg4[%c0_115, %c0_116, %c0_117] : memref<1x32x128xf32, #tpu.memory_space<vmem>>, vector<1x32x128xf32>
    %218 = vector.shape_cast %217 : vector<1x32x128xf32> to vector<32x128xf32>
    %cst_118 = arith.constant dense<0.000000e+00> : vector<2x128xf32>
    %219 = tpu.matmul %208, %218, %cst_118 {dimension_numbers = #tpu.dot_dimension_numbers<[1], [0], [0], [1], [0, 0, 1, 1], [], []>} : vector<2x32xf32>, vector<32x128xf32>, vector<2x128xf32> -> vector<2x128xf32>
    %c0_119 = arith.constant 0 : index
    %c0_120 = arith.constant 0 : index
    %c0_121 = arith.constant 0 : index
    %220 = vector.load %arg5[%c0_119, %c0_120, %c0_121] : memref<1x32x128xf32, #tpu.memory_space<vmem>>, vector<1x32x128xf32>
    %221 = vector.shape_cast %220 : vector<1x32x128xf32> to vector<32x128xf32>
    %cst_122 = arith.constant dense<0.000000e+00> : vector<2x128xf32>
    %222 = tpu.matmul %216, %221, %cst_122 {dimension_numbers = #tpu.dot_dimension_numbers<[1], [0], [0], [1], [0, 0, 1, 1], [], []>} : vector<2x32xf32>, vector<32x128xf32>, vector<2x128xf32> -> vector<2x128xf32>
    %223 = arith.addf %219, %222 : vector<2x128xf32>
    %c0_123 = arith.constant 0 : index
    %c0_124 = arith.constant 0 : index
    %c0_125 = arith.constant 0 : index
    %224 = vector.load %arg6[%c0_123, %c0_124, %c0_125] : memref<1x1x128xf32, #tpu.memory_space<vmem>>, vector<1x1x128xf32>
    %225 = vector.shape_cast %224 : vector<1x1x128xf32> to vector<1x128xf32>
    %226 = vector.broadcast %225 : vector<1x128xf32> to vector<2x128xf32>
    %227 = arith.addf %223, %226 : vector<2x128xf32>
    %c1_126 = arith.constant 1 : index
    %c0_127 = arith.constant 0 : index
    %c0_128 = arith.constant 0 : index
    %228 = vector.load %arg11[%c1_126, %c0_127, %c0_128] : memref<2x2x32xf32, #tpu.memory_space<vmem>>, vector<1x2x32xf32>
    %229 = vector.shape_cast %228 : vector<1x2x32xf32> to vector<2x32xf32>
    %230 = vector.extract_strided_slice %227 {offsets = [0, 0], sizes = [2, 32], strides = [1, 1]} : vector<2x128xf32> to vector<2x32xf32>
    %231 = arith.negf %230 : vector<2x32xf32>
    %232 = math.exp %231 : vector<2x32xf32>
    %cst_129 = arith.constant 1.000000e+00 : f32
    %233 = vector.broadcast %cst_129 : f32 to vector<2x32xf32>
    %234 = arith.addf %233, %232 : vector<2x32xf32>
    %235 = arith.divf %233, %234 : vector<2x32xf32>
    %236 = vector.extract_strided_slice %227 {offsets = [0, 32], sizes = [2, 32], strides = [1, 1]} : vector<2x128xf32> to vector<2x32xf32>
    %237 = arith.negf %236 : vector<2x32xf32>
    %238 = math.exp %237 : vector<2x32xf32>
    %cst_130 = arith.constant 1.000000e+00 : f32
    %239 = vector.broadcast %cst_130 : f32 to vector<2x32xf32>
    %240 = arith.addf %239, %238 : vector<2x32xf32>
    %241 = arith.divf %239, %240 : vector<2x32xf32>
    %242 = vector.extract_strided_slice %227 {offsets = [0, 64], sizes = [2, 32], strides = [1, 1]} : vector<2x128xf32> to vector<2x32xf32>
    %243 = math.tanh %242 : vector<2x32xf32>
    %244 = vector.extract_strided_slice %227 {offsets = [0, 96], sizes = [2, 32], strides = [1, 1]} : vector<2x128xf32> to vector<2x32xf32>
    %245 = arith.negf %244 : vector<2x32xf32>
    %246 = math.exp %245 : vector<2x32xf32>
    %cst_131 = arith.constant 1.000000e+00 : f32
    %247 = vector.broadcast %cst_131 : f32 to vector<2x32xf32>
    %248 = arith.addf %247, %246 : vector<2x32xf32>
    %249 = arith.divf %247, %248 : vector<2x32xf32>
    %250 = arith.mulf %241, %229 : vector<2x32xf32>
    %251 = arith.mulf %235, %243 : vector<2x32xf32>
    %252 = arith.addf %250, %251 : vector<2x32xf32>
    %253 = math.tanh %252 : vector<2x32xf32>
    %254 = arith.mulf %249, %253 : vector<2x32xf32>
    %c1_132 = arith.constant 1 : index
    %c0_133 = arith.constant 0 : index
    %c0_134 = arith.constant 0 : index
    %255 = vector.load %arg10[%c1_132, %c0_133, %c0_134] : memref<2x2x32xf32, #tpu.memory_space<vmem>>, vector<1x2x32xf32>
    %256 = vector.shape_cast %255 : vector<1x2x32xf32> to vector<2x32xf32>
    %257 = vector.shape_cast %254 : vector<2x32xf32> to vector<1x2x32xf32>
    tpu.vector_store %arg10[%c1_132, %c0_133, %c0_134], %257 {strides = array<i32>} : memref<2x2x32xf32, #tpu.memory_space<vmem>>, vector<1x2x32xf32>,
    %c1_135 = arith.constant 1 : index
    %c0_136 = arith.constant 0 : index
    %c0_137 = arith.constant 0 : index
    %258 = vector.load %arg11[%c1_135, %c0_136, %c0_137] : memref<2x2x32xf32, #tpu.memory_space<vmem>>, vector<1x2x32xf32>
    %259 = vector.shape_cast %258 : vector<1x2x32xf32> to vector<2x32xf32>
    %260 = vector.shape_cast %252 : vector<2x32xf32> to vector<1x2x32xf32>
    tpu.vector_store %arg11[%c1_135, %c0_136, %c0_137], %260 {strides = array<i32>} : memref<2x2x32xf32, #tpu.memory_space<vmem>>, vector<1x2x32xf32>,
    %c0_138 = arith.constant 0 : index
    %c0_139 = arith.constant 0 : index
    %c0_140 = arith.constant 0 : index
    %261 = vector.load %arg10[%c0_138, %c0_139, %c0_140] : memref<2x2x32xf32, #tpu.memory_space<vmem>>, vector<1x2x32xf32>
    %262 = vector.shape_cast %261 : vector<1x2x32xf32> to vector<2x32xf32>
    %c3 = arith.constant 3 : index
    %c0_141 = arith.constant 0 : index
    %c0_142 = arith.constant 0 : index
    %263 = vector.load %arg2[%c3, %c0_141, %c0_142] : memref<8x2x128xf32, #tpu.memory_space<vmem>>, vector<1x2x128xf32>
    %264 = vector.shape_cast %263 : vector<1x2x128xf32> to vector<2x128xf32>
    %c0_143 = arith.constant 0 : index
    %c0_144 = arith.constant 0 : index
    %265 = vector.load %arg3[%c0_143, %c0_144] : memref<32x128xf32, #tpu.memory_space<vmem>>, vector<32x128xf32>
    %cst_145 = arith.constant dense<0.000000e+00> : vector<2x128xf32>
    %266 = tpu.matmul %262, %265, %cst_145 {dimension_numbers = #tpu.dot_dimension_numbers<[1], [0], [0], [1], [0, 0, 1, 1], [], []>} : vector<2x32xf32>, vector<32x128xf32>, vector<2x128xf32> -> vector<2x128xf32>
    %267 = arith.addf %264, %266 : vector<2x128xf32>
    %c0_146 = arith.constant 0 : index
    %c0_147 = arith.constant 0 : index
    %c0_148 = arith.constant 0 : index
    %268 = vector.load %arg11[%c0_146, %c0_147, %c0_148] : memref<2x2x32xf32, #tpu.memory_space<vmem>>, vector<1x2x32xf32>
    %269 = vector.shape_cast %268 : vector<1x2x32xf32> to vector<2x32xf32>
    %270 = vector.extract_strided_slice %267 {offsets = [0, 0], sizes = [2, 32], strides = [1, 1]} : vector<2x128xf32> to vector<2x32xf32>
    %271 = arith.negf %270 : vector<2x32xf32>
    %272 = math.exp %271 : vector<2x32xf32>
    %cst_149 = arith.constant 1.000000e+00 : f32
    %273 = vector.broadcast %cst_149 : f32 to vector<2x32xf32>
    %274 = arith.addf %273, %272 : vector<2x32xf32>
    %275 = arith.divf %273, %274 : vector<2x32xf32>
    %276 = vector.extract_strided_slice %267 {offsets = [0, 32], sizes = [2, 32], strides = [1, 1]} : vector<2x128xf32> to vector<2x32xf32>
    %277 = arith.negf %276 : vector<2x32xf32>
    %278 = math.exp %277 : vector<2x32xf32>
    %cst_150 = arith.constant 1.000000e+00 : f32
    %279 = vector.broadcast %cst_150 : f32 to vector<2x32xf32>
    %280 = arith.addf %279, %278 : vector<2x32xf32>
    %281 = arith.divf %279, %280 : vector<2x32xf32>
    %282 = vector.extract_strided_slice %267 {offsets = [0, 64], sizes = [2, 32], strides = [1, 1]} : vector<2x128xf32> to vector<2x32xf32>
    %283 = math.tanh %282 : vector<2x32xf32>
    %284 = vector.extract_strided_slice %267 {offsets = [0, 96], sizes = [2, 32], strides = [1, 1]} : vector<2x128xf32> to vector<2x32xf32>
    %285 = arith.negf %284 : vector<2x32xf32>
    %286 = math.exp %285 : vector<2x32xf32>
    %cst_151 = arith.constant 1.000000e+00 : f32
    %287 = vector.broadcast %cst_151 : f32 to vector<2x32xf32>
    %288 = arith.addf %287, %286 : vector<2x32xf32>
    %289 = arith.divf %287, %288 : vector<2x32xf32>
    %290 = arith.mulf %281, %269 : vector<2x32xf32>
    %291 = arith.mulf %275, %283 : vector<2x32xf32>
    %292 = arith.addf %290, %291 : vector<2x32xf32>
    %293 = math.tanh %292 : vector<2x32xf32>
    %294 = arith.mulf %289, %293 : vector<2x32xf32>
    %c0_152 = arith.constant 0 : index
    %c0_153 = arith.constant 0 : index
    %c0_154 = arith.constant 0 : index
    %295 = vector.load %arg10[%c0_152, %c0_153, %c0_154] : memref<2x2x32xf32, #tpu.memory_space<vmem>>, vector<1x2x32xf32>
    %296 = vector.shape_cast %295 : vector<1x2x32xf32> to vector<2x32xf32>
    %297 = vector.shape_cast %294 : vector<2x32xf32> to vector<1x2x32xf32>
    tpu.vector_store %arg10[%c0_152, %c0_153, %c0_154], %297 {strides = array<i32>} : memref<2x2x32xf32, #tpu.memory_space<vmem>>, vector<1x2x32xf32>,
    %c0_155 = arith.constant 0 : index
    %c0_156 = arith.constant 0 : index
    %c0_157 = arith.constant 0 : index
    %298 = vector.load %arg11[%c0_155, %c0_156, %c0_157] : memref<2x2x32xf32, #tpu.memory_space<vmem>>, vector<1x2x32xf32>
    %299 = vector.shape_cast %298 : vector<1x2x32xf32> to vector<2x32xf32>
    %300 = vector.shape_cast %292 : vector<2x32xf32> to vector<1x2x32xf32>
    tpu.vector_store %arg11[%c0_155, %c0_156, %c0_157], %300 {strides = array<i32>} : memref<2x2x32xf32, #tpu.memory_space<vmem>>, vector<1x2x32xf32>,
    %c1_158 = arith.constant 1 : index
    %c0_159 = arith.constant 0 : index
    %c0_160 = arith.constant 0 : index
    %301 = vector.load %arg10[%c1_158, %c0_159, %c0_160] : memref<2x2x32xf32, #tpu.memory_space<vmem>>, vector<1x2x32xf32>
    %302 = vector.shape_cast %301 : vector<1x2x32xf32> to vector<2x32xf32>
    %c0_161 = arith.constant 0 : index
    %c0_162 = arith.constant 0 : index
    %c0_163 = arith.constant 0 : index
    %303 = vector.load %arg4[%c0_161, %c0_162, %c0_163] : memref<1x32x128xf32, #tpu.memory_space<vmem>>, vector<1x32x128xf32>
    %304 = vector.shape_cast %303 : vector<1x32x128xf32> to vector<32x128xf32>
    %cst_164 = arith.constant dense<0.000000e+00> : vector<2x128xf32>
    %305 = tpu.matmul %294, %304, %cst_164 {dimension_numbers = #tpu.dot_dimension_numbers<[1], [0], [0], [1], [0, 0, 1, 1], [], []>} : vector<2x32xf32>, vector<32x128xf32>, vector<2x128xf32> -> vector<2x128xf32>
    %c0_165 = arith.constant 0 : index
    %c0_166 = arith.constant 0 : index
    %c0_167 = arith.constant 0 : index
    %306 = vector.load %arg5[%c0_165, %c0_166, %c0_167] : memref<1x32x128xf32, #tpu.memory_space<vmem>>, vector<1x32x128xf32>
    %307 = vector.shape_cast %306 : vector<1x32x128xf32> to vector<32x128xf32>
    %cst_168 = arith.constant dense<0.000000e+00> : vector<2x128xf32>
    %308 = tpu.matmul %302, %307, %cst_168 {dimension_numbers = #tpu.dot_dimension_numbers<[1], [0], [0], [1], [0, 0, 1, 1], [], []>} : vector<2x32xf32>, vector<32x128xf32>, vector<2x128xf32> -> vector<2x128xf32>
    %309 = arith.addf %305, %308 : vector<2x128xf32>
    %c0_169 = arith.constant 0 : index
    %c0_170 = arith.constant 0 : index
    %c0_171 = arith.constant 0 : index
    %310 = vector.load %arg6[%c0_169, %c0_170, %c0_171] : memref<1x1x128xf32, #tpu.memory_space<vmem>>, vector<1x1x128xf32>
    %311 = vector.shape_cast %310 : vector<1x1x128xf32> to vector<1x128xf32>
    %312 = vector.broadcast %311 : vector<1x128xf32> to vector<2x128xf32>
    %313 = arith.addf %309, %312 : vector<2x128xf32>
    %c1_172 = arith.constant 1 : index
    %c0_173 = arith.constant 0 : index
    %c0_174 = arith.constant 0 : index
    %314 = vector.load %arg11[%c1_172, %c0_173, %c0_174] : memref<2x2x32xf32, #tpu.memory_space<vmem>>, vector<1x2x32xf32>
    %315 = vector.shape_cast %314 : vector<1x2x32xf32> to vector<2x32xf32>
    %316 = vector.extract_strided_slice %313 {offsets = [0, 0], sizes = [2, 32], strides = [1, 1]} : vector<2x128xf32> to vector<2x32xf32>
    %317 = arith.negf %316 : vector<2x32xf32>
    %318 = math.exp %317 : vector<2x32xf32>
    %cst_175 = arith.constant 1.000000e+00 : f32
    %319 = vector.broadcast %cst_175 : f32 to vector<2x32xf32>
    %320 = arith.addf %319, %318 : vector<2x32xf32>
    %321 = arith.divf %319, %320 : vector<2x32xf32>
    %322 = vector.extract_strided_slice %313 {offsets = [0, 32], sizes = [2, 32], strides = [1, 1]} : vector<2x128xf32> to vector<2x32xf32>
    %323 = arith.negf %322 : vector<2x32xf32>
    %324 = math.exp %323 : vector<2x32xf32>
    %cst_176 = arith.constant 1.000000e+00 : f32
    %325 = vector.broadcast %cst_176 : f32 to vector<2x32xf32>
    %326 = arith.addf %325, %324 : vector<2x32xf32>
    %327 = arith.divf %325, %326 : vector<2x32xf32>
    %328 = vector.extract_strided_slice %313 {offsets = [0, 64], sizes = [2, 32], strides = [1, 1]} : vector<2x128xf32> to vector<2x32xf32>
    %329 = math.tanh %328 : vector<2x32xf32>
    %330 = vector.extract_strided_slice %313 {offsets = [0, 96], sizes = [2, 32], strides = [1, 1]} : vector<2x128xf32> to vector<2x32xf32>
    %331 = arith.negf %330 : vector<2x32xf32>
    %332 = math.exp %331 : vector<2x32xf32>
    %cst_177 = arith.constant 1.000000e+00 : f32
    %333 = vector.broadcast %cst_177 : f32 to vector<2x32xf32>
    %334 = arith.addf %333, %332 : vector<2x32xf32>
    %335 = arith.divf %333, %334 : vector<2x32xf32>
    %336 = arith.mulf %327, %315 : vector<2x32xf32>
    %337 = arith.mulf %321, %329 : vector<2x32xf32>
    %338 = arith.addf %336, %337 : vector<2x32xf32>
    %339 = math.tanh %338 : vector<2x32xf32>
    %340 = arith.mulf %335, %339 : vector<2x32xf32>
    %c1_178 = arith.constant 1 : index
    %c0_179 = arith.constant 0 : index
    %c0_180 = arith.constant 0 : index
    %341 = vector.load %arg10[%c1_178, %c0_179, %c0_180] : memref<2x2x32xf32, #tpu.memory_space<vmem>>, vector<1x2x32xf32>
    %342 = vector.shape_cast %341 : vector<1x2x32xf32> to vector<2x32xf32>
    %343 = vector.shape_cast %340 : vector<2x32xf32> to vector<1x2x32xf32>
    tpu.vector_store %arg10[%c1_178, %c0_179, %c0_180], %343 {strides = array<i32>} : memref<2x2x32xf32, #tpu.memory_space<vmem>>, vector<1x2x32xf32>,
    %c1_181 = arith.constant 1 : index
    %c0_182 = arith.constant 0 : index
    %c0_183 = arith.constant 0 : index
    %344 = vector.load %arg11[%c1_181, %c0_182, %c0_183] : memref<2x2x32xf32, #tpu.memory_space<vmem>>, vector<1x2x32xf32>
    %345 = vector.shape_cast %344 : vector<1x2x32xf32> to vector<2x32xf32>
    %346 = vector.shape_cast %338 : vector<2x32xf32> to vector<1x2x32xf32>
    tpu.vector_store %arg11[%c1_181, %c0_182, %c0_183], %346 {strides = array<i32>} : memref<2x2x32xf32, #tpu.memory_space<vmem>>, vector<1x2x32xf32>,
    %c0_184 = arith.constant 0 : index
    %c0_185 = arith.constant 0 : index
    %c0_186 = arith.constant 0 : index
    %347 = vector.load %arg10[%c0_184, %c0_185, %c0_186] : memref<2x2x32xf32, #tpu.memory_space<vmem>>, vector<1x2x32xf32>
    %348 = vector.shape_cast %347 : vector<1x2x32xf32> to vector<2x32xf32>
    %c4 = arith.constant 4 : index
    %c0_187 = arith.constant 0 : index
    %c0_188 = arith.constant 0 : index
    %349 = vector.load %arg2[%c4, %c0_187, %c0_188] : memref<8x2x128xf32, #tpu.memory_space<vmem>>, vector<1x2x128xf32>
    %350 = vector.shape_cast %349 : vector<1x2x128xf32> to vector<2x128xf32>
    %c0_189 = arith.constant 0 : index
    %c0_190 = arith.constant 0 : index
    %351 = vector.load %arg3[%c0_189, %c0_190] : memref<32x128xf32, #tpu.memory_space<vmem>>, vector<32x128xf32>
    %cst_191 = arith.constant dense<0.000000e+00> : vector<2x128xf32>
    %352 = tpu.matmul %348, %351, %cst_191 {dimension_numbers = #tpu.dot_dimension_numbers<[1], [0], [0], [1], [0, 0, 1, 1], [], []>} : vector<2x32xf32>, vector<32x128xf32>, vector<2x128xf32> -> vector<2x128xf32>
    %353 = arith.addf %350, %352 : vector<2x128xf32>
    %c0_192 = arith.constant 0 : index
    %c0_193 = arith.constant 0 : index
    %c0_194 = arith.constant 0 : index
    %354 = vector.load %arg11[%c0_192, %c0_193, %c0_194] : memref<2x2x32xf32, #tpu.memory_space<vmem>>, vector<1x2x32xf32>
    %355 = vector.shape_cast %354 : vector<1x2x32xf32> to vector<2x32xf32>
    %356 = vector.extract_strided_slice %353 {offsets = [0, 0], sizes = [2, 32], strides = [1, 1]} : vector<2x128xf32> to vector<2x32xf32>
    %357 = arith.negf %356 : vector<2x32xf32>
    %358 = math.exp %357 : vector<2x32xf32>
    %cst_195 = arith.constant 1.000000e+00 : f32
    %359 = vector.broadcast %cst_195 : f32 to vector<2x32xf32>
    %360 = arith.addf %359, %358 : vector<2x32xf32>
    %361 = arith.divf %359, %360 : vector<2x32xf32>
    %362 = vector.extract_strided_slice %353 {offsets = [0, 32], sizes = [2, 32], strides = [1, 1]} : vector<2x128xf32> to vector<2x32xf32>
    %363 = arith.negf %362 : vector<2x32xf32>
    %364 = math.exp %363 : vector<2x32xf32>
    %cst_196 = arith.constant 1.000000e+00 : f32
    %365 = vector.broadcast %cst_196 : f32 to vector<2x32xf32>
    %366 = arith.addf %365, %364 : vector<2x32xf32>
    %367 = arith.divf %365, %366 : vector<2x32xf32>
    %368 = vector.extract_strided_slice %353 {offsets = [0, 64], sizes = [2, 32], strides = [1, 1]} : vector<2x128xf32> to vector<2x32xf32>
    %369 = math.tanh %368 : vector<2x32xf32>
    %370 = vector.extract_strided_slice %353 {offsets = [0, 96], sizes = [2, 32], strides = [1, 1]} : vector<2x128xf32> to vector<2x32xf32>
    %371 = arith.negf %370 : vector<2x32xf32>
    %372 = math.exp %371 : vector<2x32xf32>
    %cst_197 = arith.constant 1.000000e+00 : f32
    %373 = vector.broadcast %cst_197 : f32 to vector<2x32xf32>
    %374 = arith.addf %373, %372 : vector<2x32xf32>
    %375 = arith.divf %373, %374 : vector<2x32xf32>
    %376 = arith.mulf %367, %355 : vector<2x32xf32>
    %377 = arith.mulf %361, %369 : vector<2x32xf32>
    %378 = arith.addf %376, %377 : vector<2x32xf32>
    %379 = math.tanh %378 : vector<2x32xf32>
    %380 = arith.mulf %375, %379 : vector<2x32xf32>
    %c0_198 = arith.constant 0 : index
    %c0_199 = arith.constant 0 : index
    %c0_200 = arith.constant 0 : index
    %381 = vector.load %arg10[%c0_198, %c0_199, %c0_200] : memref<2x2x32xf32, #tpu.memory_space<vmem>>, vector<1x2x32xf32>
    %382 = vector.shape_cast %381 : vector<1x2x32xf32> to vector<2x32xf32>
    %383 = vector.shape_cast %380 : vector<2x32xf32> to vector<1x2x32xf32>
    tpu.vector_store %arg10[%c0_198, %c0_199, %c0_200], %383 {strides = array<i32>} : memref<2x2x32xf32, #tpu.memory_space<vmem>>, vector<1x2x32xf32>,
    %c0_201 = arith.constant 0 : index
    %c0_202 = arith.constant 0 : index
    %c0_203 = arith.constant 0 : index
    %384 = vector.load %arg11[%c0_201, %c0_202, %c0_203] : memref<2x2x32xf32, #tpu.memory_space<vmem>>, vector<1x2x32xf32>
    %385 = vector.shape_cast %384 : vector<1x2x32xf32> to vector<2x32xf32>
    %386 = vector.shape_cast %378 : vector<2x32xf32> to vector<1x2x32xf32>
    tpu.vector_store %arg11[%c0_201, %c0_202, %c0_203], %386 {strides = array<i32>} : memref<2x2x32xf32, #tpu.memory_space<vmem>>, vector<1x2x32xf32>,
    %c1_204 = arith.constant 1 : index
    %c0_205 = arith.constant 0 : index
    %c0_206 = arith.constant 0 : index
    %387 = vector.load %arg10[%c1_204, %c0_205, %c0_206] : memref<2x2x32xf32, #tpu.memory_space<vmem>>, vector<1x2x32xf32>
    %388 = vector.shape_cast %387 : vector<1x2x32xf32> to vector<2x32xf32>
    %c0_207 = arith.constant 0 : index
    %c0_208 = arith.constant 0 : index
    %c0_209 = arith.constant 0 : index
    %389 = vector.load %arg4[%c0_207, %c0_208, %c0_209] : memref<1x32x128xf32, #tpu.memory_space<vmem>>, vector<1x32x128xf32>
    %390 = vector.shape_cast %389 : vector<1x32x128xf32> to vector<32x128xf32>
    %cst_210 = arith.constant dense<0.000000e+00> : vector<2x128xf32>
    %391 = tpu.matmul %380, %390, %cst_210 {dimension_numbers = #tpu.dot_dimension_numbers<[1], [0], [0], [1], [0, 0, 1, 1], [], []>} : vector<2x32xf32>, vector<32x128xf32>, vector<2x128xf32> -> vector<2x128xf32>
    %c0_211 = arith.constant 0 : index
    %c0_212 = arith.constant 0 : index
    %c0_213 = arith.constant 0 : index
    %392 = vector.load %arg5[%c0_211, %c0_212, %c0_213] : memref<1x32x128xf32, #tpu.memory_space<vmem>>, vector<1x32x128xf32>
    %393 = vector.shape_cast %392 : vector<1x32x128xf32> to vector<32x128xf32>
    %cst_214 = arith.constant dense<0.000000e+00> : vector<2x128xf32>
    %394 = tpu.matmul %388, %393, %cst_214 {dimension_numbers = #tpu.dot_dimension_numbers<[1], [0], [0], [1], [0, 0, 1, 1], [], []>} : vector<2x32xf32>, vector<32x128xf32>, vector<2x128xf32> -> vector<2x128xf32>
    %395 = arith.addf %391, %394 : vector<2x128xf32>
    %c0_215 = arith.constant 0 : index
    %c0_216 = arith.constant 0 : index
    %c0_217 = arith.constant 0 : index
    %396 = vector.load %arg6[%c0_215, %c0_216, %c0_217] : memref<1x1x128xf32, #tpu.memory_space<vmem>>, vector<1x1x128xf32>
    %397 = vector.shape_cast %396 : vector<1x1x128xf32> to vector<1x128xf32>
    %398 = vector.broadcast %397 : vector<1x128xf32> to vector<2x128xf32>
    %399 = arith.addf %395, %398 : vector<2x128xf32>
    %c1_218 = arith.constant 1 : index
    %c0_219 = arith.constant 0 : index
    %c0_220 = arith.constant 0 : index
    %400 = vector.load %arg11[%c1_218, %c0_219, %c0_220] : memref<2x2x32xf32, #tpu.memory_space<vmem>>, vector<1x2x32xf32>
    %401 = vector.shape_cast %400 : vector<1x2x32xf32> to vector<2x32xf32>
    %402 = vector.extract_strided_slice %399 {offsets = [0, 0], sizes = [2, 32], strides = [1, 1]} : vector<2x128xf32> to vector<2x32xf32>
    %403 = arith.negf %402 : vector<2x32xf32>
    %404 = math.exp %403 : vector<2x32xf32>
    %cst_221 = arith.constant 1.000000e+00 : f32
    %405 = vector.broadcast %cst_221 : f32 to vector<2x32xf32>
    %406 = arith.addf %405, %404 : vector<2x32xf32>
    %407 = arith.divf %405, %406 : vector<2x32xf32>
    %408 = vector.extract_strided_slice %399 {offsets = [0, 32], sizes = [2, 32], strides = [1, 1]} : vector<2x128xf32> to vector<2x32xf32>
    %409 = arith.negf %408 : vector<2x32xf32>
    %410 = math.exp %409 : vector<2x32xf32>
    %cst_222 = arith.constant 1.000000e+00 : f32
    %411 = vector.broadcast %cst_222 : f32 to vector<2x32xf32>
    %412 = arith.addf %411, %410 : vector<2x32xf32>
    %413 = arith.divf %411, %412 : vector<2x32xf32>
    %414 = vector.extract_strided_slice %399 {offsets = [0, 64], sizes = [2, 32], strides = [1, 1]} : vector<2x128xf32> to vector<2x32xf32>
    %415 = math.tanh %414 : vector<2x32xf32>
    %416 = vector.extract_strided_slice %399 {offsets = [0, 96], sizes = [2, 32], strides = [1, 1]} : vector<2x128xf32> to vector<2x32xf32>
    %417 = arith.negf %416 : vector<2x32xf32>
    %418 = math.exp %417 : vector<2x32xf32>
    %cst_223 = arith.constant 1.000000e+00 : f32
    %419 = vector.broadcast %cst_223 : f32 to vector<2x32xf32>
    %420 = arith.addf %419, %418 : vector<2x32xf32>
    %421 = arith.divf %419, %420 : vector<2x32xf32>
    %422 = arith.mulf %413, %401 : vector<2x32xf32>
    %423 = arith.mulf %407, %415 : vector<2x32xf32>
    %424 = arith.addf %422, %423 : vector<2x32xf32>
    %425 = math.tanh %424 : vector<2x32xf32>
    %426 = arith.mulf %421, %425 : vector<2x32xf32>
    %c1_224 = arith.constant 1 : index
    %c0_225 = arith.constant 0 : index
    %c0_226 = arith.constant 0 : index
    %427 = vector.load %arg10[%c1_224, %c0_225, %c0_226] : memref<2x2x32xf32, #tpu.memory_space<vmem>>, vector<1x2x32xf32>
    %428 = vector.shape_cast %427 : vector<1x2x32xf32> to vector<2x32xf32>
    %429 = vector.shape_cast %426 : vector<2x32xf32> to vector<1x2x32xf32>
    tpu.vector_store %arg10[%c1_224, %c0_225, %c0_226], %429 {strides = array<i32>} : memref<2x2x32xf32, #tpu.memory_space<vmem>>, vector<1x2x32xf32>,
    %c1_227 = arith.constant 1 : index
    %c0_228 = arith.constant 0 : index
    %c0_229 = arith.constant 0 : index
    %430 = vector.load %arg11[%c1_227, %c0_228, %c0_229] : memref<2x2x32xf32, #tpu.memory_space<vmem>>, vector<1x2x32xf32>
    %431 = vector.shape_cast %430 : vector<1x2x32xf32> to vector<2x32xf32>
    %432 = vector.shape_cast %424 : vector<2x32xf32> to vector<1x2x32xf32>
    tpu.vector_store %arg11[%c1_227, %c0_228, %c0_229], %432 {strides = array<i32>} : memref<2x2x32xf32, #tpu.memory_space<vmem>>, vector<1x2x32xf32>,
    %c0_230 = arith.constant 0 : index
    %c0_231 = arith.constant 0 : index
    %c0_232 = arith.constant 0 : index
    %433 = vector.load %arg10[%c0_230, %c0_231, %c0_232] : memref<2x2x32xf32, #tpu.memory_space<vmem>>, vector<1x2x32xf32>
    %434 = vector.shape_cast %433 : vector<1x2x32xf32> to vector<2x32xf32>
    %c5 = arith.constant 5 : index
    %c0_233 = arith.constant 0 : index
    %c0_234 = arith.constant 0 : index
    %435 = vector.load %arg2[%c5, %c0_233, %c0_234] : memref<8x2x128xf32, #tpu.memory_space<vmem>>, vector<1x2x128xf32>
    %436 = vector.shape_cast %435 : vector<1x2x128xf32> to vector<2x128xf32>
    %c0_235 = arith.constant 0 : index
    %c0_236 = arith.constant 0 : index
    %437 = vector.load %arg3[%c0_235, %c0_236] : memref<32x128xf32, #tpu.memory_space<vmem>>, vector<32x128xf32>
    %cst_237 = arith.constant dense<0.000000e+00> : vector<2x128xf32>
    %438 = tpu.matmul %434, %437, %cst_237 {dimension_numbers = #tpu.dot_dimension_numbers<[1], [0], [0], [1], [0, 0, 1, 1], [], []>} : vector<2x32xf32>, vector<32x128xf32>, vector<2x128xf32> -> vector<2x128xf32>
    %439 = arith.addf %436, %438 : vector<2x128xf32>
    %c0_238 = arith.constant 0 : index
    %c0_239 = arith.constant 0 : index
    %c0_240 = arith.constant 0 : index
    %440 = vector.load %arg11[%c0_238, %c0_239, %c0_240] : memref<2x2x32xf32, #tpu.memory_space<vmem>>, vector<1x2x32xf32>
    %441 = vector.shape_cast %440 : vector<1x2x32xf32> to vector<2x32xf32>
    %442 = vector.extract_strided_slice %439 {offsets = [0, 0], sizes = [2, 32], strides = [1, 1]} : vector<2x128xf32> to vector<2x32xf32>
    %443 = arith.negf %442 : vector<2x32xf32>
    %444 = math.exp %443 : vector<2x32xf32>
    %cst_241 = arith.constant 1.000000e+00 : f32
    %445 = vector.broadcast %cst_241 : f32 to vector<2x32xf32>
    %446 = arith.addf %445, %444 : vector<2x32xf32>
    %447 = arith.divf %445, %446 : vector<2x32xf32>
    %448 = vector.extract_strided_slice %439 {offsets = [0, 32], sizes = [2, 32], strides = [1, 1]} : vector<2x128xf32> to vector<2x32xf32>
    %449 = arith.negf %448 : vector<2x32xf32>
    %450 = math.exp %449 : vector<2x32xf32>
    %cst_242 = arith.constant 1.000000e+00 : f32
    %451 = vector.broadcast %cst_242 : f32 to vector<2x32xf32>
    %452 = arith.addf %451, %450 : vector<2x32xf32>
    %453 = arith.divf %451, %452 : vector<2x32xf32>
    %454 = vector.extract_strided_slice %439 {offsets = [0, 64], sizes = [2, 32], strides = [1, 1]} : vector<2x128xf32> to vector<2x32xf32>
    %455 = math.tanh %454 : vector<2x32xf32>
    %456 = vector.extract_strided_slice %439 {offsets = [0, 96], sizes = [2, 32], strides = [1, 1]} : vector<2x128xf32> to vector<2x32xf32>
    %457 = arith.negf %456 : vector<2x32xf32>
    %458 = math.exp %457 : vector<2x32xf32>
    %cst_243 = arith.constant 1.000000e+00 : f32
    %459 = vector.broadcast %cst_243 : f32 to vector<2x32xf32>
    %460 = arith.addf %459, %458 : vector<2x32xf32>
    %461 = arith.divf %459, %460 : vector<2x32xf32>
    %462 = arith.mulf %453, %441 : vector<2x32xf32>
    %463 = arith.mulf %447, %455 : vector<2x32xf32>
    %464 = arith.addf %462, %463 : vector<2x32xf32>
    %465 = math.tanh %464 : vector<2x32xf32>
    %466 = arith.mulf %461, %465 : vector<2x32xf32>
    %c0_244 = arith.constant 0 : index
    %c0_245 = arith.constant 0 : index
    %c0_246 = arith.constant 0 : index
    %467 = vector.load %arg10[%c0_244, %c0_245, %c0_246] : memref<2x2x32xf32, #tpu.memory_space<vmem>>, vector<1x2x32xf32>
    %468 = vector.shape_cast %467 : vector<1x2x32xf32> to vector<2x32xf32>
    %469 = vector.shape_cast %466 : vector<2x32xf32> to vector<1x2x32xf32>
    tpu.vector_store %arg10[%c0_244, %c0_245, %c0_246], %469 {strides = array<i32>} : memref<2x2x32xf32, #tpu.memory_space<vmem>>, vector<1x2x32xf32>,
    %c0_247 = arith.constant 0 : index
    %c0_248 = arith.constant 0 : index
    %c0_249 = arith.constant 0 : index
    %470 = vector.load %arg11[%c0_247, %c0_248, %c0_249] : memref<2x2x32xf32, #tpu.memory_space<vmem>>, vector<1x2x32xf32>
    %471 = vector.shape_cast %470 : vector<1x2x32xf32> to vector<2x32xf32>
    %472 = vector.shape_cast %464 : vector<2x32xf32> to vector<1x2x32xf32>
    tpu.vector_store %arg11[%c0_247, %c0_248, %c0_249], %472 {strides = array<i32>} : memref<2x2x32xf32, #tpu.memory_space<vmem>>, vector<1x2x32xf32>,
    %c1_250 = arith.constant 1 : index
    %c0_251 = arith.constant 0 : index
    %c0_252 = arith.constant 0 : index
    %473 = vector.load %arg10[%c1_250, %c0_251, %c0_252] : memref<2x2x32xf32, #tpu.memory_space<vmem>>, vector<1x2x32xf32>
    %474 = vector.shape_cast %473 : vector<1x2x32xf32> to vector<2x32xf32>
    %c0_253 = arith.constant 0 : index
    %c0_254 = arith.constant 0 : index
    %c0_255 = arith.constant 0 : index
    %475 = vector.load %arg4[%c0_253, %c0_254, %c0_255] : memref<1x32x128xf32, #tpu.memory_space<vmem>>, vector<1x32x128xf32>
    %476 = vector.shape_cast %475 : vector<1x32x128xf32> to vector<32x128xf32>
    %cst_256 = arith.constant dense<0.000000e+00> : vector<2x128xf32>
    %477 = tpu.matmul %466, %476, %cst_256 {dimension_numbers = #tpu.dot_dimension_numbers<[1], [0], [0], [1], [0, 0, 1, 1], [], []>} : vector<2x32xf32>, vector<32x128xf32>, vector<2x128xf32> -> vector<2x128xf32>
    %c0_257 = arith.constant 0 : index
    %c0_258 = arith.constant 0 : index
    %c0_259 = arith.constant 0 : index
    %478 = vector.load %arg5[%c0_257, %c0_258, %c0_259] : memref<1x32x128xf32, #tpu.memory_space<vmem>>, vector<1x32x128xf32>
    %479 = vector.shape_cast %478 : vector<1x32x128xf32> to vector<32x128xf32>
    %cst_260 = arith.constant dense<0.000000e+00> : vector<2x128xf32>
    %480 = tpu.matmul %474, %479, %cst_260 {dimension_numbers = #tpu.dot_dimension_numbers<[1], [0], [0], [1], [0, 0, 1, 1], [], []>} : vector<2x32xf32>, vector<32x128xf32>, vector<2x128xf32> -> vector<2x128xf32>
    %481 = arith.addf %477, %480 : vector<2x128xf32>
    %c0_261 = arith.constant 0 : index
    %c0_262 = arith.constant 0 : index
    %c0_263 = arith.constant 0 : index
    %482 = vector.load %arg6[%c0_261, %c0_262, %c0_263] : memref<1x1x128xf32, #tpu.memory_space<vmem>>, vector<1x1x128xf32>
    %483 = vector.shape_cast %482 : vector<1x1x128xf32> to vector<1x128xf32>
    %484 = vector.broadcast %483 : vector<1x128xf32> to vector<2x128xf32>
    %485 = arith.addf %481, %484 : vector<2x128xf32>
    %c1_264 = arith.constant 1 : index
    %c0_265 = arith.constant 0 : index
    %c0_266 = arith.constant 0 : index
    %486 = vector.load %arg11[%c1_264, %c0_265, %c0_266] : memref<2x2x32xf32, #tpu.memory_space<vmem>>, vector<1x2x32xf32>
    %487 = vector.shape_cast %486 : vector<1x2x32xf32> to vector<2x32xf32>
    %488 = vector.extract_strided_slice %485 {offsets = [0, 0], sizes = [2, 32], strides = [1, 1]} : vector<2x128xf32> to vector<2x32xf32>
    %489 = arith.negf %488 : vector<2x32xf32>
    %490 = math.exp %489 : vector<2x32xf32>
    %cst_267 = arith.constant 1.000000e+00 : f32
    %491 = vector.broadcast %cst_267 : f32 to vector<2x32xf32>
    %492 = arith.addf %491, %490 : vector<2x32xf32>
    %493 = arith.divf %491, %492 : vector<2x32xf32>
    %494 = vector.extract_strided_slice %485 {offsets = [0, 32], sizes = [2, 32], strides = [1, 1]} : vector<2x128xf32> to vector<2x32xf32>
    %495 = arith.negf %494 : vector<2x32xf32>
    %496 = math.exp %495 : vector<2x32xf32>
    %cst_268 = arith.constant 1.000000e+00 : f32
    %497 = vector.broadcast %cst_268 : f32 to vector<2x32xf32>
    %498 = arith.addf %497, %496 : vector<2x32xf32>
    %499 = arith.divf %497, %498 : vector<2x32xf32>
    %500 = vector.extract_strided_slice %485 {offsets = [0, 64], sizes = [2, 32], strides = [1, 1]} : vector<2x128xf32> to vector<2x32xf32>
    %501 = math.tanh %500 : vector<2x32xf32>
    %502 = vector.extract_strided_slice %485 {offsets = [0, 96], sizes = [2, 32], strides = [1, 1]} : vector<2x128xf32> to vector<2x32xf32>
    %503 = arith.negf %502 : vector<2x32xf32>
    %504 = math.exp %503 : vector<2x32xf32>
    %cst_269 = arith.constant 1.000000e+00 : f32
    %505 = vector.broadcast %cst_269 : f32 to vector<2x32xf32>
    %506 = arith.addf %505, %504 : vector<2x32xf32>
    %507 = arith.divf %505, %506 : vector<2x32xf32>
    %508 = arith.mulf %499, %487 : vector<2x32xf32>
    %509 = arith.mulf %493, %501 : vector<2x32xf32>
    %510 = arith.addf %508, %509 : vector<2x32xf32>
    %511 = math.tanh %510 : vector<2x32xf32>
    %512 = arith.mulf %507, %511 : vector<2x32xf32>
    %c1_270 = arith.constant 1 : index
    %c0_271 = arith.constant 0 : index
    %c0_272 = arith.constant 0 : index
    %513 = vector.load %arg10[%c1_270, %c0_271, %c0_272] : memref<2x2x32xf32, #tpu.memory_space<vmem>>, vector<1x2x32xf32>
    %514 = vector.shape_cast %513 : vector<1x2x32xf32> to vector<2x32xf32>
    %515 = vector.shape_cast %512 : vector<2x32xf32> to vector<1x2x32xf32>
    tpu.vector_store %arg10[%c1_270, %c0_271, %c0_272], %515 {strides = array<i32>} : memref<2x2x32xf32, #tpu.memory_space<vmem>>, vector<1x2x32xf32>,
    %c1_273 = arith.constant 1 : index
    %c0_274 = arith.constant 0 : index
    %c0_275 = arith.constant 0 : index
    %516 = vector.load %arg11[%c1_273, %c0_274, %c0_275] : memref<2x2x32xf32, #tpu.memory_space<vmem>>, vector<1x2x32xf32>
    %517 = vector.shape_cast %516 : vector<1x2x32xf32> to vector<2x32xf32>
    %518 = vector.shape_cast %510 : vector<2x32xf32> to vector<1x2x32xf32>
    tpu.vector_store %arg11[%c1_273, %c0_274, %c0_275], %518 {strides = array<i32>} : memref<2x2x32xf32, #tpu.memory_space<vmem>>, vector<1x2x32xf32>,
    %c0_276 = arith.constant 0 : index
    %c0_277 = arith.constant 0 : index
    %c0_278 = arith.constant 0 : index
    %519 = vector.load %arg10[%c0_276, %c0_277, %c0_278] : memref<2x2x32xf32, #tpu.memory_space<vmem>>, vector<1x2x32xf32>
    %520 = vector.shape_cast %519 : vector<1x2x32xf32> to vector<2x32xf32>
    %c6 = arith.constant 6 : index
    %c0_279 = arith.constant 0 : index
    %c0_280 = arith.constant 0 : index
    %521 = vector.load %arg2[%c6, %c0_279, %c0_280] : memref<8x2x128xf32, #tpu.memory_space<vmem>>, vector<1x2x128xf32>
    %522 = vector.shape_cast %521 : vector<1x2x128xf32> to vector<2x128xf32>
    %c0_281 = arith.constant 0 : index
    %c0_282 = arith.constant 0 : index
    %523 = vector.load %arg3[%c0_281, %c0_282] : memref<32x128xf32, #tpu.memory_space<vmem>>, vector<32x128xf32>
    %cst_283 = arith.constant dense<0.000000e+00> : vector<2x128xf32>
    %524 = tpu.matmul %520, %523, %cst_283 {dimension_numbers = #tpu.dot_dimension_numbers<[1], [0], [0], [1], [0, 0, 1, 1], [], []>} : vector<2x32xf32>, vector<32x128xf32>, vector<2x128xf32> -> vector<2x128xf32>
    %525 = arith.addf %522, %524 : vector<2x128xf32>
    %c0_284 = arith.constant 0 : index
    %c0_285 = arith.constant 0 : index
    %c0_286 = arith.constant 0 : index
    %526 = vector.load %arg11[%c0_284, %c0_285, %c0_286] : memref<2x2x32xf32, #tpu.memory_space<vmem>>, vector<1x2x32xf32>
    %527 = vector.shape_cast %526 : vector<1x2x32xf32> to vector<2x32xf32>
    %528 = vector.extract_strided_slice %525 {offsets = [0, 0], sizes = [2, 32], strides = [1, 1]} : vector<2x128xf32> to vector<2x32xf32>
    %529 = arith.negf %528 : vector<2x32xf32>
    %530 = math.exp %529 : vector<2x32xf32>
    %cst_287 = arith.constant 1.000000e+00 : f32
    %531 = vector.broadcast %cst_287 : f32 to vector<2x32xf32>
    %532 = arith.addf %531, %530 : vector<2x32xf32>
    %533 = arith.divf %531, %532 : vector<2x32xf32>
    %534 = vector.extract_strided_slice %525 {offsets = [0, 32], sizes = [2, 32], strides = [1, 1]} : vector<2x128xf32> to vector<2x32xf32>
    %535 = arith.negf %534 : vector<2x32xf32>
    %536 = math.exp %535 : vector<2x32xf32>
    %cst_288 = arith.constant 1.000000e+00 : f32
    %537 = vector.broadcast %cst_288 : f32 to vector<2x32xf32>
    %538 = arith.addf %537, %536 : vector<2x32xf32>
    %539 = arith.divf %537, %538 : vector<2x32xf32>
    %540 = vector.extract_strided_slice %525 {offsets = [0, 64], sizes = [2, 32], strides = [1, 1]} : vector<2x128xf32> to vector<2x32xf32>
    %541 = math.tanh %540 : vector<2x32xf32>
    %542 = vector.extract_strided_slice %525 {offsets = [0, 96], sizes = [2, 32], strides = [1, 1]} : vector<2x128xf32> to vector<2x32xf32>
    %543 = arith.negf %542 : vector<2x32xf32>
    %544 = math.exp %543 : vector<2x32xf32>
    %cst_289 = arith.constant 1.000000e+00 : f32
    %545 = vector.broadcast %cst_289 : f32 to vector<2x32xf32>
    %546 = arith.addf %545, %544 : vector<2x32xf32>
    %547 = arith.divf %545, %546 : vector<2x32xf32>
    %548 = arith.mulf %539, %527 : vector<2x32xf32>
    %549 = arith.mulf %533, %541 : vector<2x32xf32>
    %550 = arith.addf %548, %549 : vector<2x32xf32>
    %551 = math.tanh %550 : vector<2x32xf32>
    %552 = arith.mulf %547, %551 : vector<2x32xf32>
    %c0_290 = arith.constant 0 : index
    %c0_291 = arith.constant 0 : index
    %c0_292 = arith.constant 0 : index
    %553 = vector.load %arg10[%c0_290, %c0_291, %c0_292] : memref<2x2x32xf32, #tpu.memory_space<vmem>>, vector<1x2x32xf32>
    %554 = vector.shape_cast %553 : vector<1x2x32xf32> to vector<2x32xf32>
    %555 = vector.shape_cast %552 : vector<2x32xf32> to vector<1x2x32xf32>
    tpu.vector_store %arg10[%c0_290, %c0_291, %c0_292], %555 {strides = array<i32>} : memref<2x2x32xf32, #tpu.memory_space<vmem>>, vector<1x2x32xf32>,
    %c0_293 = arith.constant 0 : index
    %c0_294 = arith.constant 0 : index
    %c0_295 = arith.constant 0 : index
    %556 = vector.load %arg11[%c0_293, %c0_294, %c0_295] : memref<2x2x32xf32, #tpu.memory_space<vmem>>, vector<1x2x32xf32>
    %557 = vector.shape_cast %556 : vector<1x2x32xf32> to vector<2x32xf32>
    %558 = vector.shape_cast %550 : vector<2x32xf32> to vector<1x2x32xf32>
    tpu.vector_store %arg11[%c0_293, %c0_294, %c0_295], %558 {strides = array<i32>} : memref<2x2x32xf32, #tpu.memory_space<vmem>>, vector<1x2x32xf32>,
    %c1_296 = arith.constant 1 : index
    %c0_297 = arith.constant 0 : index
    %c0_298 = arith.constant 0 : index
    %559 = vector.load %arg10[%c1_296, %c0_297, %c0_298] : memref<2x2x32xf32, #tpu.memory_space<vmem>>, vector<1x2x32xf32>
    %560 = vector.shape_cast %559 : vector<1x2x32xf32> to vector<2x32xf32>
    %c0_299 = arith.constant 0 : index
    %c0_300 = arith.constant 0 : index
    %c0_301 = arith.constant 0 : index
    %561 = vector.load %arg4[%c0_299, %c0_300, %c0_301] : memref<1x32x128xf32, #tpu.memory_space<vmem>>, vector<1x32x128xf32>
    %562 = vector.shape_cast %561 : vector<1x32x128xf32> to vector<32x128xf32>
    %cst_302 = arith.constant dense<0.000000e+00> : vector<2x128xf32>
    %563 = tpu.matmul %552, %562, %cst_302 {dimension_numbers = #tpu.dot_dimension_numbers<[1], [0], [0], [1], [0, 0, 1, 1], [], []>} : vector<2x32xf32>, vector<32x128xf32>, vector<2x128xf32> -> vector<2x128xf32>
    %c0_303 = arith.constant 0 : index
    %c0_304 = arith.constant 0 : index
    %c0_305 = arith.constant 0 : index
    %564 = vector.load %arg5[%c0_303, %c0_304, %c0_305] : memref<1x32x128xf32, #tpu.memory_space<vmem>>, vector<1x32x128xf32>
    %565 = vector.shape_cast %564 : vector<1x32x128xf32> to vector<32x128xf32>
    %cst_306 = arith.constant dense<0.000000e+00> : vector<2x128xf32>
    %566 = tpu.matmul %560, %565, %cst_306 {dimension_numbers = #tpu.dot_dimension_numbers<[1], [0], [0], [1], [0, 0, 1, 1], [], []>} : vector<2x32xf32>, vector<32x128xf32>, vector<2x128xf32> -> vector<2x128xf32>
    %567 = arith.addf %563, %566 : vector<2x128xf32>
    %c0_307 = arith.constant 0 : index
    %c0_308 = arith.constant 0 : index
    %c0_309 = arith.constant 0 : index
    %568 = vector.load %arg6[%c0_307, %c0_308, %c0_309] : memref<1x1x128xf32, #tpu.memory_space<vmem>>, vector<1x1x128xf32>
    %569 = vector.shape_cast %568 : vector<1x1x128xf32> to vector<1x128xf32>
    %570 = vector.broadcast %569 : vector<1x128xf32> to vector<2x128xf32>
    %571 = arith.addf %567, %570 : vector<2x128xf32>
    %c1_310 = arith.constant 1 : index
    %c0_311 = arith.constant 0 : index
    %c0_312 = arith.constant 0 : index
    %572 = vector.load %arg11[%c1_310, %c0_311, %c0_312] : memref<2x2x32xf32, #tpu.memory_space<vmem>>, vector<1x2x32xf32>
    %573 = vector.shape_cast %572 : vector<1x2x32xf32> to vector<2x32xf32>
    %574 = vector.extract_strided_slice %571 {offsets = [0, 0], sizes = [2, 32], strides = [1, 1]} : vector<2x128xf32> to vector<2x32xf32>
    %575 = arith.negf %574 : vector<2x32xf32>
    %576 = math.exp %575 : vector<2x32xf32>
    %cst_313 = arith.constant 1.000000e+00 : f32
    %577 = vector.broadcast %cst_313 : f32 to vector<2x32xf32>
    %578 = arith.addf %577, %576 : vector<2x32xf32>
    %579 = arith.divf %577, %578 : vector<2x32xf32>
    %580 = vector.extract_strided_slice %571 {offsets = [0, 32], sizes = [2, 32], strides = [1, 1]} : vector<2x128xf32> to vector<2x32xf32>
    %581 = arith.negf %580 : vector<2x32xf32>
    %582 = math.exp %581 : vector<2x32xf32>
    %cst_314 = arith.constant 1.000000e+00 : f32
    %583 = vector.broadcast %cst_314 : f32 to vector<2x32xf32>
    %584 = arith.addf %583, %582 : vector<2x32xf32>
    %585 = arith.divf %583, %584 : vector<2x32xf32>
    %586 = vector.extract_strided_slice %571 {offsets = [0, 64], sizes = [2, 32], strides = [1, 1]} : vector<2x128xf32> to vector<2x32xf32>
    %587 = math.tanh %586 : vector<2x32xf32>
    %588 = vector.extract_strided_slice %571 {offsets = [0, 96], sizes = [2, 32], strides = [1, 1]} : vector<2x128xf32> to vector<2x32xf32>
    %589 = arith.negf %588 : vector<2x32xf32>
    %590 = math.exp %589 : vector<2x32xf32>
    %cst_315 = arith.constant 1.000000e+00 : f32
    %591 = vector.broadcast %cst_315 : f32 to vector<2x32xf32>
    %592 = arith.addf %591, %590 : vector<2x32xf32>
    %593 = arith.divf %591, %592 : vector<2x32xf32>
    %594 = arith.mulf %585, %573 : vector<2x32xf32>
    %595 = arith.mulf %579, %587 : vector<2x32xf32>
    %596 = arith.addf %594, %595 : vector<2x32xf32>
    %597 = math.tanh %596 : vector<2x32xf32>
    %598 = arith.mulf %593, %597 : vector<2x32xf32>
    %c1_316 = arith.constant 1 : index
    %c0_317 = arith.constant 0 : index
    %c0_318 = arith.constant 0 : index
    %599 = vector.load %arg10[%c1_316, %c0_317, %c0_318] : memref<2x2x32xf32, #tpu.memory_space<vmem>>, vector<1x2x32xf32>
    %600 = vector.shape_cast %599 : vector<1x2x32xf32> to vector<2x32xf32>
    %601 = vector.shape_cast %598 : vector<2x32xf32> to vector<1x2x32xf32>
    tpu.vector_store %arg10[%c1_316, %c0_317, %c0_318], %601 {strides = array<i32>} : memref<2x2x32xf32, #tpu.memory_space<vmem>>, vector<1x2x32xf32>,
    %c1_319 = arith.constant 1 : index
    %c0_320 = arith.constant 0 : index
    %c0_321 = arith.constant 0 : index
    %602 = vector.load %arg11[%c1_319, %c0_320, %c0_321] : memref<2x2x32xf32, #tpu.memory_space<vmem>>, vector<1x2x32xf32>
    %603 = vector.shape_cast %602 : vector<1x2x32xf32> to vector<2x32xf32>
    %604 = vector.shape_cast %596 : vector<2x32xf32> to vector<1x2x32xf32>
    tpu.vector_store %arg11[%c1_319, %c0_320, %c0_321], %604 {strides = array<i32>} : memref<2x2x32xf32, #tpu.memory_space<vmem>>, vector<1x2x32xf32>,
    %c0_322 = arith.constant 0 : index
    %c0_323 = arith.constant 0 : index
    %c0_324 = arith.constant 0 : index
    %605 = vector.load %arg10[%c0_322, %c0_323, %c0_324] : memref<2x2x32xf32, #tpu.memory_space<vmem>>, vector<1x2x32xf32>
    %606 = vector.shape_cast %605 : vector<1x2x32xf32> to vector<2x32xf32>
    %c7 = arith.constant 7 : index
    %c0_325 = arith.constant 0 : index
    %c0_326 = arith.constant 0 : index
    %607 = vector.load %arg2[%c7, %c0_325, %c0_326] : memref<8x2x128xf32, #tpu.memory_space<vmem>>, vector<1x2x128xf32>
    %608 = vector.shape_cast %607 : vector<1x2x128xf32> to vector<2x128xf32>
    %c0_327 = arith.constant 0 : index
    %c0_328 = arith.constant 0 : index
    %609 = vector.load %arg3[%c0_327, %c0_328] : memref<32x128xf32, #tpu.memory_space<vmem>>, vector<32x128xf32>
    %cst_329 = arith.constant dense<0.000000e+00> : vector<2x128xf32>
    %610 = tpu.matmul %606, %609, %cst_329 {dimension_numbers = #tpu.dot_dimension_numbers<[1], [0], [0], [1], [0, 0, 1, 1], [], []>} : vector<2x32xf32>, vector<32x128xf32>, vector<2x128xf32> -> vector<2x128xf32>
    %611 = arith.addf %608, %610 : vector<2x128xf32>
    %c0_330 = arith.constant 0 : index
    %c0_331 = arith.constant 0 : index
    %c0_332 = arith.constant 0 : index
    %612 = vector.load %arg11[%c0_330, %c0_331, %c0_332] : memref<2x2x32xf32, #tpu.memory_space<vmem>>, vector<1x2x32xf32>
    %613 = vector.shape_cast %612 : vector<1x2x32xf32> to vector<2x32xf32>
    %614 = vector.extract_strided_slice %611 {offsets = [0, 0], sizes = [2, 32], strides = [1, 1]} : vector<2x128xf32> to vector<2x32xf32>
    %615 = arith.negf %614 : vector<2x32xf32>
    %616 = math.exp %615 : vector<2x32xf32>
    %cst_333 = arith.constant 1.000000e+00 : f32
    %617 = vector.broadcast %cst_333 : f32 to vector<2x32xf32>
    %618 = arith.addf %617, %616 : vector<2x32xf32>
    %619 = arith.divf %617, %618 : vector<2x32xf32>
    %620 = vector.extract_strided_slice %611 {offsets = [0, 32], sizes = [2, 32], strides = [1, 1]} : vector<2x128xf32> to vector<2x32xf32>
    %621 = arith.negf %620 : vector<2x32xf32>
    %622 = math.exp %621 : vector<2x32xf32>
    %cst_334 = arith.constant 1.000000e+00 : f32
    %623 = vector.broadcast %cst_334 : f32 to vector<2x32xf32>
    %624 = arith.addf %623, %622 : vector<2x32xf32>
    %625 = arith.divf %623, %624 : vector<2x32xf32>
    %626 = vector.extract_strided_slice %611 {offsets = [0, 64], sizes = [2, 32], strides = [1, 1]} : vector<2x128xf32> to vector<2x32xf32>
    %627 = math.tanh %626 : vector<2x32xf32>
    %628 = vector.extract_strided_slice %611 {offsets = [0, 96], sizes = [2, 32], strides = [1, 1]} : vector<2x128xf32> to vector<2x32xf32>
    %629 = arith.negf %628 : vector<2x32xf32>
    %630 = math.exp %629 : vector<2x32xf32>
    %cst_335 = arith.constant 1.000000e+00 : f32
    %631 = vector.broadcast %cst_335 : f32 to vector<2x32xf32>
    %632 = arith.addf %631, %630 : vector<2x32xf32>
    %633 = arith.divf %631, %632 : vector<2x32xf32>
    %634 = arith.mulf %625, %613 : vector<2x32xf32>
    %635 = arith.mulf %619, %627 : vector<2x32xf32>
    %636 = arith.addf %634, %635 : vector<2x32xf32>
    %637 = math.tanh %636 : vector<2x32xf32>
    %638 = arith.mulf %633, %637 : vector<2x32xf32>
    %c0_336 = arith.constant 0 : index
    %c0_337 = arith.constant 0 : index
    %c0_338 = arith.constant 0 : index
    %639 = vector.load %arg10[%c0_336, %c0_337, %c0_338] : memref<2x2x32xf32, #tpu.memory_space<vmem>>, vector<1x2x32xf32>
    %640 = vector.shape_cast %639 : vector<1x2x32xf32> to vector<2x32xf32>
    %641 = vector.shape_cast %638 : vector<2x32xf32> to vector<1x2x32xf32>
    tpu.vector_store %arg10[%c0_336, %c0_337, %c0_338], %641 {strides = array<i32>} : memref<2x2x32xf32, #tpu.memory_space<vmem>>, vector<1x2x32xf32>,
    %c0_339 = arith.constant 0 : index
    %c0_340 = arith.constant 0 : index
    %c0_341 = arith.constant 0 : index
    %642 = vector.load %arg11[%c0_339, %c0_340, %c0_341] : memref<2x2x32xf32, #tpu.memory_space<vmem>>, vector<1x2x32xf32>
    %643 = vector.shape_cast %642 : vector<1x2x32xf32> to vector<2x32xf32>
    %644 = vector.shape_cast %636 : vector<2x32xf32> to vector<1x2x32xf32>
    tpu.vector_store %arg11[%c0_339, %c0_340, %c0_341], %644 {strides = array<i32>} : memref<2x2x32xf32, #tpu.memory_space<vmem>>, vector<1x2x32xf32>,
    %c1_342 = arith.constant 1 : index
    %c0_343 = arith.constant 0 : index
    %c0_344 = arith.constant 0 : index
    %645 = vector.load %arg10[%c1_342, %c0_343, %c0_344] : memref<2x2x32xf32, #tpu.memory_space<vmem>>, vector<1x2x32xf32>
    %646 = vector.shape_cast %645 : vector<1x2x32xf32> to vector<2x32xf32>
    %c0_345 = arith.constant 0 : index
    %c0_346 = arith.constant 0 : index
    %c0_347 = arith.constant 0 : index
    %647 = vector.load %arg4[%c0_345, %c0_346, %c0_347] : memref<1x32x128xf32, #tpu.memory_space<vmem>>, vector<1x32x128xf32>
    %648 = vector.shape_cast %647 : vector<1x32x128xf32> to vector<32x128xf32>
    %cst_348 = arith.constant dense<0.000000e+00> : vector<2x128xf32>
    %649 = tpu.matmul %638, %648, %cst_348 {dimension_numbers = #tpu.dot_dimension_numbers<[1], [0], [0], [1], [0, 0, 1, 1], [], []>} : vector<2x32xf32>, vector<32x128xf32>, vector<2x128xf32> -> vector<2x128xf32>
    %c0_349 = arith.constant 0 : index
    %c0_350 = arith.constant 0 : index
    %c0_351 = arith.constant 0 : index
    %650 = vector.load %arg5[%c0_349, %c0_350, %c0_351] : memref<1x32x128xf32, #tpu.memory_space<vmem>>, vector<1x32x128xf32>
    %651 = vector.shape_cast %650 : vector<1x32x128xf32> to vector<32x128xf32>
    %cst_352 = arith.constant dense<0.000000e+00> : vector<2x128xf32>
    %652 = tpu.matmul %646, %651, %cst_352 {dimension_numbers = #tpu.dot_dimension_numbers<[1], [0], [0], [1], [0, 0, 1, 1], [], []>} : vector<2x32xf32>, vector<32x128xf32>, vector<2x128xf32> -> vector<2x128xf32>
    %653 = arith.addf %649, %652 : vector<2x128xf32>
    %c0_353 = arith.constant 0 : index
    %c0_354 = arith.constant 0 : index
    %c0_355 = arith.constant 0 : index
    %654 = vector.load %arg6[%c0_353, %c0_354, %c0_355] : memref<1x1x128xf32, #tpu.memory_space<vmem>>, vector<1x1x128xf32>
    %655 = vector.shape_cast %654 : vector<1x1x128xf32> to vector<1x128xf32>
    %656 = vector.broadcast %655 : vector<1x128xf32> to vector<2x128xf32>
    %657 = arith.addf %653, %656 : vector<2x128xf32>
    %c1_356 = arith.constant 1 : index
    %c0_357 = arith.constant 0 : index
    %c0_358 = arith.constant 0 : index
    %658 = vector.load %arg11[%c1_356, %c0_357, %c0_358] : memref<2x2x32xf32, #tpu.memory_space<vmem>>, vector<1x2x32xf32>
    %659 = vector.shape_cast %658 : vector<1x2x32xf32> to vector<2x32xf32>
    %660 = vector.extract_strided_slice %657 {offsets = [0, 0], sizes = [2, 32], strides = [1, 1]} : vector<2x128xf32> to vector<2x32xf32>
    %661 = arith.negf %660 : vector<2x32xf32>
    %662 = math.exp %661 : vector<2x32xf32>
    %cst_359 = arith.constant 1.000000e+00 : f32
    %663 = vector.broadcast %cst_359 : f32 to vector<2x32xf32>
    %664 = arith.addf %663, %662 : vector<2x32xf32>
    %665 = arith.divf %663, %664 : vector<2x32xf32>
    %666 = vector.extract_strided_slice %657 {offsets = [0, 32], sizes = [2, 32], strides = [1, 1]} : vector<2x128xf32> to vector<2x32xf32>
    %667 = arith.negf %666 : vector<2x32xf32>
    %668 = math.exp %667 : vector<2x32xf32>
    %cst_360 = arith.constant 1.000000e+00 : f32
    %669 = vector.broadcast %cst_360 : f32 to vector<2x32xf32>
    %670 = arith.addf %669, %668 : vector<2x32xf32>
    %671 = arith.divf %669, %670 : vector<2x32xf32>
    %672 = vector.extract_strided_slice %657 {offsets = [0, 64], sizes = [2, 32], strides = [1, 1]} : vector<2x128xf32> to vector<2x32xf32>
    %673 = math.tanh %672 : vector<2x32xf32>
    %674 = vector.extract_strided_slice %657 {offsets = [0, 96], sizes = [2, 32], strides = [1, 1]} : vector<2x128xf32> to vector<2x32xf32>
    %675 = arith.negf %674 : vector<2x32xf32>
    %676 = math.exp %675 : vector<2x32xf32>
    %cst_361 = arith.constant 1.000000e+00 : f32
    %677 = vector.broadcast %cst_361 : f32 to vector<2x32xf32>
    %678 = arith.addf %677, %676 : vector<2x32xf32>
    %679 = arith.divf %677, %678 : vector<2x32xf32>
    %680 = arith.mulf %671, %659 : vector<2x32xf32>
    %681 = arith.mulf %665, %673 : vector<2x32xf32>
    %682 = arith.addf %680, %681 : vector<2x32xf32>
    %683 = math.tanh %682 : vector<2x32xf32>
    %684 = arith.mulf %679, %683 : vector<2x32xf32>
    %c1_362 = arith.constant 1 : index
    %c0_363 = arith.constant 0 : index
    %c0_364 = arith.constant 0 : index
    %685 = vector.load %arg10[%c1_362, %c0_363, %c0_364] : memref<2x2x32xf32, #tpu.memory_space<vmem>>, vector<1x2x32xf32>
    %686 = vector.shape_cast %685 : vector<1x2x32xf32> to vector<2x32xf32>
    %687 = vector.shape_cast %684 : vector<2x32xf32> to vector<1x2x32xf32>
    tpu.vector_store %arg10[%c1_362, %c0_363, %c0_364], %687 {strides = array<i32>} : memref<2x2x32xf32, #tpu.memory_space<vmem>>, vector<1x2x32xf32>,
    %c1_365 = arith.constant 1 : index
    %c0_366 = arith.constant 0 : index
    %c0_367 = arith.constant 0 : index
    %688 = vector.load %arg11[%c1_365, %c0_366, %c0_367] : memref<2x2x32xf32, #tpu.memory_space<vmem>>, vector<1x2x32xf32>
    %689 = vector.shape_cast %688 : vector<1x2x32xf32> to vector<2x32xf32>
    %690 = vector.shape_cast %682 : vector<2x32xf32> to vector<1x2x32xf32>
    tpu.vector_store %arg11[%c1_365, %c0_366, %c0_367], %690 {strides = array<i32>} : memref<2x2x32xf32, #tpu.memory_space<vmem>>, vector<1x2x32xf32>,
    %c0_i32_368 = arith.constant 0 : i32
    %691 = arith.cmpi eq, %arg1, %c0_i32_368 : i32
    %692 = arith.extui %691 : i1 to i32
    %c0_i32_369 = arith.constant 0 : i32
    %693 = arith.cmpi ne, %692, %c0_i32_369 : i32
    scf.if %693 {
      %c0_370 = arith.constant 0 : index
      %c0_371 = arith.constant 0 : index
      %694 = vector.load %arg7[%c0_370, %c0_371] : memref<32x8xf32, #tpu.memory_space<vmem>>, vector<32x8xf32>
      %cst_372 = arith.constant dense<0.000000e+00> : vector<2x8xf32>
      %695 = tpu.matmul %684, %694, %cst_372 {dimension_numbers = #tpu.dot_dimension_numbers<[1], [0], [0], [1], [0, 0, 1, 1], [], []>} : vector<2x32xf32>, vector<32x8xf32>, vector<2x8xf32> -> vector<2x8xf32>
      %c0_373 = arith.constant 0 : index
      %c0_374 = arith.constant 0 : index
      %696 = vector.load %arg8[%c0_373, %c0_374] : memref<1x8xf32, #tpu.memory_space<vmem>>, vector<1x8xf32>
      %697 = vector.broadcast %696 : vector<1x8xf32> to vector<2x8xf32>
      %698 = arith.addf %695, %697 : vector<2x8xf32>
      %c0_375 = arith.constant 0 : index
      %c0_376 = arith.constant 0 : index
      %699 = vector.load %arg9[%c0_375, %c0_376] : memref<2x8xf32, #tpu.memory_space<vmem>>, vector<2x8xf32>
      tpu.vector_store %arg9[%c0_375, %c0_376], %698 {strides = array<i32>} : memref<2x8xf32, #tpu.memory_space<vmem>>, vector<2x8xf32>,
    } else {
    }
    return
  }
  func.func @transform_0(%arg0: i32, %arg1: i32) -> (i32, i32, i32) {
    %c0_i32 = arith.constant 0 : i32
    %c0_i32_0 = arith.constant 0 : i32
    return %arg1, %arg0, %c0_i32 : i32, i32, i32
  }
  func.func @transform_1(%arg0: i32, %arg1: i32) -> (i32, i32) {
    %c0_i32 = arith.constant 0 : i32
    %c0_i32_0 = arith.constant 0 : i32
    %c0_i32_1 = arith.constant 0 : i32
    return %c0_i32, %c0_i32_0 : i32, i32
  }
  func.func @transform_2(%arg0: i32, %arg1: i32) -> (i32, i32, i32) {
    %c0_i32 = arith.constant 0 : i32
    %c0_i32_0 = arith.constant 0 : i32
    %c0_i32_1 = arith.constant 0 : i32
    %c0_i32_2 = arith.constant 0 : i32
    return %c0_i32, %c0_i32_0, %c0_i32_1 : i32, i32, i32
  }
  func.func @transform_3(%arg0: i32, %arg1: i32) -> (i32, i32, i32) {
    %c0_i32 = arith.constant 0 : i32
    %c0_i32_0 = arith.constant 0 : i32
    %c0_i32_1 = arith.constant 0 : i32
    %c0_i32_2 = arith.constant 0 : i32
    return %c0_i32, %c0_i32_0, %c0_i32_1 : i32, i32, i32
  }
  func.func @transform_4(%arg0: i32, %arg1: i32) -> (i32, i32, i32) {
    %c0_i32 = arith.constant 0 : i32
    %c0_i32_0 = arith.constant 0 : i32
    %c0_i32_1 = arith.constant 0 : i32
    %c0_i32_2 = arith.constant 0 : i32
    return %c0_i32, %c0_i32_0, %c0_i32_1 : i32, i32, i32
  }
  func.func @transform_5(%arg0: i32, %arg1: i32) -> (i32, i32) {
    %c0_i32 = arith.constant 0 : i32
    %c0_i32_0 = arith.constant 0 : i32
    %c0_i32_1 = arith.constant 0 : i32
    return %c0_i32, %c0_i32_0 : i32, i32
  }
  func.func @transform_6(%arg0: i32, %arg1: i32) -> (i32, i32) {
    %c0_i32 = arith.constant 0 : i32
    %c0_i32_0 = arith.constant 0 : i32
    %c0_i32_1 = arith.constant 0 : i32
    return %c0_i32, %c0_i32_0 : i32, i32
  }
  func.func @transform_7(%arg0: i32, %arg1: i32) -> (i32, i32) {
    %c0_i32 = arith.constant 0 : i32
    %c0_i32_0 = arith.constant 0 : i32
    return %arg0, %c0_i32 : i32, i32
  }
}

</mosaic_0001>

<llo_original>
// kernel: tpu_custom_call.1
$region0: #{tpu_custom_call.1}
  #allocation0 [shape = 'u32[]', space=smem, size = 0x4, offset = 0x4, fixed_abs, tag = 'smem constant byte address 0x4 - core index']
  #allocation1 [shape = 'u32[144,128]{1,0:T(1,128)}', space=vmem, size = 0x12000, scoped, tag = 'internal scratch']
  #allocation2 [shape = 'f32[2,2,32]{2,1,0:T(2,128)}', space=vmem, size = 0x800, scoped, tag = 'scratch operand']
  #allocation3 [shape = 'f32[2,2,32]{2,1,0:T(2,128)}', space=vmem, size = 0x800, scoped, tag = 'scratch operand']
  %s0 = inlined_call_operand.hbm [shape: f32[8,2,128], index: 0, kind: input, shape index: {}]
  %s1 = inlined_call_operand.vmem [shape: f32[32,128], index: 1, kind: input, shape index: {}]
  %s2 = inlined_call_operand.hbm [shape: f32[1,32,128], index: 2, kind: input, shape index: {}]
  %s3 = inlined_call_operand.hbm [shape: f32[1,32,128], index: 3, kind: input, shape index: {}]
  %s4 = inlined_call_operand.vmem [shape: f32[1,1,128], index: 4, kind: input, shape index: {}]
  %s5 = inlined_call_operand.vmem [shape: f32[32,8], index: 5, kind: input, shape index: {}]
  %s6 = inlined_call_operand.vmem [shape: f32[1,8], index: 6, kind: input, shape index: {}]
  %s7 = inlined_call_operand.hbm [shape: f32[2,8], index: 7, kind: output, shape index: {}]
  %s8 = sld [smem:[#allocation0]]
  $region58: #{tpu_custom_call.1} parent=0
    _
  %s10 = ssub.s32 1, %s8
  %s11 = scalar_select 0, %s10, %s8
  $region1: #{tpu_custom_call.1} parent=0
    #allocation4 [shape = 'u8[8192]{0}', space=vmem, size = 0x2000, scoped, tag = 'input window, operand 0, single buffered']
    #allocation5 [shape = 's32[1]{0}', space=sflag, size = 0x4, scoped, tag = 'scoped memory for tpu_custom_call.1']
    #allocation6 [shape = 's32[1]{0}', space=sflag, size = 0x4, scoped, tag = 'scoped memory for tpu_custom_call.1']
    #allocation7 [shape = 'u8[16384]{0}', space=vmem, size = 0x4000, scoped, tag = 'input window, operand 2, single buffered']
    #allocation8 [shape = 's32[1]{0}', space=sflag, size = 0x4, scoped, tag = 'scoped memory for tpu_custom_call.1']
    #allocation9 [shape = 'u8[16384]{0}', space=vmem, size = 0x4000, scoped, tag = 'input window, operand 3, single buffered']
    #allocation10 [shape = 'u8[1024]{0}', space=vmem, size = 0x400, scoped, tag = 'output window, operand 0, single buffered']
    %12 = vsyncpa [#allocation5], 0
    %13 = vsyncpa [#allocation8], 0
    %14 = vsyncpa [#allocation6], 0
    // Predicated region
    $region2: #{tpu_custom_call.1} parent=1 // pred_check
      _
    $region3: #{tpu_custom_call.1} parent=1 // pred_check_branch
      %16 = sbr.rel (0) target = $region5
    $region4: #{tpu_custom_call.1} parent=1 // pred_region
      %s18 = ssub.s32 256, 256
      %19 = vsyncadd [#allocation5], %s18
      %s20 = sshll.u32 [#allocation4], 4
      %s21 = int_to_ptr.vmem [resolvable:$true] %s20
      %26 = dma.hbm_to_vmem [thread:$0]  %s0, 256, %s21, [#allocation5], 32, 32, 2
    $region5: #{tpu_custom_call.1} parent=1 // pred_fallthru
      _
    // Predicated region
    $region6: #{tpu_custom_call.1} parent=1 // pred_check
      _
    $region7: #{tpu_custom_call.1} parent=1 // pred_check_branch
      %28 = sbr.rel (0) target = $region9
    $region8: #{tpu_custom_call.1} parent=1 // pred_region
      _
    $region9: #{tpu_custom_call.1} parent=1 // pred_fallthru
      _
    // Predicated region
    $region10: #{tpu_custom_call.1} parent=1 // pred_check
      _
    $region11: #{tpu_custom_call.1} parent=1 // pred_check_branch
      %30 = sbr.rel (0) target = $region13
    $region12: #{tpu_custom_call.1} parent=1 // pred_region
      %s32 = ssub.s32 512, 512
      %33 = vsyncadd [#allocation8], %s32
      %s34 = sshll.u32 [#allocation7], 4
      %s35 = int_to_ptr.vmem [resolvable:$true] %s34
      %40 = dma.hbm_to_vmem [thread:$0]  %s2, 512, %s35, [#allocation8], 128, 128, 8
    $region13: #{tpu_custom_call.1} parent=1 // pred_fallthru
      _
    // Predicated region
    $region14: #{tpu_custom_call.1} parent=1 // pred_check
      _
    $region15: #{tpu_custom_call.1} parent=1 // pred_check_branch
      %42 = sbr.rel (0) target = $region17
    $region16: #{tpu_custom_call.1} parent=1 // pred_region
      %s44 = ssub.s32 512, 512
      %45 = vsyncadd [#allocation8], %s44
      %s46 = sshll.u32 [#allocation9], 4
      %s47 = int_to_ptr.vmem [resolvable:$true] %s46
      %52 = dma.hbm_to_vmem [thread:$0]  %s3, 512, %s47, [#allocation8], 128, 128, 8
    $region17: #{tpu_custom_call.1} parent=1 // pred_fallthru
      _
    // Predicated region
    $region18: #{tpu_custom_call.1} parent=1 // pred_check
      _
    $region19: #{tpu_custom_call.1} parent=1 // pred_check_branch
      %54 = sbr.rel (0) target = $region21
    $region20: #{tpu_custom_call.1} parent=1 // pred_region
      _
    $region21: #{tpu_custom_call.1} parent=1 // pred_fallthru
      _
    // Predicated region
    $region22: #{tpu_custom_call.1} parent=1 // pred_check
      _
    $region23: #{tpu_custom_call.1} parent=1 // pred_check_branch
      %56 = sbr.rel (0) target = $region25
    $region24: #{tpu_custom_call.1} parent=1 // pred_region
      _
    $region25: #{tpu_custom_call.1} parent=1 // pred_fallthru
      _
    // Predicated region
    $region26: #{tpu_custom_call.1} parent=1 // pred_check
      _
    $region27: #{tpu_custom_call.1} parent=1 // pred_check_branch
      %58 = sbr.rel (0) target = $region29
    $region28: #{tpu_custom_call.1} parent=1 // pred_region
      _
    $region29: #{tpu_custom_call.1} parent=1 // pred_fallthru
      _
    // Predicated region
    $region30: #{tpu_custom_call.1} parent=1 // pred_check
      _
    $region31: #{tpu_custom_call.1} parent=1 // pred_check_branch
      %60 = sbr.rel (0) target = $region33
    $region32: #{tpu_custom_call.1} parent=1 // pred_region
      %61 = dma.done [#allocation5], 256
    $region33: #{tpu_custom_call.1} parent=1 // pred_fallthru
      _
    // Predicated region
    $region34: #{tpu_custom_call.1} parent=1 // pred_check
      _
    $region35: #{tpu_custom_call.1} parent=1 // pred_check_branch
      %63 = sbr.rel (0) target = $region37
    $region36: #{tpu_custom_call.1} parent=1 // pred_region
      %64 = dma.done [#allocation8], 512
    $region37: #{tpu_custom_call.1} parent=1 // pred_fallthru
      _
    // Predicated region
    $region38: #{tpu_custom_call.1} parent=1 // pred_check
      _
    $region39: #{tpu_custom_call.1} parent=1 // pred_check_branch
      %66 = sbr.rel (0) target = $region41
    $region40: #{tpu_custom_call.1} parent=1 // pred_region
      %67 = dma.done [#allocation8], 512
    $region41: #{tpu_custom_call.1} parent=1 // pred_fallthru
      _
    %p68 = scmp.eq.s32.totalorder 0, 0
    // Predicated region
    $region42: #{tpu_custom_call.1} parent=1 // pred_check
      %p69 = pneg %p68
    $region43: #{tpu_custom_call.1} parent=1 // pred_check_branch
      %71 = sbr.rel (%p69) target = $region45
    $region44: #{tpu_custom_call.1} parent=1 // pred_region
      %vm72 = vcmask 254976
      %73 = vst.msk [vmem:[#allocation2] sm:$0x3] %vm72, 0.0
      %74 = vst.msk [vmem:[#allocation2 + $0x2] sm:$0x3] %vm72, 0.0
      %75 = vst.msk [vmem:[#allocation3] sm:$0x3] %vm72, 0.0
      %76 = vst.msk [vmem:[#allocation3 + $0x2] sm:$0x3] %vm72, 0.0
    $region45: #{tpu_custom_call.1} parent=1 // pred_fallthru
      _
    %v77 = vld [vmem:[#allocation2] sm:$0x3]
    %v78 = vld [vmem:[#allocation4] sm:$0x3]
    %v79 = vld [vmem:[%s1] sm:$0xff]
    %v80 = vld [vmem:[%s1 + $0x8] sm:$0xff]
    %v81 = vld [vmem:[%s1 + $0x10] sm:$0xff]
    %v82 = vld [vmem:[%s1 + $0x18] sm:$0xff]
    %vm83 = vcmask 261120
    %v85 = vsel %vm83, %v77, 0
    %87 = vmatprep.subr.mxu0 0.0
    %88 = vmatpush1.msra.mxu0 0.0
    %89 = vmatprep.subr.mxu0 0.0
    %90 = vmatpush1.msra.mxu0 0.0
    %91 = vmatprep.subr.mxu0 0.0
    %92 = vmatpush1.msra.mxu0 0.0
    %93 = vmatprep.subr.mxu0 0.0
    %94 = vmatpush1.msra.mxu0 0.0
    %95 = vmatprep.subr.mxu0 0.0
    %96 = vmatpush1.msra.mxu0 0.0
    %97 = vmatprep.subr.mxu0 0.0
    %98 = vmatpush1.msra.mxu0 0.0
    %99 = vmatprep.subr.mxu0 0.0
    %100 = vmatpush1.msra.mxu0 0.0
    %101 = vmatprep.subr.mxu0 0.0
    %102 = vmatpush1.msra.mxu0 0.0
    %103 = vmatprep.subr.mxu0 0.0
    %104 = vmatpush1.msra.mxu0 0.0
    %105 = vmatprep.subr.mxu0 0.0
    %106 = vmatpush1.msra.mxu0 0.0
    %107 = vmatprep.subr.mxu0 0.0
    %108 = vmatpush1.msra.mxu0 0.0
    %109 = vmatprep.subr.mxu0 0.0
    %110 = vmatpush1.msra.mxu0 0.0
    %111 = vmatprep.subr.mxu0 0.0
    %112 = vmatpush1.msra.mxu0 %v82
    %113 = vmatprep.subr.mxu0 0.0
    %114 = vmatpush1.msra.mxu0 %v81
    %115 = vmatprep.subr.mxu0 0.0
    %116 = vmatpush1.msra.mxu0 %v80
    %117 = vmatprep.subr.mxu0 0.0
    %118 = vmatpush1.msra.mxu0 %v79
    %119 = vmatprep.subr.mxu0 0.0
    %120 = vmatpush2.msra.mxu0 0.0
    %121 = vmatprep.subr.mxu0 0.0
    %122 = vmatpush2.msra.mxu0 0.0
    %123 = vmatprep.subr.mxu0 0.0
    %124 = vmatpush2.msra.mxu0 0.0
    %125 = vmatprep.subr.mxu0 0.0
    %126 = vmatpush2.msra.mxu0 0.0
    %127 = vmatprep.subr.mxu0 0.0
    %128 = vmatpush2.msra.mxu0 0.0
    %129 = vmatprep.subr.mxu0 0.0
    %130 = vmatpush2.msra.mxu0 0.0
    %131 = vmatprep.subr.mxu0 0.0
    %132 = vmatpush2.msra.mxu0 0.0
    %133 = vmatprep.subr.mxu0 0.0
    %134 = vmatpush2.msra.mxu0 0.0
    %135 = vmatprep.subr.mxu0 0.0
    %136 = vmatpush2.msra.mxu0 0.0
    %137 = vmatprep.subr.mxu0 0.0
    %138 = vmatpush2.msra.mxu0 0.0
    %139 = vmatprep.subr.mxu0 0.0
    %140 = vmatpush2.msra.mxu0 0.0
    %141 = vmatprep.subr.mxu0 0.0
    %142 = vmatpush2.msra.mxu0 0.0
    %143 = vmatprep.subr.mxu0 0.0
    %144 = vmatpush2.msra.mxu0 0.0
    %145 = vmatprep.subr.mxu0 0.0
    %146 = vmatpush2.msra.mxu0 0.0
    %147 = vmatprep.subr.mxu0 0.0
    %148 = vmatpush2.msra.mxu0 0.0
    %149 = vmatprep.subr.mxu0 0.0
    %150 = vmatpush2.msra.mxu0 0.0
    %151 = vmatprep.mubr.f32.mxu0 0.0
    %152 = vmatmul.mubr.f32.gmra.mxu0 %v85
    %v153 = vpop.f32.mrf.mxu0
    %v154 = vadd.f32 0.0, %v153
    %v155 = vpop.f32.mrf.mxu0
    %156 = vdwg.mxu0
    %v157 = vadd.f32 %v78, %v154
    %v158 = vld [vmem:[#allocation3] sm:$0x3]
    %v159 = vxor.u32 %v157, 2147483648
    %v160 = vmul.f32 %v159, 1.442695
    %v161 = vpow.pop %v160
    %v162 = vadd.f32 %v161, 1.0
    %v163 = vrcp.pop %v162
    %v164 = vmul.f32 1.0, %v163
    %v165 = vtanh.pop %v157
    %167 = vrot.lane.b32.xlu0 %v158, 32
    %v168 = vpop.permute.xlu0 %167
    %v170 = vmul.f32 %v164, %v168
    %172 = vrot.lane.b32.xlu0 %v165, 64
    %v173 = vpop.permute.xlu0 %172
    %v175 = vmul.f32 %v164, %v173
    %177 = vrot.lane.b32.xlu0 %v175, 32
    %v178 = vpop.permute.xlu0 %177
    %v180 = vadd.f32 %v170, %v178
    %v181 = vtanh.pop %v180
    %183 = vrot.lane.b32.xlu0 %v181, 64
    %v184 = vpop.permute.xlu0 %183
    %v186 = vmul.f32 %v164, %v184
    %188 = vrot.lane.b32.xlu0 %v186, 32
    %v189 = vpop.permute.xlu0 %188
    %vm191 = vcmask 254976
    %192 = vst.msk [vmem:[#allocation2] sm:$0x3] %vm191, %v189
    %194 = vrot.lane.b32.xlu0 %v180, 96
    %v195 = vpop.permute.xlu0 %194
    %197 = vst.msk [vmem:[#allocation3] sm:$0x3] %vm191, %v195
    %s198 = scalar_lea.vmem [#allocation2], 2
    %v199 = vld [vmem:[%s198] sm:$0x3]
    %v200 = vld [vmem:[#allocation7] sm:$0xff]
    %v201 = vld [vmem:[#allocation7 + $0x8] sm:$0xff]
    %v202 = vld [vmem:[#allocation7 + $0x10] sm:$0xff]
    %v203 = vld [vmem:[#allocation7 + $0x18] sm:$0xff]
    %v204 = vld [vmem:[#allocation9] sm:$0xff]
    %v205 = vld [vmem:[#allocation9 + $0x8] sm:$0xff]
    %v206 = vld [vmem:[#allocation9 + $0x10] sm:$0xff]
    %v207 = vld [vmem:[#allocation9 + $0x18] sm:$0xff]
    %v209 = vsel %vm83, %v199, 0
    %211 = vmatprep.subr.mxu0 0.0
    %212 = vmatpush1.msra.mxu0 0.0
    %213 = vmatprep.subr.mxu0 0.0
    %214 = vmatpush1.msra.mxu0 0.0
    %215 = vmatprep.subr.mxu0 0.0
    %216 = vmatpush1.msra.mxu0 0.0
    %217 = vmatprep.subr.mxu0 0.0
    %218 = vmatpush1.msra.mxu0 0.0
    %219 = vmatprep.subr.mxu0 0.0
    %220 = vmatpush1.msra.mxu0 0.0
    %221 = vmatprep.subr.mxu0 0.0
    %222 = vmatpush1.msra.mxu0 0.0
    %223 = vmatprep.subr.mxu0 0.0
    %224 = vmatpush1.msra.mxu0 0.0
    %225 = vmatprep.subr.mxu0 0.0
    %226 = vmatpush1.msra.mxu0 0.0
    %227 = vmatprep.subr.mxu0 0.0
    %228 = vmatpush1.msra.mxu0 0.0
    %229 = vmatprep.subr.mxu0 0.0
    %230 = vmatpush1.msra.mxu0 0.0
    %231 = vmatprep.subr.mxu0 0.0
    %232 = vmatpush1.msra.mxu0 0.0
    %233 = vmatprep.subr.mxu0 0.0
    %234 = vmatpush1.msra.mxu0 0.0
    %235 = vmatprep.subr.mxu0 0.0
    %236 = vmatpush1.msra.mxu0 %v207
    %237 = vmatprep.subr.mxu0 0.0
    %238 = vmatpush1.msra.mxu0 %v206
    %239 = vmatprep.subr.mxu0 0.0
    %240 = vmatpush1.msra.mxu0 %v205
    %241 = vmatprep.subr.mxu0 0.0
    %242 = vmatpush1.msra.mxu0 %v204
    %243 = vmatprep.subr.mxu0 0.0
    %244 = vmatpush2.msra.mxu0 0.0
    %245 = vmatprep.subr.mxu0 0.0
    %246 = vmatpush2.msra.mxu0 0.0
    %247 = vmatprep.subr.mxu0 0.0
    %248 = vmatpush2.msra.mxu0 0.0
    %249 = vmatprep.subr.mxu0 0.0
    %250 = vmatpush2.msra.mxu0 0.0
    %251 = vmatprep.subr.mxu0 0.0
    %252 = vmatpush2.msra.mxu0 0.0
    %253 = vmatprep.subr.mxu0 0.0
    %254 = vmatpush2.msra.mxu0 0.0
    %255 = vmatprep.subr.mxu0 0.0
    %256 = vmatpush2.msra.mxu0 0.0
    %257 = vmatprep.subr.mxu0 0.0
    %258 = vmatpush2.msra.mxu0 0.0
    %259 = vmatprep.subr.mxu0 0.0
    %260 = vmatpush2.msra.mxu0 0.0
    %261 = vmatprep.subr.mxu0 0.0
    %262 = vmatpush2.msra.mxu0 0.0
    %263 = vmatprep.subr.mxu0 0.0
    %264 = vmatpush2.msra.mxu0 0.0
    %265 = vmatprep.subr.mxu0 0.0
    %266 = vmatpush2.msra.mxu0 0.0
    %267 = vmatprep.subr.mxu0 0.0
    %268 = vmatpush2.msra.mxu0 0.0
    %269 = vmatprep.subr.mxu0 0.0
    %270 = vmatpush2.msra.mxu0 0.0
    %271 = vmatprep.subr.mxu0 0.0
    %272 = vmatpush2.msra.mxu0 0.0
    %273 = vmatprep.subr.mxu0 0.0
    %274 = vmatpush2.msra.mxu0 0.0
    %275 = vmatprep.mubr.f32.mxu0 0.0
    %276 = vmatmul.mubr.f32.gmra.mxu0 %v209
    %v277 = vpop.f32.mrf.mxu0
    %v278 = vadd.f32 0.0, %v277
    %v279 = vpop.f32.mrf.mxu0
    %280 = vdwg.mxu0
    %v281 = vsel %vm83, %v189, 0
    %283 = vmatprep.subr.mxu0 0.0
    %284 = vmatpush1.msra.mxu0 0.0
    %285 = vmatprep.subr.mxu0 0.0
    %286 = vmatpush1.msra.mxu0 0.0
    %287 = vmatprep.subr.mxu0 0.0
    %288 = vmatpush1.msra.mxu0 0.0
    %289 = vmatprep.subr.mxu0 0.0
    %290 = vmatpush1.msra.mxu0 0.0
    %291 = vmatprep.subr.mxu0 0.0
    %292 = vmatpush1.msra.mxu0 0.0
    %293 = vmatprep.subr.mxu0 0.0
    %294 = vmatpush1.msra.mxu0 0.0
    %295 = vmatprep.subr.mxu0 0.0
    %296 = vmatpush1.msra.mxu0 0.0
    %297 = vmatprep.subr.mxu0 0.0
    %298 = vmatpush1.msra.mxu0 0.0
    %299 = vmatprep.subr.mxu0 0.0
    %300 = vmatpush1.msra.mxu0 0.0
    %301 = vmatprep.subr.mxu0 0.0
    %302 = vmatpush1.msra.mxu0 0.0
    %303 = vmatprep.subr.mxu0 0.0
    %304 = vmatpush1.msra.mxu0 0.0
    %305 = vmatprep.subr.mxu0 0.0
    %306 = vmatpush1.msra.mxu0 0.0
    %307 = vmatprep.subr.mxu0 0.0
    %308 = vmatpush1.msra.mxu0 %v203
    %309 = vmatprep.subr.mxu0 0.0
    %310 = vmatpush1.msra.mxu0 %v202
    %311 = vmatprep.subr.mxu0 0.0
    %312 = vmatpush1.msra.mxu0 %v201
    %313 = vmatprep.subr.mxu0 0.0
    %314 = vmatpush1.msra.mxu0 %v200
    %315 = vmatprep.subr.mxu0 0.0
    %316 = vmatpush2.msra.mxu0 0.0
    %317 = vmatprep.subr.mxu0 0.0
    %318 = vmatpush2.msra.mxu0 0.0
    %319 = vmatprep.subr.mxu0 0.0
    %320 = vmatpush2.msra.mxu0 0.0
    %321 = vmatprep.subr.mxu0 0.0
    %322 = vmatpush2.msra.mxu0 0.0
    %323 = vmatprep.subr.mxu0 0.0
    %324 = vmatpush2.msra.mxu0 0.0
    %325 = vmatprep.subr.mxu0 0.0
    %326 = vmatpush2.msra.mxu0 0.0
    %327 = vmatprep.subr.mxu0 0.0
    %328 = vmatpush2.msra.mxu0 0.0
    %329 = vmatprep.subr.mxu0 0.0
    %330 = vmatpush2.msra.mxu0 0.0
    %331 = vmatprep.subr.mxu0 0.0
    %332 = vmatpush2.msra.mxu0 0.0
    %333 = vmatprep.subr.mxu0 0.0
    %334 = vmatpush2.msra.mxu0 0.0
    %335 = vmatprep.subr.mxu0 0.0
    %336 = vmatpush2.msra.mxu0 0.0
    %337 = vmatprep.subr.mxu0 0.0
    %338 = vmatpush2.msra.mxu0 0.0
    %339 = vmatprep.subr.mxu0 0.0
    %340 = vmatpush2.msra.mxu0 0.0
    %341 = vmatprep.subr.mxu0 0.0
    %342 = vmatpush2.msra.mxu0 0.0
    %343 = vmatprep.subr.mxu0 0.0
    %344 = vmatpush2.msra.mxu0 0.0
    %345 = vmatprep.subr.mxu0 0.0
    %346 = vmatpush2.msra.mxu0 0.0
    %347 = vmatprep.mubr.f32.mxu0 0.0
    %348 = vmatmul.mubr.f32.gmra.mxu0 %v281
    %v349 = vpop.f32.mrf.mxu0
    %v350 = vadd.f32 %v278, %v349
    %v351 = vpop.f32.mrf.mxu0
    %352 = vdwg.mxu0
    %v353 = vld [vmem:[%s4] sm:$0x1]
    %v355 = vlaneseq
    %v356 = vshrl.u32 %v355, 7
    %v357 = vsub.s32 0, %v356
    %v358 = vrot.slane %v353, %v357
    %v360 = vadd.f32 %v350, %v358
    %s361 = scalar_lea.vmem [#allocation3], 2
    %v362 = vld [vmem:[%s361] sm:$0x3]
    %v363 = vxor.u32 %v360, 2147483648
    %v364 = vmul.f32 %v363, 1.442695
    %v365 = vpow.pop %v364
    %v366 = vadd.f32 %v365, 1.0
    %v367 = vrcp.pop %v366
    %v368 = vmul.f32 1.0, %v367
    %v369 = vtanh.pop %v360
    %371 = vrot.lane.b32.xlu0 %v362, 32
    %v372 = vpop.permute.xlu0 %371
    %v374 = vmul.f32 %v368, %v372
    %376 = vrot.lane.b32.xlu0 %v369, 64
    %v377 = vpop.permute.xlu0 %376
    %v379 = vmul.f32 %v368, %v377
    %381 = vrot.lane.b32.xlu0 %v379, 32
    %v382 = vpop.permute.xlu0 %381
    %v384 = vadd.f32 %v374, %v382
    %v385 = vtanh.pop %v384
    %387 = vrot.lane.b32.xlu0 %v385, 64
    %v388 = vpop.permute.xlu0 %387
    %v390 = vmul.f32 %v368, %v388
    %392 = vrot.lane.b32.xlu0 %v390, 32
    %v393 = vpop.permute.xlu0 %392
    %395 = vst.msk [vmem:[%s198] sm:$0x3] %vm191, %v393
    %397 = vrot.lane.b32.xlu0 %v384, 96
    %v398 = vpop.permute.xlu0 %397
    %400 = vst.msk [vmem:[%s361] sm:$0x3] %vm191, %v398
    %v401 = vld [vmem:[#allocation2] sm:$0x3]
    %s402 = scalar_lea.vmem [#allocation4], 2
    %v403 = vld [vmem:[%s402] sm:$0x3]
    %v404 = vld [vmem:[%s1] sm:$0xff]
    %v405 = vld [vmem:[%s1 + $0x8] sm:$0xff]
    %v406 = vld [vmem:[%s1 + $0x10] sm:$0xff]
    %v407 = vld [vmem:[%s1 + $0x18] sm:$0xff]
    %v409 = vsel %vm83, %v401, 0
    %411 = vmatprep.subr.mxu0 0.0
    %412 = vmatpush1.msra.mxu0 0.0
    %413 = vmatprep.subr.mxu0 0.0
    %414 = vmatpush1.msra.mxu0 0.0
    %415 = vmatprep.subr.mxu0 0.0
    %416 = vmatpush1.msra.mxu0 0.0
    %417 = vmatprep.subr.mxu0 0.0
    %418 = vmatpush1.msra.mxu0 0.0
    %419 = vmatprep.subr.mxu0 0.0
    %420 = vmatpush1.msra.mxu0 0.0
    %421 = vmatprep.subr.mxu0 0.0
    %422 = vmatpush1.msra.mxu0 0.0
    %423 = vmatprep.subr.mxu0 0.0
    %424 = vmatpush1.msra.mxu0 0.0
    %425 = vmatprep.subr.mxu0 0.0
    %426 = vmatpush1.msra.mxu0 0.0
    %427 = vmatprep.subr.mxu0 0.0
    %428 = vmatpush1.msra.mxu0 0.0
    %429 = vmatprep.subr.mxu0 0.0
    %430 = vmatpush1.msra.mxu0 0.0
    %431 = vmatprep.subr.mxu0 0.0
    %432 = vmatpush1.msra.mxu0 0.0
    %433 = vmatprep.subr.mxu0 0.0
    %434 = vmatpush1.msra.mxu0 0.0
    %435 = vmatprep.subr.mxu0 0.0
    %436 = vmatpush1.msra.mxu0 %v407
    %437 = vmatprep.subr.mxu0 0.0
    %438 = vmatpush1.msra.mxu0 %v406
    %439 = vmatprep.subr.mxu0 0.0
    %440 = vmatpush1.msra.mxu0 %v405
    %441 = vmatprep.subr.mxu0 0.0
    %442 = vmatpush1.msra.mxu0 %v404
    %443 = vmatprep.subr.mxu0 0.0
    %444 = vmatpush2.msra.mxu0 0.0
    %445 = vmatprep.subr.mxu0 0.0
    %446 = vmatpush2.msra.mxu0 0.0
    %447 = vmatprep.subr.mxu0 0.0
    %448 = vmatpush2.msra.mxu0 0.0
    %449 = vmatprep.subr.mxu0 0.0
    %450 = vmatpush2.msra.mxu0 0.0
    %451 = vmatprep.subr.mxu0 0.0
    %452 = vmatpush2.msra.mxu0 0.0
    %453 = vmatprep.subr.mxu0 0.0
    %454 = vmatpush2.msra.mxu0 0.0
    %455 = vmatprep.subr.mxu0 0.0
    %456 = vmatpush2.msra.mxu0 0.0
    %457 = vmatprep.subr.mxu0 0.0
    %458 = vmatpush2.msra.mxu0 0.0
    %459 = vmatprep.subr.mxu0 0.0
    %460 = vmatpush2.msra.mxu0 0.0
    %461 = vmatprep.subr.mxu0 0.0
    %462 = vmatpush2.msra.mxu0 0.0
    %463 = vmatprep.subr.mxu0 0.0
    %464 = vmatpush2.msra.mxu0 0.0
    %465 = vmatprep.subr.mxu0 0.0
    %466 = vmatpush2.msra.mxu0 0.0
    %467 = vmatprep.subr.mxu0 0.0
    %468 = vmatpush2.msra.mxu0 0.0
    %469 = vmatprep.subr.mxu0 0.0
    %470 = vmatpush2.msra.mxu0 0.0
    %471 = vmatprep.subr.mxu0 0.0
    %472 = vmatpush2.msra.mxu0 0.0
    %473 = vmatprep.subr.mxu0 0.0
    %474 = vmatpush2.msra.mxu0 0.0
    %475 = vmatprep.mubr.f32.mxu0 0.0
    %476 = vmatmul.mubr.f32.gmra.mxu0 %v409
    %v477 = vpop.f32.mrf.mxu0
    %v478 = vadd.f32 0.0, %v477
    %v479 = vpop.f32.mrf.mxu0
    %480 = vdwg.mxu0
    %v481 = vadd.f32 %v403, %v478
    %v482 = vld [vmem:[#allocation3] sm:$0x3]
    %v483 = vxor.u32 %v481, 2147483648
    %v484 = vmul.f32 %v483, 1.442695
    %v485 = vpow.pop %v484
    %v486 = vadd.f32 %v485, 1.0
    %v487 = vrcp.pop %v486
    %v488 = vmul.f32 1.0, %v487
    %v489 = vtanh.pop %v481
    %491 = vrot.lane.b32.xlu0 %v482, 32
    %v492 = vpop.permute.xlu0 %491
    %v494 = vmul.f32 %v488, %v492
    %496 = vrot.lane.b32.xlu0 %v489, 64
    %v497 = vpop.permute.xlu0 %496
    %v499 = vmul.f32 %v488, %v497
    %501 = vrot.lane.b32.xlu0 %v499, 32
    %v502 = vpop.permute.xlu0 %501
    %v504 = vadd.f32 %v494, %v502
    %v505 = vtanh.pop %v504
    %507 = vrot.lane.b32.xlu0 %v505, 64
    %v508 = vpop.permute.xlu0 %507
    %v510 = vmul.f32 %v488, %v508
    %512 = vrot.lane.b32.xlu0 %v510, 32
    %v513 = vpop.permute.xlu0 %512
    %515 = vst.msk [vmem:[#allocation2] sm:$0x3] %vm191, %v513
    %517 = vrot.lane.b32.xlu0 %v504, 96
    %v518 = vpop.permute.xlu0 %517
    %520 = vst.msk [vmem:[#allocation3] sm:$0x3] %vm191, %v518
    %v521 = vld [vmem:[%s198] sm:$0x3]
    %v522 = vld [vmem:[#allocation7] sm:$0xff]
    %v523 = vld [vmem:[#allocation7 + $0x8] sm:$0xff]
    %v524 = vld [vmem:[#allocation7 + $0x10] sm:$0xff]
    %v525 = vld [vmem:[#allocation7 + $0x18] sm:$0xff]
    %v526 = vld [vmem:[#allocation9] sm:$0xff]
    %v527 = vld [vmem:[#allocation9 + $0x8] sm:$0xff]
    %v528 = vld [vmem:[#allocation9 + $0x10] sm:$0xff]
    %v529 = vld [vmem:[#allocation9 + $0x18] sm:$0xff]
    %v531 = vsel %vm83, %v521, 0
    %533 = vmatprep.subr.mxu0 0.0
    %534 = vmatpush1.msra.mxu0 0.0
    %535 = vmatprep.subr.mxu0 0.0
    %536 = vmatpush1.msra.mxu0 0.0
    %537 = vmatprep.subr.mxu0 0.0
    %538 = vmatpush1.msra.mxu0 0.0
    %539 = vmatprep.subr.mxu0 0.0
    %540 = vmatpush1.msra.mxu0 0.0
    %541 = vmatprep.subr.mxu0 0.0
    %542 = vmatpush1.msra.mxu0 0.0
    %543 = vmatprep.subr.mxu0 0.0
    %544 = vmatpush1.msra.mxu0 0.0
    %545 = vmatprep.subr.mxu0 0.0
    %546 = vmatpush1.msra.mxu0 0.0
    %547 = vmatprep.subr.mxu0 0.0
    %548 = vmatpush1.msra.mxu0 0.0
    %549 = vmatprep.subr.mxu0 0.0
    %550 = vmatpush1.msra.mxu0 0.0
    %551 = vmatprep.subr.mxu0 0.0
    %552 = vmatpush1.msra.mxu0 0.0
    %553 = vmatprep.subr.mxu0 0.0
    %554 = vmatpush1.msra.mxu0 0.0
    %555 = vmatprep.subr.mxu0 0.0
    %556 = vmatpush1.msra.mxu0 0.0
    %557 = vmatprep.subr.mxu0 0.0
    %558 = vmatpush1.msra.mxu0 %v529
    %559 = vmatprep.subr.mxu0 0.0
    %560 = vmatpush1.msra.mxu0 %v528
    %561 = vmatprep.subr.mxu0 0.0
    %562 = vmatpush1.msra.mxu0 %v527
    %563 = vmatprep.subr.mxu0 0.0
    %564 = vmatpush1.msra.mxu0 %v526
    %565 = vmatprep.subr.mxu0 0.0
    %566 = vmatpush2.msra.mxu0 0.0
    %567 = vmatprep.subr.mxu0 0.0
    %568 = vmatpush2.msra.mxu0 0.0
    %569 = vmatprep.subr.mxu0 0.0
    %570 = vmatpush2.msra.mxu0 0.0
    %571 = vmatprep.subr.mxu0 0.0
    %572 = vmatpush2.msra.mxu0 0.0
    %573 = vmatprep.subr.mxu0 0.0
    %574 = vmatpush2.msra.mxu0 0.0
    %575 = vmatprep.subr.mxu0 0.0
    %576 = vmatpush2.msra.mxu0 0.0
    %577 = vmatprep.subr.mxu0 0.0
    %578 = vmatpush2.msra.mxu0 0.0
    %579 = vmatprep.subr.mxu0 0.0
    %580 = vmatpush2.msra.mxu0 0.0
    %581 = vmatprep.subr.mxu0 0.0
    %582 = vmatpush2.msra.mxu0 0.0
    %583 = vmatprep.subr.mxu0 0.0
    %584 = vmatpush2.msra.mxu0 0.0
    %585 = vmatprep.subr.mxu0 0.0
    %586 = vmatpush2.msra.mxu0 0.0
    %587 = vmatprep.subr.mxu0 0.0
    %588 = vmatpush2.msra.mxu0 0.0
    %589 = vmatprep.subr.mxu0 0.0
    %590 = vmatpush2.msra.mxu0 0.0
    %591 = vmatprep.subr.mxu0 0.0
    %592 = vmatpush2.msra.mxu0 0.0
    %593 = vmatprep.subr.mxu0 0.0
    %594 = vmatpush2.msra.mxu0 0.0
    %595 = vmatprep.subr.mxu0 0.0
    %596 = vmatpush2.msra.mxu0 0.0
    %597 = vmatprep.mubr.f32.mxu0 0.0
    %598 = vmatmul.mubr.f32.gmra.mxu0 %v531
    %v599 = vpop.f32.mrf.mxu0
    %v600 = vadd.f32 0.0, %v599
    %v601 = vpop.f32.mrf.mxu0
    %602 = vdwg.mxu0
    %v603 = vsel %vm83, %v513, 0
    %605 = vmatprep.subr.mxu0 0.0
    %606 = vmatpush1.msra.mxu0 0.0
    %607 = vmatprep.subr.mxu0 0.0
    %608 = vmatpush1.msra.mxu0 0.0
    %609 = vmatprep.subr.mxu0 0.0
    %610 = vmatpush1.msra.mxu0 0.0
    %611 = vmatprep.subr.mxu0 0.0
    %612 = vmatpush1.msra.mxu0 0.0
    %613 = vmatprep.subr.mxu0 0.0
    %614 = vmatpush1.msra.mxu0 0.0
    %615 = vmatprep.subr.mxu0 0.0
    %616 = vmatpush1.msra.mxu0 0.0
    %617 = vmatprep.subr.mxu0 0.0
    %618 = vmatpush1.msra.mxu0 0.0
    %619 = vmatprep.subr.mxu0 0.0
    %620 = vmatpush1.msra.mxu0 0.0
    %621 = vmatprep.subr.mxu0 0.0
    %622 = vmatpush1.msra.mxu0 0.0
    %623 = vmatprep.subr.mxu0 0.0
    %624 = vmatpush1.msra.mxu0 0.0
    %625 = vmatprep.subr.mxu0 0.0
    %626 = vmatpush1.msra.mxu0 0.0
    %627 = vmatprep.subr.mxu0 0.0
    %628 = vmatpush1.msra.mxu0 0.0
    %629 = vmatprep.subr.mxu0 0.0
    %630 = vmatpush1.msra.mxu0 %v525
    %631 = vmatprep.subr.mxu0 0.0
    %632 = vmatpush1.msra.mxu0 %v524
    %633 = vmatprep.subr.mxu0 0.0
    %634 = vmatpush1.msra.mxu0 %v523
    %635 = vmatprep.subr.mxu0 0.0
    %636 = vmatpush1.msra.mxu0 %v522
    %637 = vmatprep.subr.mxu0 0.0
    %638 = vmatpush2.msra.mxu0 0.0
    %639 = vmatprep.subr.mxu0 0.0
    %640 = vmatpush2.msra.mxu0 0.0
    %641 = vmatprep.subr.mxu0 0.0
    %642 = vmatpush2.msra.mxu0 0.0
    %643 = vmatprep.subr.mxu0 0.0
    %644 = vmatpush2.msra.mxu0 0.0
    %645 = vmatprep.subr.mxu0 0.0
    %646 = vmatpush2.msra.mxu0 0.0
    %647 = vmatprep.subr.mxu0 0.0
    %648 = vmatpush2.msra.mxu0 0.0
    %649 = vmatprep.subr.mxu0 0.0
    %650 = vmatpush2.msra.mxu0 0.0
    %651 = vmatprep.subr.mxu0 0.0
    %652 = vmatpush2.msra.mxu0 0.0
    %653 = vmatprep.subr.mxu0 0.0
    %654 = vmatpush2.msra.mxu0 0.0
    %655 = vmatprep.subr.mxu0 0.0
    %656 = vmatpush2.msra.mxu0 0.0
    %657 = vmatprep.subr.mxu0 0.0
    %658 = vmatpush2.msra.mxu0 0.0
    %659 = vmatprep.subr.mxu0 0.0
    %660 = vmatpush2.msra.mxu0 0.0
    %661 = vmatprep.subr.mxu0 0.0
    %662 = vmatpush2.msra.mxu0 0.0
    %663 = vmatprep.subr.mxu0 0.0
    %664 = vmatpush2.msra.mxu0 0.0
    %665 = vmatprep.subr.mxu0 0.0
    %666 = vmatpush2.msra.mxu0 0.0
    %667 = vmatprep.subr.mxu0 0.0
    %668 = vmatpush2.msra.mxu0 0.0
    %669 = vmatprep.mubr.f32.mxu0 0.0
    %670 = vmatmul.mubr.f32.gmra.mxu0 %v603
    %v671 = vpop.f32.mrf.mxu0
    %v672 = vadd.f32 %v600, %v671
    %v673 = vpop.f32.mrf.mxu0
    %674 = vdwg.mxu0
    %v675 = vld [vmem:[%s4] sm:$0x1]
    %v677 = vlaneseq
    %v678 = vshrl.u32 %v677, 7
    %v679 = vsub.s32 0, %v678
    %v680 = vrot.slane %v675, %v679
    %v682 = vadd.f32 %v672, %v680
    %v683 = vld [vmem:[%s361] sm:$0x3]
    %v684 = vxor.u32 %v682, 2147483648
    %v685 = vmul.f32 %v684, 1.442695
    %v686 = vpow.pop %v685
    %v687 = vadd.f32 %v686, 1.0
    %v688 = vrcp.pop %v687
    %v689 = vmul.f32 1.0, %v688
    %v690 = vtanh.pop %v682
    %692 = vrot.lane.b32.xlu0 %v683, 32
    %v693 = vpop.permute.xlu0 %692
    %v695 = vmul.f32 %v689, %v693
    %697 = vrot.lane.b32.xlu0 %v690, 64
    %v698 = vpop.permute.xlu0 %697
    %v700 = vmul.f32 %v689, %v698
    %702 = vrot.lane.b32.xlu0 %v700, 32
    %v703 = vpop.permute.xlu0 %702
    %v705 = vadd.f32 %v695, %v703
    %v706 = vtanh.pop %v705
    %708 = vrot.lane.b32.xlu0 %v706, 64
    %v709 = vpop.permute.xlu0 %708
    %v711 = vmul.f32 %v689, %v709
    %713 = vrot.lane.b32.xlu0 %v711, 32
    %v714 = vpop.permute.xlu0 %713
    %716 = vst.msk [vmem:[%s198] sm:$0x3] %vm191, %v714
    %718 = vrot.lane.b32.xlu0 %v705, 96
    %v719 = vpop.permute.xlu0 %718
    %721 = vst.msk [vmem:[%s361] sm:$0x3] %vm191, %v719
    %v722 = vld [vmem:[#allocation2] sm:$0x3]
    %s723 = scalar_lea.vmem [#allocation4], 4
    %v724 = vld [vmem:[%s723] sm:$0x3]
    %v725 = vld [vmem:[%s1] sm:$0xff]
    %v726 = vld [vmem:[%s1 + $0x8] sm:$0xff]
    %v727 = vld [vmem:[%s1 + $0x10] sm:$0xff]
    %v728 = vld [vmem:[%s1 + $0x18] sm:$0xff]
    %v730 = vsel %vm83, %v722, 0
    %732 = vmatprep.subr.mxu0 0.0
    %733 = vmatpush1.msra.mxu0 0.0
    %734 = vmatprep.subr.mxu0 0.0
    %735 = vmatpush1.msra.mxu0 0.0
    %736 = vmatprep.subr.mxu0 0.0
    %737 = vmatpush1.msra.mxu0 0.0
    %738 = vmatprep.subr.mxu0 0.0
    %739 = vmatpush1.msra.mxu0 0.0
    %740 = vmatprep.subr.mxu0 0.0
    %741 = vmatpush1.msra.mxu0 0.0
    %742 = vmatprep.subr.mxu0 0.0
    %743 = vmatpush1.msra.mxu0 0.0
    %744 = vmatprep.subr.mxu0 0.0
    %745 = vmatpush1.msra.mxu0 0.0
    %746 = vmatprep.subr.mxu0 0.0
    %747 = vmatpush1.msra.mxu0 0.0
    %748 = vmatprep.subr.mxu0 0.0
    %749 = vmatpush1.msra.mxu0 0.0
    %750 = vmatprep.subr.mxu0 0.0
    %751 = vmatpush1.msra.mxu0 0.0
    %752 = vmatprep.subr.mxu0 0.0
    %753 = vmatpush1.msra.mxu0 0.0
    %754 = vmatprep.subr.mxu0 0.0
    %755 = vmatpush1.msra.mxu0 0.0
    %756 = vmatprep.subr.mxu0 0.0
    %757 = vmatpush1.msra.mxu0 %v728
    %758 = vmatprep.subr.mxu0 0.0
    %759 = vmatpush1.msra.mxu0 %v727
    %760 = vmatprep.subr.mxu0 0.0
    %761 = vmatpush1.msra.mxu0 %v726
    %762 = vmatprep.subr.mxu0 0.0
    %763 = vmatpush1.msra.mxu0 %v725
    %764 = vmatprep.subr.mxu0 0.0
    %765 = vmatpush2.msra.mxu0 0.0
    %766 = vmatprep.subr.mxu0 0.0
    %767 = vmatpush2.msra.mxu0 0.0
    %768 = vmatprep.subr.mxu0 0.0
    %769 = vmatpush2.msra.mxu0 0.0
    %770 = vmatprep.subr.mxu0 0.0
    %771 = vmatpush2.msra.mxu0 0.0
    %772 = vmatprep.subr.mxu0 0.0
    %773 = vmatpush2.msra.mxu0 0.0
    %774 = vmatprep.subr.mxu0 0.0
    %775 = vmatpush2.msra.mxu0 0.0
    %776 = vmatprep.subr.mxu0 0.0
    %777 = vmatpush2.msra.mxu0 0.0
    %778 = vmatprep.subr.mxu0 0.0
    %779 = vmatpush2.msra.mxu0 0.0
    %780 = vmatprep.subr.mxu0 0.0
    %781 = vmatpush2.msra.mxu0 0.0
    %782 = vmatprep.subr.mxu0 0.0
    %783 = vmatpush2.msra.mxu0 0.0
    %784 = vmatprep.subr.mxu0 0.0
    %785 = vmatpush2.msra.mxu0 0.0
    %786 = vmatprep.subr.mxu0 0.0
    %787 = vmatpush2.msra.mxu0 0.0
    %788 = vmatprep.subr.mxu0 0.0
    %789 = vmatpush2.msra.mxu0 0.0
    %790 = vmatprep.subr.mxu0 0.0
    %791 = vmatpush2.msra.mxu0 0.0
    %792 = vmatprep.subr.mxu0 0.0
    %793 = vmatpush2.msra.mxu0 0.0
    %794 = vmatprep.subr.mxu0 0.0
    %795 = vmatpush2.msra.mxu0 0.0
    %796 = vmatprep.mubr.f32.mxu0 0.0
    %797 = vmatmul.mubr.f32.gmra.mxu0 %v730
    %v798 = vpop.f32.mrf.mxu0
    %v799 = vadd.f32 0.0, %v798
    %v800 = vpop.f32.mrf.mxu0
    %801 = vdwg.mxu0
    %v802 = vadd.f32 %v724, %v799
    %v803 = vld [vmem:[#allocation3] sm:$0x3]
    %v804 = vxor.u32 %v802, 2147483648
    %v805 = vmul.f32 %v804, 1.442695
    %v806 = vpow.pop %v805
    %v807 = vadd.f32 %v806, 1.0
    %v808 = vrcp.pop %v807
    %v809 = vmul.f32 1.0, %v808
    %v810 = vtanh.pop %v802
    %812 = vrot.lane.b32.xlu0 %v803, 32
    %v813 = vpop.permute.xlu0 %812
    %v815 = vmul.f32 %v809, %v813
    %817 = vrot.lane.b32.xlu0 %v810, 64
    %v818 = vpop.permute.xlu0 %817
    %v820 = vmul.f32 %v809, %v818
    %822 = vrot.lane.b32.xlu0 %v820, 32
    %v823 = vpop.permute.xlu0 %822
    %v825 = vadd.f32 %v815, %v823
    %v826 = vtanh.pop %v825
    %828 = vrot.lane.b32.xlu0 %v826, 64
    %v829 = vpop.permute.xlu0 %828
    %v831 = vmul.f32 %v809, %v829
    %833 = vrot.lane.b32.xlu0 %v831, 32
    %v834 = vpop.permute.xlu0 %833
    %836 = vst.msk [vmem:[#allocation2] sm:$0x3] %vm191, %v834
    %838 = vrot.lane.b32.xlu0 %v825, 96
    %v839 = vpop.permute.xlu0 %838
    %841 = vst.msk [vmem:[#allocation3] sm:$0x3] %vm191, %v839
    %v842 = vld [vmem:[%s198] sm:$0x3]
    %v843 = vld [vmem:[#allocation7] sm:$0xff]
    %v844 = vld [vmem:[#allocation7 + $0x8] sm:$0xff]
    %v845 = vld [vmem:[#allocation7 + $0x10] sm:$0xff]
    %v846 = vld [vmem:[#allocation7 + $0x18] sm:$0xff]
    %v847 = vld [vmem:[#allocation9] sm:$0xff]
    %v848 = vld [vmem:[#allocation9 + $0x8] sm:$0xff]
    %v849 = vld [vmem:[#allocation9 + $0x10] sm:$0xff]
    %v850 = vld [vmem:[#allocation9 + $0x18] sm:$0xff]
    %v852 = vsel %vm83, %v842, 0
    %854 = vmatprep.subr.mxu0 0.0
    %855 = vmatpush1.msra.mxu0 0.0
    %856 = vmatprep.subr.mxu0 0.0
    %857 = vmatpush1.msra.mxu0 0.0
    %858 = vmatprep.subr.mxu0 0.0
    %859 = vmatpush1.msra.mxu0 0.0
    %860 = vmatprep.subr.mxu0 0.0
    %861 = vmatpush1.msra.mxu0 0.0
    %862 = vmatprep.subr.mxu0 0.0
    %863 = vmatpush1.msra.mxu0 0.0
    %864 = vmatprep.subr.mxu0 0.0
    %865 = vmatpush1.msra.mxu0 0.0
    %866 = vmatprep.subr.mxu0 0.0
    %867 = vmatpush1.msra.mxu0 0.0
    %868 = vmatprep.subr.mxu0 0.0
    %869 = vmatpush1.msra.mxu0 0.0
    %870 = vmatprep.subr.mxu0 0.0
    %871 = vmatpush1.msra.mxu0 0.0
    %872 = vmatprep.subr.mxu0 0.0
    %873 = vmatpush1.msra.mxu0 0.0
    %874 = vmatprep.subr.mxu0 0.0
    %875 = vmatpush1.msra.mxu0 0.0
    %876 = vmatprep.subr.mxu0 0.0
    %877 = vmatpush1.msra.mxu0 0.0
    %878 = vmatprep.subr.mxu0 0.0
    %879 = vmatpush1.msra.mxu0 %v850
    %880 = vmatprep.subr.mxu0 0.0
    %881 = vmatpush1.msra.mxu0 %v849
    %882 = vmatprep.subr.mxu0 0.0
    %883 = vmatpush1.msra.mxu0 %v848
    %884 = vmatprep.subr.mxu0 0.0
    %885 = vmatpush1.msra.mxu0 %v847
    %886 = vmatprep.subr.mxu0 0.0
    %887 = vmatpush2.msra.mxu0 0.0
    %888 = vmatprep.subr.mxu0 0.0
    %889 = vmatpush2.msra.mxu0 0.0
    %890 = vmatprep.subr.mxu0 0.0
    %891 = vmatpush2.msra.mxu0 0.0
    %892 = vmatprep.subr.mxu0 0.0
    %893 = vmatpush2.msra.mxu0 0.0
    %894 = vmatprep.subr.mxu0 0.0
    %895 = vmatpush2.msra.mxu0 0.0
    %896 = vmatprep.subr.mxu0 0.0
    %897 = vmatpush2.msra.mxu0 0.0
    %898 = vmatprep.subr.mxu0 0.0
    %899 = vmatpush2.msra.mxu0 0.0
    %900 = vmatprep.subr.mxu0 0.0
    %901 = vmatpush2.msra.mxu0 0.0
    %902 = vmatprep.subr.mxu0 0.0
    %903 = vmatpush2.msra.mxu0 0.0
    %904 = vmatprep.subr.mxu0 0.0
    %905 = vmatpush2.msra.mxu0 0.0
    %906 = vmatprep.subr.mxu0 0.0
    %907 = vmatpush2.msra.mxu0 0.0
    %908 = vmatprep.subr.mxu0 0.0
    %909 = vmatpush2.msra.mxu0 0.0
    %910 = vmatprep.subr.mxu0 0.0
    %911 = vmatpush2.msra.mxu0 0.0
    %912 = vmatprep.subr.mxu0 0.0
    %913 = vmatpush2.msra.mxu0 0.0
    %914 = vmatprep.subr.mxu0 0.0
    %915 = vmatpush2.msra.mxu0 0.0
    %916 = vmatprep.subr.mxu0 0.0
    %917 = vmatpush2.msra.mxu0 0.0
    %918 = vmatprep.mubr.f32.mxu0 0.0
    %919 = vmatmul.mubr.f32.gmra.mxu0 %v852
    %v920 = vpop.f32.mrf.mxu0
    %v921 = vadd.f32 0.0, %v920
    %v922 = vpop.f32.mrf.mxu0
    %923 = vdwg.mxu0
    %v924 = vsel %vm83, %v834, 0
    %926 = vmatprep.subr.mxu0 0.0
    %927 = vmatpush1.msra.mxu0 0.0
    %928 = vmatprep.subr.mxu0 0.0
    %929 = vmatpush1.msra.mxu0 0.0
    %930 = vmatprep.subr.mxu0 0.0
    %931 = vmatpush1.msra.mxu0 0.0
    %932 = vmatprep.subr.mxu0 0.0
    %933 = vmatpush1.msra.mxu0 0.0
    %934 = vmatprep.subr.mxu0 0.0
    %935 = vmatpush1.msra.mxu0 0.0
    %936 = vmatprep.subr.mxu0 0.0
    %937 = vmatpush1.msra.mxu0 0.0
    %938 = vmatprep.subr.mxu0 0.0
    %939 = vmatpush1.msra.mxu0 0.0
    %940 = vmatprep.subr.mxu0 0.0
    %941 = vmatpush1.msra.mxu0 0.0
    %942 = vmatprep.subr.mxu0 0.0
    %943 = vmatpush1.msra.mxu0 0.0
    %944 = vmatprep.subr.mxu0 0.0
    %945 = vmatpush1.msra.mxu0 0.0
    %946 = vmatprep.subr.mxu0 0.0
    %947 = vmatpush1.msra.mxu0 0.0
    %948 = vmatprep.subr.mxu0 0.0
    %949 = vmatpush1.msra.mxu0 0.0
    %950 = vmatprep.subr.mxu0 0.0
    %951 = vmatpush1.msra.mxu0 %v846
    %952 = vmatprep.subr.mxu0 0.0
    %953 = vmatpush1.msra.mxu0 %v845
    %954 = vmatprep.subr.mxu0 0.0
    %955 = vmatpush1.msra.mxu0 %v844
    %956 = vmatprep.subr.mxu0 0.0
    %957 = vmatpush1.msra.mxu0 %v843
    %958 = vmatprep.subr.mxu0 0.0
    %959 = vmatpush2.msra.mxu0 0.0
    %960 = vmatprep.subr.mxu0 0.0
    %961 = vmatpush2.msra.mxu0 0.0
    %962 = vmatprep.subr.mxu0 0.0
    %963 = vmatpush2.msra.mxu0 0.0
    %964 = vmatprep.subr.mxu0 0.0
    %965 = vmatpush2.msra.mxu0 0.0
    %966 = vmatprep.subr.mxu0 0.0
    %967 = vmatpush2.msra.mxu0 0.0
    %968 = vmatprep.subr.mxu0 0.0
    %969 = vmatpush2.msra.mxu0 0.0
    %970 = vmatprep.subr.mxu0 0.0
    %971 = vmatpush2.msra.mxu0 0.0
    %972 = vmatprep.subr.mxu0 0.0
    %973 = vmatpush2.msra.mxu0 0.0
    %974 = vmatprep.subr.mxu0 0.0
    %975 = vmatpush2.msra.mxu0 0.0
    %976 = vmatprep.subr.mxu0 0.0
    %977 = vmatpush2.msra.mxu0 0.0
    %978 = vmatprep.subr.mxu0 0.0
    %979 = vmatpush2.msra.mxu0 0.0
    %980 = vmatprep.subr.mxu0 0.0
    %981 = vmatpush2.msra.mxu0 0.0
    %982 = vmatprep.subr.mxu0 0.0
    %983 = vmatpush2.msra.mxu0 0.0
    %984 = vmatprep.subr.mxu0 0.0
    %985 = vmatpush2.msra.mxu0 0.0
    %986 = vmatprep.subr.mxu0 0.0
    %987 = vmatpush2.msra.mxu0 0.0
    %988 = vmatprep.subr.mxu0 0.0
    %989 = vmatpush2.msra.mxu0 0.0
    %990 = vmatprep.mubr.f32.mxu0 0.0
    %991 = vmatmul.mubr.f32.gmra.mxu0 %v924
    %v992 = vpop.f32.mrf.mxu0
    %v993 = vadd.f32 %v921, %v992
    %v994 = vpop.f32.mrf.mxu0
    %995 = vdwg.mxu0
    %v996 = vld [vmem:[%s4] sm:$0x1]
    %v998 = vlaneseq
    %v999 = vshrl.u32 %v998, 7
    %v1000 = vsub.s32 0, %v999
    %v1001 = vrot.slane %v996, %v1000
    %v1003 = vadd.f32 %v993, %v1001
    %v1004 = vld [vmem:[%s361] sm:$0x3]
    %v1005 = vxor.u32 %v1003, 2147483648
    %v1006 = vmul.f32 %v1005, 1.442695
    %v1007 = vpow.pop %v1006
    %v1008 = vadd.f32 %v1007, 1.0
    %v1009 = vrcp.pop %v1008
    %v1010 = vmul.f32 1.0, %v1009
    %v1011 = vtanh.pop %v1003
    %1013 = vrot.lane.b32.xlu0 %v1004, 32
    %v1014 = vpop.permute.xlu0 %1013
    %v1016 = vmul.f32 %v1010, %v1014
    %1018 = vrot.lane.b32.xlu0 %v1011, 64
    %v1019 = vpop.permute.xlu0 %1018
    %v1021 = vmul.f32 %v1010, %v1019
    %1023 = vrot.lane.b32.xlu0 %v1021, 32
    %v1024 = vpop.permute.xlu0 %1023
    %v1026 = vadd.f32 %v1016, %v1024
    %v1027 = vtanh.pop %v1026
    %1029 = vrot.lane.b32.xlu0 %v1027, 64
    %v1030 = vpop.permute.xlu0 %1029
    %v1032 = vmul.f32 %v1010, %v1030
    %1034 = vrot.lane.b32.xlu0 %v1032, 32
    %v1035 = vpop.permute.xlu0 %1034
    %1037 = vst.msk [vmem:[%s198] sm:$0x3] %vm191, %v1035
    %1039 = vrot.lane.b32.xlu0 %v1026, 96
    %v1040 = vpop.permute.xlu0 %1039
    %1042 = vst.msk [vmem:[%s361] sm:$0x3] %vm191, %v1040
    %v1043 = vld [vmem:[#allocation2] sm:$0x3]
    %s1044 = scalar_lea.vmem [#allocation4], 6
    %v1045 = vld [vmem:[%s1044] sm:$0x3]
    %v1046 = vld [vmem:[%s1] sm:$0xff]
    %v1047 = vld [vmem:[%s1 + $0x8] sm:$0xff]
    %v1048 = vld [vmem:[%s1 + $0x10] sm:$0xff]
    %v1049 = vld [vmem:[%s1 + $0x18] sm:$0xff]
    %v1051 = vsel %vm83, %v1043, 0
    %1053 = vmatprep.subr.mxu0 0.0
    %1054 = vmatpush1.msra.mxu0 0.0
    %1055 = vmatprep.subr.mxu0 0.0
    %1056 = vmatpush1.msra.mxu0 0.0
    %1057 = vmatprep.subr.mxu0 0.0
    %1058 = vmatpush1.msra.mxu0 0.0
    %1059 = vmatprep.subr.mxu0 0.0
    %1060 = vmatpush1.msra.mxu0 0.0
    %1061 = vmatprep.subr.mxu0 0.0
    %1062 = vmatpush1.msra.mxu0 0.0
    %1063 = vmatprep.subr.mxu0 0.0
    %1064 = vmatpush1.msra.mxu0 0.0
    %1065 = vmatprep.subr.mxu0 0.0
    %1066 = vmatpush1.msra.mxu0 0.0
    %1067 = vmatprep.subr.mxu0 0.0
    %1068 = vmatpush1.msra.mxu0 0.0
    %1069 = vmatprep.subr.mxu0 0.0
    %1070 = vmatpush1.msra.mxu0 0.0
    %1071 = vmatprep.subr.mxu0 0.0
    %1072 = vmatpush1.msra.mxu0 0.0
    %1073 = vmatprep.subr.mxu0 0.0
    %1074 = vmatpush1.msra.mxu0 0.0
    %1075 = vmatprep.subr.mxu0 0.0
    %1076 = vmatpush1.msra.mxu0 0.0
    %1077 = vmatprep.subr.mxu0 0.0
    %1078 = vmatpush1.msra.mxu0 %v1049
    %1079 = vmatprep.subr.mxu0 0.0
    %1080 = vmatpush1.msra.mxu0 %v1048
    %1081 = vmatprep.subr.mxu0 0.0
    %1082 = vmatpush1.msra.mxu0 %v1047
    %1083 = vmatprep.subr.mxu0 0.0
    %1084 = vmatpush1.msra.mxu0 %v1046
    %1085 = vmatprep.subr.mxu0 0.0
    %1086 = vmatpush2.msra.mxu0 0.0
    %1087 = vmatprep.subr.mxu0 0.0
    %1088 = vmatpush2.msra.mxu0 0.0
    %1089 = vmatprep.subr.mxu0 0.0
    %1090 = vmatpush2.msra.mxu0 0.0
    %1091 = vmatprep.subr.mxu0 0.0
    %1092 = vmatpush2.msra.mxu0 0.0
    %1093 = vmatprep.subr.mxu0 0.0
    %1094 = vmatpush2.msra.mxu0 0.0
    %1095 = vmatprep.subr.mxu0 0.0
    %1096 = vmatpush2.msra.mxu0 0.0
    %1097 = vmatprep.subr.mxu0 0.0
    %1098 = vmatpush2.msra.mxu0 0.0
    %1099 = vmatprep.subr.mxu0 0.0
    %1100 = vmatpush2.msra.mxu0 0.0
    %1101 = vmatprep.subr.mxu0 0.0
    %1102 = vmatpush2.msra.mxu0 0.0
    %1103 = vmatprep.subr.mxu0 0.0
    %1104 = vmatpush2.msra.mxu0 0.0
    %1105 = vmatprep.subr.mxu0 0.0
    %1106 = vmatpush2.msra.mxu0 0.0
    %1107 = vmatprep.subr.mxu0 0.0
    %1108 = vmatpush2.msra.mxu0 0.0
    %1109 = vmatprep.subr.mxu0 0.0
    %1110 = vmatpush2.msra.mxu0 0.0
    %1111 = vmatprep.subr.mxu0 0.0
    %1112 = vmatpush2.msra.mxu0 0.0
    %1113 = vmatprep.subr.mxu0 0.0
    %1114 = vmatpush2.msra.mxu0 0.0
    %1115 = vmatprep.subr.mxu0 0.0
    %1116 = vmatpush2.msra.mxu0 0.0
    %1117 = vmatprep.mubr.f32.mxu0 0.0
    %1118 = vmatmul.mubr.f32.gmra.mxu0 %v1051
    %v1119 = vpop.f32.mrf.mxu0
    %v1120 = vadd.f32 0.0, %v1119
    %v1121 = vpop.f32.mrf.mxu0
    %1122 = vdwg.mxu0
    %v1123 = vadd.f32 %v1045, %v1120
    %v1124 = vld [vmem:[#allocation3] sm:$0x3]
    %v1125 = vxor.u32 %v1123, 2147483648
    %v1126 = vmul.f32 %v1125, 1.442695
    %v1127 = vpow.pop %v1126
    %v1128 = vadd.f32 %v1127, 1.0
    %v1129 = vrcp.pop %v1128
    %v1130 = vmul.f32 1.0, %v1129
    %v1131 = vtanh.pop %v1123
    %1133 = vrot.lane.b32.xlu0 %v1124, 32
    %v1134 = vpop.permute.xlu0 %1133
    %v1136 = vmul.f32 %v1130, %v1134
    %1138 = vrot.lane.b32.xlu0 %v1131, 64
    %v1139 = vpop.permute.xlu0 %1138
    %v1141 = vmul.f32 %v1130, %v1139
    %1143 = vrot.lane.b32.xlu0 %v1141, 32
    %v1144 = vpop.permute.xlu0 %1143
    %v1146 = vadd.f32 %v1136, %v1144
    %v1147 = vtanh.pop %v1146
    %1149 = vrot.lane.b32.xlu0 %v1147, 64
    %v1150 = vpop.permute.xlu0 %1149
    %v1152 = vmul.f32 %v1130, %v1150
    %1154 = vrot.lane.b32.xlu0 %v1152, 32
    %v1155 = vpop.permute.xlu0 %1154
    %1157 = vst.msk [vmem:[#allocation2] sm:$0x3] %vm191, %v1155
    %1159 = vrot.lane.b32.xlu0 %v1146, 96
    %v1160 = vpop.permute.xlu0 %1159
    %1162 = vst.msk [vmem:[#allocation3] sm:$0x3] %vm191, %v1160
    %v1163 = vld [vmem:[%s198] sm:$0x3]
    %v1164 = vld [vmem:[#allocation7] sm:$0xff]
    %v1165 = vld [vmem:[#allocation7 + $0x8] sm:$0xff]
    %v1166 = vld [vmem:[#allocation7 + $0x10] sm:$0xff]
    %v1167 = vld [vmem:[#allocation7 + $0x18] sm:$0xff]
    %v1168 = vld [vmem:[#allocation9] sm:$0xff]
    %v1169 = vld [vmem:[#allocation9 + $0x8] sm:$0xff]
    %v1170 = vld [vmem:[#allocation9 + $0x10] sm:$0xff]
    %v1171 = vld [vmem:[#allocation9 + $0x18] sm:$0xff]
    %v1173 = vsel %vm83, %v1163, 0
    %1175 = vmatprep.subr.mxu0 0.0
    %1176 = vmatpush1.msra.mxu0 0.0
    %1177 = vmatprep.subr.mxu0 0.0
    %1178 = vmatpush1.msra.mxu0 0.0
    %1179 = vmatprep.subr.mxu0 0.0
    %1180 = vmatpush1.msra.mxu0 0.0
    %1181 = vmatprep.subr.mxu0 0.0
    %1182 = vmatpush1.msra.mxu0 0.0
    %1183 = vmatprep.subr.mxu0 0.0
    %1184 = vmatpush1.msra.mxu0 0.0
    %1185 = vmatprep.subr.mxu0 0.0
    %1186 = vmatpush1.msra.mxu0 0.0
    %1187 = vmatprep.subr.mxu0 0.0
    %1188 = vmatpush1.msra.mxu0 0.0
    %1189 = vmatprep.subr.mxu0 0.0
    %1190 = vmatpush1.msra.mxu0 0.0
    %1191 = vmatprep.subr.mxu0 0.0
    %1192 = vmatpush1.msra.mxu0 0.0
    %1193 = vmatprep.subr.mxu0 0.0
    %1194 = vmatpush1.msra.mxu0 0.0
    %1195 = vmatprep.subr.mxu0 0.0
    %1196 = vmatpush1.msra.mxu0 0.0
    %1197 = vmatprep.subr.mxu0 0.0
    %1198 = vmatpush1.msra.mxu0 0.0
    %1199 = vmatprep.subr.mxu0 0.0
    %1200 = vmatpush1.msra.mxu0 %v1171
    %1201 = vmatprep.subr.mxu0 0.0
    %1202 = vmatpush1.msra.mxu0 %v1170
    %1203 = vmatprep.subr.mxu0 0.0
    %1204 = vmatpush1.msra.mxu0 %v1169
    %1205 = vmatprep.subr.mxu0 0.0
    %1206 = vmatpush1.msra.mxu0 %v1168
    %1207 = vmatprep.subr.mxu0 0.0
    %1208 = vmatpush2.msra.mxu0 0.0
    %1209 = vmatprep.subr.mxu0 0.0
    %1210 = vmatpush2.msra.mxu0 0.0
    %1211 = vmatprep.subr.mxu0 0.0
    %1212 = vmatpush2.msra.mxu0 0.0
    %1213 = vmatprep.subr.mxu0 0.0
    %1214 = vmatpush2.msra.mxu0 0.0
    %1215 = vmatprep.subr.mxu0 0.0
    %1216 = vmatpush2.msra.mxu0 0.0
    %1217 = vmatprep.subr.mxu0 0.0
    %1218 = vmatpush2.msra.mxu0 0.0
    %1219 = vmatprep.subr.mxu0 0.0
    %1220 = vmatpush2.msra.mxu0 0.0
    %1221 = vmatprep.subr.mxu0 0.0
    %1222 = vmatpush2.msra.mxu0 0.0
    %1223 = vmatprep.subr.mxu0 0.0
    %1224 = vmatpush2.msra.mxu0 0.0
    %1225 = vmatprep.subr.mxu0 0.0
    %1226 = vmatpush2.msra.mxu0 0.0
    %1227 = vmatprep.subr.mxu0 0.0
    %1228 = vmatpush2.msra.mxu0 0.0
    %1229 = vmatprep.subr.mxu0 0.0
    %1230 = vmatpush2.msra.mxu0 0.0
    %1231 = vmatprep.subr.mxu0 0.0
    %1232 = vmatpush2.msra.mxu0 0.0
    %1233 = vmatprep.subr.mxu0 0.0
    %1234 = vmatpush2.msra.mxu0 0.0
    %1235 = vmatprep.subr.mxu0 0.0
    %1236 = vmatpush2.msra.mxu0 0.0
    %1237 = vmatprep.subr.mxu0 0.0
    %1238 = vmatpush2.msra.mxu0 0.0
    %1239 = vmatprep.mubr.f32.mxu0 0.0
    %1240 = vmatmul.mubr.f32.gmra.mxu0 %v1173
    %v1241 = vpop.f32.mrf.mxu0
    %v1242 = vadd.f32 0.0, %v1241
    %v1243 = vpop.f32.mrf.mxu0
    %1244 = vdwg.mxu0
    %v1245 = vsel %vm83, %v1155, 0
    %1247 = vmatprep.subr.mxu0 0.0
    %1248 = vmatpush1.msra.mxu0 0.0
    %1249 = vmatprep.subr.mxu0 0.0
    %1250 = vmatpush1.msra.mxu0 0.0
    %1251 = vmatprep.subr.mxu0 0.0
    %1252 = vmatpush1.msra.mxu0 0.0
    %1253 = vmatprep.subr.mxu0 0.0
    %1254 = vmatpush1.msra.mxu0 0.0
    %1255 = vmatprep.subr.mxu0 0.0
    %1256 = vmatpush1.msra.mxu0 0.0
    %1257 = vmatprep.subr.mxu0 0.0
    %1258 = vmatpush1.msra.mxu0 0.0
    %1259 = vmatprep.subr.mxu0 0.0
    %1260 = vmatpush1.msra.mxu0 0.0
    %1261 = vmatprep.subr.mxu0 0.0
    %1262 = vmatpush1.msra.mxu0 0.0
    %1263 = vmatprep.subr.mxu0 0.0
    %1264 = vmatpush1.msra.mxu0 0.0
    %1265 = vmatprep.subr.mxu0 0.0
    %1266 = vmatpush1.msra.mxu0 0.0
    %1267 = vmatprep.subr.mxu0 0.0
    %1268 = vmatpush1.msra.mxu0 0.0
    %1269 = vmatprep.subr.mxu0 0.0
    %1270 = vmatpush1.msra.mxu0 0.0
    %1271 = vmatprep.subr.mxu0 0.0
    %1272 = vmatpush1.msra.mxu0 %v1167
    %1273 = vmatprep.subr.mxu0 0.0
    %1274 = vmatpush1.msra.mxu0 %v1166
    %1275 = vmatprep.subr.mxu0 0.0
    %1276 = vmatpush1.msra.mxu0 %v1165
    %1277 = vmatprep.subr.mxu0 0.0
    %1278 = vmatpush1.msra.mxu0 %v1164
    %1279 = vmatprep.subr.mxu0 0.0
    %1280 = vmatpush2.msra.mxu0 0.0
    %1281 = vmatprep.subr.mxu0 0.0
    %1282 = vmatpush2.msra.mxu0 0.0
    %1283 = vmatprep.subr.mxu0 0.0
    %1284 = vmatpush2.msra.mxu0 0.0
    %1285 = vmatprep.subr.mxu0 0.0
    %1286 = vmatpush2.msra.mxu0 0.0
    %1287 = vmatprep.subr.mxu0 0.0
    %1288 = vmatpush2.msra.mxu0 0.0
    %1289 = vmatprep.subr.mxu0 0.0
    %1290 = vmatpush2.msra.mxu0 0.0
    %1291 = vmatprep.subr.mxu0 0.0
    %1292 = vmatpush2.msra.mxu0 0.0
    %1293 = vmatprep.subr.mxu0 0.0
    %1294 = vmatpush2.msra.mxu0 0.0
    %1295 = vmatprep.subr.mxu0 0.0
    %1296 = vmatpush2.msra.mxu0 0.0
    %1297 = vmatprep.subr.mxu0 0.0
    %1298 = vmatpush2.msra.mxu0 0.0
    %1299 = vmatprep.subr.mxu0 0.0
    %1300 = vmatpush2.msra.mxu0 0.0
    %1301 = vmatprep.subr.mxu0 0.0
    %1302 = vmatpush2.msra.mxu0 0.0
    %1303 = vmatprep.subr.mxu0 0.0
    %1304 = vmatpush2.msra.mxu0 0.0
    %1305 = vmatprep.subr.mxu0 0.0
    %1306 = vmatpush2.msra.mxu0 0.0
    %1307 = vmatprep.subr.mxu0 0.0
    %1308 = vmatpush2.msra.mxu0 0.0
    %1309 = vmatprep.subr.mxu0 0.0
    %1310 = vmatpush2.msra.mxu0 0.0
    %1311 = vmatprep.mubr.f32.mxu0 0.0
    %1312 = vmatmul.mubr.f32.gmra.mxu0 %v1245
    %v1313 = vpop.f32.mrf.mxu0
    %v1314 = vadd.f32 %v1242, %v1313
    %v1315 = vpop.f32.mrf.mxu0
    %1316 = vdwg.mxu0
    %v1317 = vld [vmem:[%s4] sm:$0x1]
    %v1319 = vlaneseq
    %v1320 = vshrl.u32 %v1319, 7
    %v1321 = vsub.s32 0, %v1320
    %v1322 = vrot.slane %v1317, %v1321
    %v1324 = vadd.f32 %v1314, %v1322
    %v1325 = vld [vmem:[%s361] sm:$0x3]
    %v1326 = vxor.u32 %v1324, 2147483648
    %v1327 = vmul.f32 %v1326, 1.442695
    %v1328 = vpow.pop %v1327
    %v1329 = vadd.f32 %v1328, 1.0
    %v1330 = vrcp.pop %v1329
    %v1331 = vmul.f32 1.0, %v1330
    %v1332 = vtanh.pop %v1324
    %1334 = vrot.lane.b32.xlu0 %v1325, 32
    %v1335 = vpop.permute.xlu0 %1334
    %v1337 = vmul.f32 %v1331, %v1335
    %1339 = vrot.lane.b32.xlu0 %v1332, 64
    %v1340 = vpop.permute.xlu0 %1339
    %v1342 = vmul.f32 %v1331, %v1340
    %1344 = vrot.lane.b32.xlu0 %v1342, 32
    %v1345 = vpop.permute.xlu0 %1344
    %v1347 = vadd.f32 %v1337, %v1345
    %v1348 = vtanh.pop %v1347
    %1350 = vrot.lane.b32.xlu0 %v1348, 64
    %v1351 = vpop.permute.xlu0 %1350
    %v1353 = vmul.f32 %v1331, %v1351
    %1355 = vrot.lane.b32.xlu0 %v1353, 32
    %v1356 = vpop.permute.xlu0 %1355
    %1358 = vst.msk [vmem:[%s198] sm:$0x3] %vm191, %v1356
    %1360 = vrot.lane.b32.xlu0 %v1347, 96
    %v1361 = vpop.permute.xlu0 %1360
    %1363 = vst.msk [vmem:[%s361] sm:$0x3] %vm191, %v1361
    %v1364 = vld [vmem:[#allocation2] sm:$0x3]
    %s1365 = scalar_lea.vmem [#allocation4], 8
    %v1366 = vld [vmem:[%s1365] sm:$0x3]
    %v1367 = vld [vmem:[%s1] sm:$0xff]
    %v1368 = vld [vmem:[%s1 + $0x8] sm:$0xff]
    %v1369 = vld [vmem:[%s1 + $0x10] sm:$0xff]
    %v1370 = vld [vmem:[%s1 + $0x18] sm:$0xff]
    %v1372 = vsel %vm83, %v1364, 0
    %1374 = vmatprep.subr.mxu0 0.0
    %1375 = vmatpush1.msra.mxu0 0.0
    %1376 = vmatprep.subr.mxu0 0.0
    %1377 = vmatpush1.msra.mxu0 0.0
    %1378 = vmatprep.subr.mxu0 0.0
    %1379 = vmatpush1.msra.mxu0 0.0
    %1380 = vmatprep.subr.mxu0 0.0
    %1381 = vmatpush1.msra.mxu0 0.0
    %1382 = vmatprep.subr.mxu0 0.0
    %1383 = vmatpush1.msra.mxu0 0.0
    %1384 = vmatprep.subr.mxu0 0.0
    %1385 = vmatpush1.msra.mxu0 0.0
    %1386 = vmatprep.subr.mxu0 0.0
    %1387 = vmatpush1.msra.mxu0 0.0
    %1388 = vmatprep.subr.mxu0 0.0
    %1389 = vmatpush1.msra.mxu0 0.0
    %1390 = vmatprep.subr.mxu0 0.0
    %1391 = vmatpush1.msra.mxu0 0.0
    %1392 = vmatprep.subr.mxu0 0.0
    %1393 = vmatpush1.msra.mxu0 0.0
    %1394 = vmatprep.subr.mxu0 0.0
    %1395 = vmatpush1.msra.mxu0 0.0
    %1396 = vmatprep.subr.mxu0 0.0
    %1397 = vmatpush1.msra.mxu0 0.0
    %1398 = vmatprep.subr.mxu0 0.0
    %1399 = vmatpush1.msra.mxu0 %v1370
    %1400 = vmatprep.subr.mxu0 0.0
    %1401 = vmatpush1.msra.mxu0 %v1369
    %1402 = vmatprep.subr.mxu0 0.0
    %1403 = vmatpush1.msra.mxu0 %v1368
    %1404 = vmatprep.subr.mxu0 0.0
    %1405 = vmatpush1.msra.mxu0 %v1367
    %1406 = vmatprep.subr.mxu0 0.0
    %1407 = vmatpush2.msra.mxu0 0.0
    %1408 = vmatprep.subr.mxu0 0.0
    %1409 = vmatpush2.msra.mxu0 0.0
    %1410 = vmatprep.subr.mxu0 0.0
    %1411 = vmatpush2.msra.mxu0 0.0
    %1412 = vmatprep.subr.mxu0 0.0
    %1413 = vmatpush2.msra.mxu0 0.0
    %1414 = vmatprep.subr.mxu0 0.0
    %1415 = vmatpush2.msra.mxu0 0.0
    %1416 = vmatprep.subr.mxu0 0.0
    %1417 = vmatpush2.msra.mxu0 0.0
    %1418 = vmatprep.subr.mxu0 0.0
    %1419 = vmatpush2.msra.mxu0 0.0
    %1420 = vmatprep.subr.mxu0 0.0
    %1421 = vmatpush2.msra.mxu0 0.0
    %1422 = vmatprep.subr.mxu0 0.0
    %1423 = vmatpush2.msra.mxu0 0.0
    %1424 = vmatprep.subr.mxu0 0.0
    %1425 = vmatpush2.msra.mxu0 0.0
    %1426 = vmatprep.subr.mxu0 0.0
    %1427 = vmatpush2.msra.mxu0 0.0
    %1428 = vmatprep.subr.mxu0 0.0
    %1429 = vmatpush2.msra.mxu0 0.0
    %1430 = vmatprep.subr.mxu0 0.0
    %1431 = vmatpush2.msra.mxu0 0.0
    %1432 = vmatprep.subr.mxu0 0.0
    %1433 = vmatpush2.msra.mxu0 0.0
    %1434 = vmatprep.subr.mxu0 0.0
    %1435 = vmatpush2.msra.mxu0 0.0
    %1436 = vmatprep.subr.mxu0 0.0
    %1437 = vmatpush2.msra.mxu0 0.0
    %1438 = vmatprep.mubr.f32.mxu0 0.0
    %1439 = vmatmul.mubr.f32.gmra.mxu0 %v1372
    %v1440 = vpop.f32.mrf.mxu0
    %v1441 = vadd.f32 0.0, %v1440
    %v1442 = vpop.f32.mrf.mxu0
    %1443 = vdwg.mxu0
    %v1444 = vadd.f32 %v1366, %v1441
    %v1445 = vld [vmem:[#allocation3] sm:$0x3]
    %v1446 = vxor.u32 %v1444, 2147483648
    %v1447 = vmul.f32 %v1446, 1.442695
    %v1448 = vpow.pop %v1447
    %v1449 = vadd.f32 %v1448, 1.0
    %v1450 = vrcp.pop %v1449
    %v1451 = vmul.f32 1.0, %v1450
    %v1452 = vtanh.pop %v1444
    %1454 = vrot.lane.b32.xlu0 %v1445, 32
    %v1455 = vpop.permute.xlu0 %1454
    %v1457 = vmul.f32 %v1451, %v1455
    %1459 = vrot.lane.b32.xlu0 %v1452, 64
    %v1460 = vpop.permute.xlu0 %1459
    %v1462 = vmul.f32 %v1451, %v1460
    %1464 = vrot.lane.b32.xlu0 %v1462, 32
    %v1465 = vpop.permute.xlu0 %1464
    %v1467 = vadd.f32 %v1457, %v1465
    %v1468 = vtanh.pop %v1467
    %1470 = vrot.lane.b32.xlu0 %v1468, 64
    %v1471 = vpop.permute.xlu0 %1470
    %v1473 = vmul.f32 %v1451, %v1471
    %1475 = vrot.lane.b32.xlu0 %v1473, 32
    %v1476 = vpop.permute.xlu0 %1475
    %1478 = vst.msk [vmem:[#allocation2] sm:$0x3] %vm191, %v1476
    %1480 = vrot.lane.b32.xlu0 %v1467, 96
    %v1481 = vpop.permute.xlu0 %1480
    %1483 = vst.msk [vmem:[#allocation3] sm:$0x3] %vm191, %v1481
    %v1484 = vld [vmem:[%s198] sm:$0x3]
    %v1485 = vld [vmem:[#allocation7] sm:$0xff]
    %v1486 = vld [vmem:[#allocation7 + $0x8] sm:$0xff]
    %v1487 = vld [vmem:[#allocation7 + $0x10] sm:$0xff]
    %v1488 = vld [vmem:[#allocation7 + $0x18] sm:$0xff]
    %v1489 = vld [vmem:[#allocation9] sm:$0xff]
    %v1490 = vld [vmem:[#allocation9 + $0x8] sm:$0xff]
    %v1491 = vld [vmem:[#allocation9 + $0x10] sm:$0xff]
    %v1492 = vld [vmem:[#allocation9 + $0x18] sm:$0xff]
    %v1494 = vsel %vm83, %v1484, 0
    %1496 = vmatprep.subr.mxu0 0.0
    %1497 = vmatpush1.msra.mxu0 0.0
    %1498 = vmatprep.subr.mxu0 0.0
    %1499 = vmatpush1.msra.mxu0 0.0
    %1500 = vmatprep.subr.mxu0 0.0
    %1501 = vmatpush1.msra.mxu0 0.0
    %1502 = vmatprep.subr.mxu0 0.0
    %1503 = vmatpush1.msra.mxu0 0.0
    %1504 = vmatprep.subr.mxu0 0.0
    %1505 = vmatpush1.msra.mxu0 0.0
    %1506 = vmatprep.subr.mxu0 0.0
    %1507 = vmatpush1.msra.mxu0 0.0
    %1508 = vmatprep.subr.mxu0 0.0
    %1509 = vmatpush1.msra.mxu0 0.0
    %1510 = vmatprep.subr.mxu0 0.0
    %1511 = vmatpush1.msra.mxu0 0.0
    %1512 = vmatprep.subr.mxu0 0.0
    %1513 = vmatpush1.msra.mxu0 0.0
    %1514 = vmatprep.subr.mxu0 0.0
    %1515 = vmatpush1.msra.mxu0 0.0
    %1516 = vmatprep.subr.mxu0 0.0
    %1517 = vmatpush1.msra.mxu0 0.0
    %1518 = vmatprep.subr.mxu0 0.0
    %1519 = vmatpush1.msra.mxu0 0.0
    %1520 = vmatprep.subr.mxu0 0.0
    %1521 = vmatpush1.msra.mxu0 %v1492
    %1522 = vmatprep.subr.mxu0 0.0
    %1523 = vmatpush1.msra.mxu0 %v1491
    %1524 = vmatprep.subr.mxu0 0.0
    %1525 = vmatpush1.msra.mxu0 %v1490
    %1526 = vmatprep.subr.mxu0 0.0
    %1527 = vmatpush1.msra.mxu0 %v1489
    %1528 = vmatprep.subr.mxu0 0.0
    %1529 = vmatpush2.msra.mxu0 0.0
    %1530 = vmatprep.subr.mxu0 0.0
    %1531 = vmatpush2.msra.mxu0 0.0
    %1532 = vmatprep.subr.mxu0 0.0
    %1533 = vmatpush2.msra.mxu0 0.0
    %1534 = vmatprep.subr.mxu0 0.0
    %1535 = vmatpush2.msra.mxu0 0.0
    %1536 = vmatprep.subr.mxu0 0.0
    %1537 = vmatpush2.msra.mxu0 0.0
    %1538 = vmatprep.subr.mxu0 0.0
    %1539 = vmatpush2.msra.mxu0 0.0
    %1540 = vmatprep.subr.mxu0 0.0
    %1541 = vmatpush2.msra.mxu0 0.0
    %1542 = vmatprep.subr.mxu0 0.0
    %1543 = vmatpush2.msra.mxu0 0.0
    %1544 = vmatprep.subr.mxu0 0.0
    %1545 = vmatpush2.msra.mxu0 0.0
    %1546 = vmatprep.subr.mxu0 0.0
    %1547 = vmatpush2.msra.mxu0 0.0
    %1548 = vmatprep.subr.mxu0 0.0
    %1549 = vmatpush2.msra.mxu0 0.0
    %1550 = vmatprep.subr.mxu0 0.0
    %1551 = vmatpush2.msra.mxu0 0.0
    %1552 = vmatprep.subr.mxu0 0.0
    %1553 = vmatpush2.msra.mxu0 0.0
    %1554 = vmatprep.subr.mxu0 0.0
    %1555 = vmatpush2.msra.mxu0 0.0
    %1556 = vmatprep.subr.mxu0 0.0
    %1557 = vmatpush2.msra.mxu0 0.0
    %1558 = vmatprep.subr.mxu0 0.0
    %1559 = vmatpush2.msra.mxu0 0.0
    %1560 = vmatprep.mubr.f32.mxu0 0.0
    %1561 = vmatmul.mubr.f32.gmra.mxu0 %v1494
    %v1562 = vpop.f32.mrf.mxu0
    %v1563 = vadd.f32 0.0, %v1562
    %v1564 = vpop.f32.mrf.mxu0
    %1565 = vdwg.mxu0
    %v1566 = vsel %vm83, %v1476, 0
    %1568 = vmatprep.subr.mxu0 0.0
    %1569 = vmatpush1.msra.mxu0 0.0
    %1570 = vmatprep.subr.mxu0 0.0
    %1571 = vmatpush1.msra.mxu0 0.0
    %1572 = vmatprep.subr.mxu0 0.0
    %1573 = vmatpush1.msra.mxu0 0.0
    %1574 = vmatprep.subr.mxu0 0.0
    %1575 = vmatpush1.msra.mxu0 0.0
    %1576 = vmatprep.subr.mxu0 0.0
    %1577 = vmatpush1.msra.mxu0 0.0
    %1578 = vmatprep.subr.mxu0 0.0
    %1579 = vmatpush1.msra.mxu0 0.0
    %1580 = vmatprep.subr.mxu0 0.0
    %1581 = vmatpush1.msra.mxu0 0.0
    %1582 = vmatprep.subr.mxu0 0.0
    %1583 = vmatpush1.msra.mxu0 0.0
    %1584 = vmatprep.subr.mxu0 0.0
    %1585 = vmatpush1.msra.mxu0 0.0
    %1586 = vmatprep.subr.mxu0 0.0
    %1587 = vmatpush1.msra.mxu0 0.0
    %1588 = vmatprep.subr.mxu0 0.0
    %1589 = vmatpush1.msra.mxu0 0.0
    %1590 = vmatprep.subr.mxu0 0.0
    %1591 = vmatpush1.msra.mxu0 0.0
    %1592 = vmatprep.subr.mxu0 0.0
    %1593 = vmatpush1.msra.mxu0 %v1488
    %1594 = vmatprep.subr.mxu0 0.0
    %1595 = vmatpush1.msra.mxu0 %v1487
    %1596 = vmatprep.subr.mxu0 0.0
    %1597 = vmatpush1.msra.mxu0 %v1486
    %1598 = vmatprep.subr.mxu0 0.0
    %1599 = vmatpush1.msra.mxu0 %v1485
    %1600 = vmatprep.subr.mxu0 0.0
    %1601 = vmatpush2.msra.mxu0 0.0
    %1602 = vmatprep.subr.mxu0 0.0
    %1603 = vmatpush2.msra.mxu0 0.0
    %1604 = vmatprep.subr.mxu0 0.0
    %1605 = vmatpush2.msra.mxu0 0.0
    %1606 = vmatprep.subr.mxu0 0.0
    %1607 = vmatpush2.msra.mxu0 0.0
    %1608 = vmatprep.subr.mxu0 0.0
    %1609 = vmatpush2.msra.mxu0 0.0
    %1610 = vmatprep.subr.mxu0 0.0
    %1611 = vmatpush2.msra.mxu0 0.0
    %1612 = vmatprep.subr.mxu0 0.0
    %1613 = vmatpush2.msra.mxu0 0.0
    %1614 = vmatprep.subr.mxu0 0.0
    %1615 = vmatpush2.msra.mxu0 0.0
    %1616 = vmatprep.subr.mxu0 0.0
    %1617 = vmatpush2.msra.mxu0 0.0
    %1618 = vmatprep.subr.mxu0 0.0
    %1619 = vmatpush2.msra.mxu0 0.0
    %1620 = vmatprep.subr.mxu0 0.0
    %1621 = vmatpush2.msra.mxu0 0.0
    %1622 = vmatprep.subr.mxu0 0.0
    %1623 = vmatpush2.msra.mxu0 0.0
    %1624 = vmatprep.subr.mxu0 0.0
    %1625 = vmatpush2.msra.mxu0 0.0
    %1626 = vmatprep.subr.mxu0 0.0
    %1627 = vmatpush2.msra.mxu0 0.0
    %1628 = vmatprep.subr.mxu0 0.0
    %1629 = vmatpush2.msra.mxu0 0.0
    %1630 = vmatprep.subr.mxu0 0.0
    %1631 = vmatpush2.msra.mxu0 0.0
    %1632 = vmatprep.mubr.f32.mxu0 0.0
    %1633 = vmatmul.mubr.f32.gmra.mxu0 %v1566
    %v1634 = vpop.f32.mrf.mxu0
    %v1635 = vadd.f32 %v1563, %v1634
    %v1636 = vpop.f32.mrf.mxu0
    %1637 = vdwg.mxu0
    %v1638 = vld [vmem:[%s4] sm:$0x1]
    %v1640 = vlaneseq
    %v1641 = vshrl.u32 %v1640, 7
    %v1642 = vsub.s32 0, %v1641
    %v1643 = vrot.slane %v1638, %v1642
    %v1645 = vadd.f32 %v1635, %v1643
    %v1646 = vld [vmem:[%s361] sm:$0x3]
    %v1647 = vxor.u32 %v1645, 2147483648
    %v1648 = vmul.f32 %v1647, 1.442695
    %v1649 = vpow.pop %v1648
    %v1650 = vadd.f32 %v1649, 1.0
    %v1651 = vrcp.pop %v1650
    %v1652 = vmul.f32 1.0, %v1651
    %v1653 = vtanh.pop %v1645
    %1655 = vrot.lane.b32.xlu0 %v1646, 32
    %v1656 = vpop.permute.xlu0 %1655
    %v1658 = vmul.f32 %v1652, %v1656
    %1660 = vrot.lane.b32.xlu0 %v1653, 64
    %v1661 = vpop.permute.xlu0 %1660
    %v1663 = vmul.f32 %v1652, %v1661
    %1665 = vrot.lane.b32.xlu0 %v1663, 32
    %v1666 = vpop.permute.xlu0 %1665
    %v1668 = vadd.f32 %v1658, %v1666
    %v1669 = vtanh.pop %v1668
    %1671 = vrot.lane.b32.xlu0 %v1669, 64
    %v1672 = vpop.permute.xlu0 %1671
    %v1674 = vmul.f32 %v1652, %v1672
    %1676 = vrot.lane.b32.xlu0 %v1674, 32
    %v1677 = vpop.permute.xlu0 %1676
    %1679 = vst.msk [vmem:[%s198] sm:$0x3] %vm191, %v1677
    %1681 = vrot.lane.b32.xlu0 %v1668, 96
    %v1682 = vpop.permute.xlu0 %1681
    %1684 = vst.msk [vmem:[%s361] sm:$0x3] %vm191, %v1682
    %v1685 = vld [vmem:[#allocation2] sm:$0x3]
    %s1686 = scalar_lea.vmem [#allocation4], 10
    %v1687 = vld [vmem:[%s1686] sm:$0x3]
    %v1688 = vld [vmem:[%s1] sm:$0xff]
    %v1689 = vld [vmem:[%s1 + $0x8] sm:$0xff]
    %v1690 = vld [vmem:[%s1 + $0x10] sm:$0xff]
    %v1691 = vld [vmem:[%s1 + $0x18] sm:$0xff]
    %v1693 = vsel %vm83, %v1685, 0
    %1695 = vmatprep.subr.mxu0 0.0
    %1696 = vmatpush1.msra.mxu0 0.0
    %1697 = vmatprep.subr.mxu0 0.0
    %1698 = vmatpush1.msra.mxu0 0.0
    %1699 = vmatprep.subr.mxu0 0.0
    %1700 = vmatpush1.msra.mxu0 0.0
    %1701 = vmatprep.subr.mxu0 0.0
    %1702 = vmatpush1.msra.mxu0 0.0
    %1703 = vmatprep.subr.mxu0 0.0
    %1704 = vmatpush1.msra.mxu0 0.0
    %1705 = vmatprep.subr.mxu0 0.0
    %1706 = vmatpush1.msra.mxu0 0.0
    %1707 = vmatprep.subr.mxu0 0.0
    %1708 = vmatpush1.msra.mxu0 0.0
    %1709 = vmatprep.subr.mxu0 0.0
    %1710 = vmatpush1.msra.mxu0 0.0
    %1711 = vmatprep.subr.mxu0 0.0
    %1712 = vmatpush1.msra.mxu0 0.0
    %1713 = vmatprep.subr.mxu0 0.0
    %1714 = vmatpush1.msra.mxu0 0.0
    %1715 = vmatprep.subr.mxu0 0.0
    %1716 = vmatpush1.msra.mxu0 0.0
    %1717 = vmatprep.subr.mxu0 0.0
    %1718 = vmatpush1.msra.mxu0 0.0
    %1719 = vmatprep.subr.mxu0 0.0
    %1720 = vmatpush1.msra.mxu0 %v1691
    %1721 = vmatprep.subr.mxu0 0.0
    %1722 = vmatpush1.msra.mxu0 %v1690
    %1723 = vmatprep.subr.mxu0 0.0
    %1724 = vmatpush1.msra.mxu0 %v1689
    %1725 = vmatprep.subr.mxu0 0.0
    %1726 = vmatpush1.msra.mxu0 %v1688
    %1727 = vmatprep.subr.mxu0 0.0
    %1728 = vmatpush2.msra.mxu0 0.0
    %1729 = vmatprep.subr.mxu0 0.0
    %1730 = vmatpush2.msra.mxu0 0.0
    %1731 = vmatprep.subr.mxu0 0.0
    %1732 = vmatpush2.msra.mxu0 0.0
    %1733 = vmatprep.subr.mxu0 0.0
    %1734 = vmatpush2.msra.mxu0 0.0
    %1735 = vmatprep.subr.mxu0 0.0
    %1736 = vmatpush2.msra.mxu0 0.0
    %1737 = vmatprep.subr.mxu0 0.0
    %1738 = vmatpush2.msra.mxu0 0.0
    %1739 = vmatprep.subr.mxu0 0.0
    %1740 = vmatpush2.msra.mxu0 0.0
    %1741 = vmatprep.subr.mxu0 0.0
    %1742 = vmatpush2.msra.mxu0 0.0
    %1743 = vmatprep.subr.mxu0 0.0
    %1744 = vmatpush2.msra.mxu0 0.0
    %1745 = vmatprep.subr.mxu0 0.0
    %1746 = vmatpush2.msra.mxu0 0.0
    %1747 = vmatprep.subr.mxu0 0.0
    %1748 = vmatpush2.msra.mxu0 0.0
    %1749 = vmatprep.subr.mxu0 0.0
    %1750 = vmatpush2.msra.mxu0 0.0
    %1751 = vmatprep.subr.mxu0 0.0
    %1752 = vmatpush2.msra.mxu0 0.0
    %1753 = vmatprep.subr.mxu0 0.0
    %1754 = vmatpush2.msra.mxu0 0.0
    %1755 = vmatprep.subr.mxu0 0.0
    %1756 = vmatpush2.msra.mxu0 0.0
    %1757 = vmatprep.subr.mxu0 0.0
    %1758 = vmatpush2.msra.mxu0 0.0
    %1759 = vmatprep.mubr.f32.mxu0 0.0
    %1760 = vmatmul.mubr.f32.gmra.mxu0 %v1693
    %v1761 = vpop.f32.mrf.mxu0
    %v1762 = vadd.f32 0.0, %v1761
    %v1763 = vpop.f32.mrf.mxu0
    %1764 = vdwg.mxu0
    %v1765 = vadd.f32 %v1687, %v1762
    %v1766 = vld [vmem:[#allocation3] sm:$0x3]
    %v1767 = vxor.u32 %v1765, 2147483648
    %v1768 = vmul.f32 %v1767, 1.442695
    %v1769 = vpow.pop %v1768
    %v1770 = vadd.f32 %v1769, 1.0
    %v1771 = vrcp.pop %v1770
    %v1772 = vmul.f32 1.0, %v1771
    %v1773 = vtanh.pop %v1765
    %1775 = vrot.lane.b32.xlu0 %v1766, 32
    %v1776 = vpop.permute.xlu0 %1775
    %v1778 = vmul.f32 %v1772, %v1776
    %1780 = vrot.lane.b32.xlu0 %v1773, 64
    %v1781 = vpop.permute.xlu0 %1780
    %v1783 = vmul.f32 %v1772, %v1781
    %1785 = vrot.lane.b32.xlu0 %v1783, 32
    %v1786 = vpop.permute.xlu0 %1785
    %v1788 = vadd.f32 %v1778, %v1786
    %v1789 = vtanh.pop %v1788
    %1791 = vrot.lane.b32.xlu0 %v1789, 64
    %v1792 = vpop.permute.xlu0 %1791
    %v1794 = vmul.f32 %v1772, %v1792
    %1796 = vrot.lane.b32.xlu0 %v1794, 32
    %v1797 = vpop.permute.xlu0 %1796
    %1799 = vst.msk [vmem:[#allocation2] sm:$0x3] %vm191, %v1797
    %1801 = vrot.lane.b32.xlu0 %v1788, 96
    %v1802 = vpop.permute.xlu0 %1801
    %1804 = vst.msk [vmem:[#allocation3] sm:$0x3] %vm191, %v1802
    %v1805 = vld [vmem:[%s198] sm:$0x3]
    %v1806 = vld [vmem:[#allocation7] sm:$0xff]
    %v1807 = vld [vmem:[#allocation7 + $0x8] sm:$0xff]
    %v1808 = vld [vmem:[#allocation7 + $0x10] sm:$0xff]
    %v1809 = vld [vmem:[#allocation7 + $0x18] sm:$0xff]
    %v1810 = vld [vmem:[#allocation9] sm:$0xff]
    %v1811 = vld [vmem:[#allocation9 + $0x8] sm:$0xff]
    %v1812 = vld [vmem:[#allocation9 + $0x10] sm:$0xff]
    %v1813 = vld [vmem:[#allocation9 + $0x18] sm:$0xff]
    %v1815 = vsel %vm83, %v1805, 0
    %1817 = vmatprep.subr.mxu0 0.0
    %1818 = vmatpush1.msra.mxu0 0.0
    %1819 = vmatprep.subr.mxu0 0.0
    %1820 = vmatpush1.msra.mxu0 0.0
    %1821 = vmatprep.subr.mxu0 0.0
    %1822 = vmatpush1.msra.mxu0 0.0
    %1823 = vmatprep.subr.mxu0 0.0
    %1824 = vmatpush1.msra.mxu0 0.0
    %1825 = vmatprep.subr.mxu0 0.0
    %1826 = vmatpush1.msra.mxu0 0.0
    %1827 = vmatprep.subr.mxu0 0.0
    %1828 = vmatpush1.msra.mxu0 0.0
    %1829 = vmatprep.subr.mxu0 0.0
    %1830 = vmatpush1.msra.mxu0 0.0
    %1831 = vmatprep.subr.mxu0 0.0
    %1832 = vmatpush1.msra.mxu0 0.0
    %1833 = vmatprep.subr.mxu0 0.0
    %1834 = vmatpush1.msra.mxu0 0.0
    %1835 = vmatprep.subr.mxu0 0.0
    %1836 = vmatpush1.msra.mxu0 0.0
    %1837 = vmatprep.subr.mxu0 0.0
    %1838 = vmatpush1.msra.mxu0 0.0
    %1839 = vmatprep.subr.mxu0 0.0
    %1840 = vmatpush1.msra.mxu0 0.0
    %1841 = vmatprep.subr.mxu0 0.0
    %1842 = vmatpush1.msra.mxu0 %v1813
    %1843 = vmatprep.subr.mxu0 0.0
    %1844 = vmatpush1.msra.mxu0 %v1812
    %1845 = vmatprep.subr.mxu0 0.0
    %1846 = vmatpush1.msra.mxu0 %v1811
    %1847 = vmatprep.subr.mxu0 0.0
    %1848 = vmatpush1.msra.mxu0 %v1810
    %1849 = vmatprep.subr.mxu0 0.0
    %1850 = vmatpush2.msra.mxu0 0.0
    %1851 = vmatprep.subr.mxu0 0.0
    %1852 = vmatpush2.msra.mxu0 0.0
    %1853 = vmatprep.subr.mxu0 0.0
    %1854 = vmatpush2.msra.mxu0 0.0
    %1855 = vmatprep.subr.mxu0 0.0
    %1856 = vmatpush2.msra.mxu0 0.0
    %1857 = vmatprep.subr.mxu0 0.0
    %1858 = vmatpush2.msra.mxu0 0.0
    %1859 = vmatprep.subr.mxu0 0.0
    %1860 = vmatpush2.msra.mxu0 0.0
    %1861 = vmatprep.subr.mxu0 0.0
    %1862 = vmatpush2.msra.mxu0 0.0
    %1863 = vmatprep.subr.mxu0 0.0
    %1864 = vmatpush2.msra.mxu0 0.0
    %1865 = vmatprep.subr.mxu0 0.0
    %1866 = vmatpush2.msra.mxu0 0.0
    %1867 = vmatprep.subr.mxu0 0.0
    %1868 = vmatpush2.msra.mxu0 0.0
    %1869 = vmatprep.subr.mxu0 0.0
    %1870 = vmatpush2.msra.mxu0 0.0
    %1871 = vmatprep.subr.mxu0 0.0
    %1872 = vmatpush2.msra.mxu0 0.0
    %1873 = vmatprep.subr.mxu0 0.0
    %1874 = vmatpush2.msra.mxu0 0.0
    %1875 = vmatprep.subr.mxu0 0.0
    %1876 = vmatpush2.msra.mxu0 0.0
    %1877 = vmatprep.subr.mxu0 0.0
    %1878 = vmatpush2.msra.mxu0 0.0
    %1879 = vmatprep.subr.mxu0 0.0
    %1880 = vmatpush2.msra.mxu0 0.0
    %1881 = vmatprep.mubr.f32.mxu0 0.0
    %1882 = vmatmul.mubr.f32.gmra.mxu0 %v1815
    %v1883 = vpop.f32.mrf.mxu0
    %v1884 = vadd.f32 0.0, %v1883
    %v1885 = vpop.f32.mrf.mxu0
    %1886 = vdwg.mxu0
    %v1887 = vsel %vm83, %v1797, 0
    %1889 = vmatprep.subr.mxu0 0.0
    %1890 = vmatpush1.msra.mxu0 0.0
    %1891 = vmatprep.subr.mxu0 0.0
    %1892 = vmatpush1.msra.mxu0 0.0
    %1893 = vmatprep.subr.mxu0 0.0
    %1894 = vmatpush1.msra.mxu0 0.0
    %1895 = vmatprep.subr.mxu0 0.0
    %1896 = vmatpush1.msra.mxu0 0.0
    %1897 = vmatprep.subr.mxu0 0.0
    %1898 = vmatpush1.msra.mxu0 0.0
    %1899 = vmatprep.subr.mxu0 0.0
    %1900 = vmatpush1.msra.mxu0 0.0
    %1901 = vmatprep.subr.mxu0 0.0
    %1902 = vmatpush1.msra.mxu0 0.0
    %1903 = vmatprep.subr.mxu0 0.0
    %1904 = vmatpush1.msra.mxu0 0.0
    %1905 = vmatprep.subr.mxu0 0.0
    %1906 = vmatpush1.msra.mxu0 0.0
    %1907 = vmatprep.subr.mxu0 0.0
    %1908 = vmatpush1.msra.mxu0 0.0
    %1909 = vmatprep.subr.mxu0 0.0
    %1910 = vmatpush1.msra.mxu0 0.0
    %1911 = vmatprep.subr.mxu0 0.0
    %1912 = vmatpush1.msra.mxu0 0.0
    %1913 = vmatprep.subr.mxu0 0.0
    %1914 = vmatpush1.msra.mxu0 %v1809
    %1915 = vmatprep.subr.mxu0 0.0
    %1916 = vmatpush1.msra.mxu0 %v1808
    %1917 = vmatprep.subr.mxu0 0.0
    %1918 = vmatpush1.msra.mxu0 %v1807
    %1919 = vmatprep.subr.mxu0 0.0
    %1920 = vmatpush1.msra.mxu0 %v1806
    %1921 = vmatprep.subr.mxu0 0.0
    %1922 = vmatpush2.msra.mxu0 0.0
    %1923 = vmatprep.subr.mxu0 0.0
    %1924 = vmatpush2.msra.mxu0 0.0
    %1925 = vmatprep.subr.mxu0 0.0
    %1926 = vmatpush2.msra.mxu0 0.0
    %1927 = vmatprep.subr.mxu0 0.0
    %1928 = vmatpush2.msra.mxu0 0.0
    %1929 = vmatprep.subr.mxu0 0.0
    %1930 = vmatpush2.msra.mxu0 0.0
    %1931 = vmatprep.subr.mxu0 0.0
    %1932 = vmatpush2.msra.mxu0 0.0
    %1933 = vmatprep.subr.mxu0 0.0
    %1934 = vmatpush2.msra.mxu0 0.0
    %1935 = vmatprep.subr.mxu0 0.0
    %1936 = vmatpush2.msra.mxu0 0.0
    %1937 = vmatprep.subr.mxu0 0.0
    %1938 = vmatpush2.msra.mxu0 0.0
    %1939 = vmatprep.subr.mxu0 0.0
    %1940 = vmatpush2.msra.mxu0 0.0
    %1941 = vmatprep.subr.mxu0 0.0
    %1942 = vmatpush2.msra.mxu0 0.0
    %1943 = vmatprep.subr.mxu0 0.0
    %1944 = vmatpush2.msra.mxu0 0.0
    %1945 = vmatprep.subr.mxu0 0.0
    %1946 = vmatpush2.msra.mxu0 0.0
    %1947 = vmatprep.subr.mxu0 0.0
    %1948 = vmatpush2.msra.mxu0 0.0
    %1949 = vmatprep.subr.mxu0 0.0
    %1950 = vmatpush2.msra.mxu0 0.0
    %1951 = vmatprep.subr.mxu0 0.0
    %1952 = vmatpush2.msra.mxu0 0.0
    %1953 = vmatprep.mubr.f32.mxu0 0.0
    %1954 = vmatmul.mubr.f32.gmra.mxu0 %v1887
    %v1955 = vpop.f32.mrf.mxu0
    %v1956 = vadd.f32 %v1884, %v1955
    %v1957 = vpop.f32.mrf.mxu0
    %1958 = vdwg.mxu0
    %v1959 = vld [vmem:[%s4] sm:$0x1]
    %v1961 = vlaneseq
    %v1962 = vshrl.u32 %v1961, 7
    %v1963 = vsub.s32 0, %v1962
    %v1964 = vrot.slane %v1959, %v1963
    %v1966 = vadd.f32 %v1956, %v1964
    %v1967 = vld [vmem:[%s361] sm:$0x3]
    %v1968 = vxor.u32 %v1966, 2147483648
    %v1969 = vmul.f32 %v1968, 1.442695
    %v1970 = vpow.pop %v1969
    %v1971 = vadd.f32 %v1970, 1.0
    %v1972 = vrcp.pop %v1971
    %v1973 = vmul.f32 1.0, %v1972
    %v1974 = vtanh.pop %v1966
    %1976 = vrot.lane.b32.xlu0 %v1967, 32
    %v1977 = vpop.permute.xlu0 %1976
    %v1979 = vmul.f32 %v1973, %v1977
    %1981 = vrot.lane.b32.xlu0 %v1974, 64
    %v1982 = vpop.permute.xlu0 %1981
    %v1984 = vmul.f32 %v1973, %v1982
    %1986 = vrot.lane.b32.xlu0 %v1984, 32
    %v1987 = vpop.permute.xlu0 %1986
    %v1989 = vadd.f32 %v1979, %v1987
    %v1990 = vtanh.pop %v1989
    %1992 = vrot.lane.b32.xlu0 %v1990, 64
    %v1993 = vpop.permute.xlu0 %1992
    %v1995 = vmul.f32 %v1973, %v1993
    %1997 = vrot.lane.b32.xlu0 %v1995, 32
    %v1998 = vpop.permute.xlu0 %1997
    %2000 = vst.msk [vmem:[%s198] sm:$0x3] %vm191, %v1998
    %2002 = vrot.lane.b32.xlu0 %v1989, 96
    %v2003 = vpop.permute.xlu0 %2002
    %2005 = vst.msk [vmem:[%s361] sm:$0x3] %vm191, %v2003
    %v2006 = vld [vmem:[#allocation2] sm:$0x3]
    %s2007 = scalar_lea.vmem [#allocation4], 12
    %v2008 = vld [vmem:[%s2007] sm:$0x3]
    %v2009 = vld [vmem:[%s1] sm:$0xff]
    %v2010 = vld [vmem:[%s1 + $0x8] sm:$0xff]
    %v2011 = vld [vmem:[%s1 + $0x10] sm:$0xff]
    %v2012 = vld [vmem:[%s1 + $0x18] sm:$0xff]
    %v2014 = vsel %vm83, %v2006, 0
    %2016 = vmatprep.subr.mxu0 0.0
    %2017 = vmatpush1.msra.mxu0 0.0
    %2018 = vmatprep.subr.mxu0 0.0
    %2019 = vmatpush1.msra.mxu0 0.0
    %2020 = vmatprep.subr.mxu0 0.0
    %2021 = vmatpush1.msra.mxu0 0.0
    %2022 = vmatprep.subr.mxu0 0.0
    %2023 = vmatpush1.msra.mxu0 0.0
    %2024 = vmatprep.subr.mxu0 0.0
    %2025 = vmatpush1.msra.mxu0 0.0
    %2026 = vmatprep.subr.mxu0 0.0
    %2027 = vmatpush1.msra.mxu0 0.0
    %2028 = vmatprep.subr.mxu0 0.0
    %2029 = vmatpush1.msra.mxu0 0.0
    %2030 = vmatprep.subr.mxu0 0.0
    %2031 = vmatpush1.msra.mxu0 0.0
    %2032 = vmatprep.subr.mxu0 0.0
    %2033 = vmatpush1.msra.mxu0 0.0
    %2034 = vmatprep.subr.mxu0 0.0
    %2035 = vmatpush1.msra.mxu0 0.0
    %2036 = vmatprep.subr.mxu0 0.0
    %2037 = vmatpush1.msra.mxu0 0.0
    %2038 = vmatprep.subr.mxu0 0.0
    %2039 = vmatpush1.msra.mxu0 0.0
    %2040 = vmatprep.subr.mxu0 0.0
    %2041 = vmatpush1.msra.mxu0 %v2012
    %2042 = vmatprep.subr.mxu0 0.0
    %2043 = vmatpush1.msra.mxu0 %v2011
    %2044 = vmatprep.subr.mxu0 0.0
    %2045 = vmatpush1.msra.mxu0 %v2010
    %2046 = vmatprep.subr.mxu0 0.0
    %2047 = vmatpush1.msra.mxu0 %v2009
    %2048 = vmatprep.subr.mxu0 0.0
    %2049 = vmatpush2.msra.mxu0 0.0
    %2050 = vmatprep.subr.mxu0 0.0
    %2051 = vmatpush2.msra.mxu0 0.0
    %2052 = vmatprep.subr.mxu0 0.0
    %2053 = vmatpush2.msra.mxu0 0.0
    %2054 = vmatprep.subr.mxu0 0.0
    %2055 = vmatpush2.msra.mxu0 0.0
    %2056 = vmatprep.subr.mxu0 0.0
    %2057 = vmatpush2.msra.mxu0 0.0
    %2058 = vmatprep.subr.mxu0 0.0
    %2059 = vmatpush2.msra.mxu0 0.0
    %2060 = vmatprep.subr.mxu0 0.0
    %2061 = vmatpush2.msra.mxu0 0.0
    %2062 = vmatprep.subr.mxu0 0.0
    %2063 = vmatpush2.msra.mxu0 0.0
    %2064 = vmatprep.subr.mxu0 0.0
    %2065 = vmatpush2.msra.mxu0 0.0
    %2066 = vmatprep.subr.mxu0 0.0
    %2067 = vmatpush2.msra.mxu0 0.0
    %2068 = vmatprep.subr.mxu0 0.0
    %2069 = vmatpush2.msra.mxu0 0.0
    %2070 = vmatprep.subr.mxu0 0.0
    %2071 = vmatpush2.msra.mxu0 0.0
    %2072 = vmatprep.subr.mxu0 0.0
    %2073 = vmatpush2.msra.mxu0 0.0
    %2074 = vmatprep.subr.mxu0 0.0
    %2075 = vmatpush2.msra.mxu0 0.0
    %2076 = vmatprep.subr.mxu0 0.0
    %2077 = vmatpush2.msra.mxu0 0.0
    %2078 = vmatprep.subr.mxu0 0.0
    %2079 = vmatpush2.msra.mxu0 0.0
    %2080 = vmatprep.mubr.f32.mxu0 0.0
    %2081 = vmatmul.mubr.f32.gmra.mxu0 %v2014
    %v2082 = vpop.f32.mrf.mxu0
    %v2083 = vadd.f32 0.0, %v2082
    %v2084 = vpop.f32.mrf.mxu0
    %2085 = vdwg.mxu0
    %v2086 = vadd.f32 %v2008, %v2083
    %v2087 = vld [vmem:[#allocation3] sm:$0x3]
    %v2088 = vxor.u32 %v2086, 2147483648
    %v2089 = vmul.f32 %v2088, 1.442695
    %v2090 = vpow.pop %v2089
    %v2091 = vadd.f32 %v2090, 1.0
    %v2092 = vrcp.pop %v2091
    %v2093 = vmul.f32 1.0, %v2092
    %v2094 = vtanh.pop %v2086
    %2096 = vrot.lane.b32.xlu0 %v2087, 32
    %v2097 = vpop.permute.xlu0 %2096
    %v2099 = vmul.f32 %v2093, %v2097
    %2101 = vrot.lane.b32.xlu0 %v2094, 64
    %v2102 = vpop.permute.xlu0 %2101
    %v2104 = vmul.f32 %v2093, %v2102
    %2106 = vrot.lane.b32.xlu0 %v2104, 32
    %v2107 = vpop.permute.xlu0 %2106
    %v2109 = vadd.f32 %v2099, %v2107
    %v2110 = vtanh.pop %v2109
    %2112 = vrot.lane.b32.xlu0 %v2110, 64
    %v2113 = vpop.permute.xlu0 %2112
    %v2115 = vmul.f32 %v2093, %v2113
    %2117 = vrot.lane.b32.xlu0 %v2115, 32
    %v2118 = vpop.permute.xlu0 %2117
    %2120 = vst.msk [vmem:[#allocation2] sm:$0x3] %vm191, %v2118
    %2122 = vrot.lane.b32.xlu0 %v2109, 96
    %v2123 = vpop.permute.xlu0 %2122
    %2125 = vst.msk [vmem:[#allocation3] sm:$0x3] %vm191, %v2123
    %v2126 = vld [vmem:[%s198] sm:$0x3]
    %v2127 = vld [vmem:[#allocation7] sm:$0xff]
    %v2128 = vld [vmem:[#allocation7 + $0x8] sm:$0xff]
    %v2129 = vld [vmem:[#allocation7 + $0x10] sm:$0xff]
    %v2130 = vld [vmem:[#allocation7 + $0x18] sm:$0xff]
    %v2131 = vld [vmem:[#allocation9] sm:$0xff]
    %v2132 = vld [vmem:[#allocation9 + $0x8] sm:$0xff]
    %v2133 = vld [vmem:[#allocation9 + $0x10] sm:$0xff]
    %v2134 = vld [vmem:[#allocation9 + $0x18] sm:$0xff]
    %v2136 = vsel %vm83, %v2126, 0
    %2138 = vmatprep.subr.mxu0 0.0
    %2139 = vmatpush1.msra.mxu0 0.0
    %2140 = vmatprep.subr.mxu0 0.0
    %2141 = vmatpush1.msra.mxu0 0.0
    %2142 = vmatprep.subr.mxu0 0.0
    %2143 = vmatpush1.msra.mxu0 0.0
    %2144 = vmatprep.subr.mxu0 0.0
    %2145 = vmatpush1.msra.mxu0 0.0
    %2146 = vmatprep.subr.mxu0 0.0
    %2147 = vmatpush1.msra.mxu0 0.0
    %2148 = vmatprep.subr.mxu0 0.0
    %2149 = vmatpush1.msra.mxu0 0.0
    %2150 = vmatprep.subr.mxu0 0.0
    %2151 = vmatpush1.msra.mxu0 0.0
    %2152 = vmatprep.subr.mxu0 0.0
    %2153 = vmatpush1.msra.mxu0 0.0
    %2154 = vmatprep.subr.mxu0 0.0
    %2155 = vmatpush1.msra.mxu0 0.0
    %2156 = vmatprep.subr.mxu0 0.0
    %2157 = vmatpush1.msra.mxu0 0.0
    %2158 = vmatprep.subr.mxu0 0.0
    %2159 = vmatpush1.msra.mxu0 0.0
    %2160 = vmatprep.subr.mxu0 0.0
    %2161 = vmatpush1.msra.mxu0 0.0
    %2162 = vmatprep.subr.mxu0 0.0
    %2163 = vmatpush1.msra.mxu0 %v2134
    %2164 = vmatprep.subr.mxu0 0.0
    %2165 = vmatpush1.msra.mxu0 %v2133
    %2166 = vmatprep.subr.mxu0 0.0
    %2167 = vmatpush1.msra.mxu0 %v2132
    %2168 = vmatprep.subr.mxu0 0.0
    %2169 = vmatpush1.msra.mxu0 %v2131
    %2170 = vmatprep.subr.mxu0 0.0
    %2171 = vmatpush2.msra.mxu0 0.0
    %2172 = vmatprep.subr.mxu0 0.0
    %2173 = vmatpush2.msra.mxu0 0.0
    %2174 = vmatprep.subr.mxu0 0.0
    %2175 = vmatpush2.msra.mxu0 0.0
    %2176 = vmatprep.subr.mxu0 0.0
    %2177 = vmatpush2.msra.mxu0 0.0
    %2178 = vmatprep.subr.mxu0 0.0
    %2179 = vmatpush2.msra.mxu0 0.0
    %2180 = vmatprep.subr.mxu0 0.0
    %2181 = vmatpush2.msra.mxu0 0.0
    %2182 = vmatprep.subr.mxu0 0.0
    %2183 = vmatpush2.msra.mxu0 0.0
    %2184 = vmatprep.subr.mxu0 0.0
    %2185 = vmatpush2.msra.mxu0 0.0
    %2186 = vmatprep.subr.mxu0 0.0
    %2187 = vmatpush2.msra.mxu0 0.0
    %2188 = vmatprep.subr.mxu0 0.0
    %2189 = vmatpush2.msra.mxu0 0.0
    %2190 = vmatprep.subr.mxu0 0.0
    %2191 = vmatpush2.msra.mxu0 0.0
    %2192 = vmatprep.subr.mxu0 0.0
    %2193 = vmatpush2.msra.mxu0 0.0
    %2194 = vmatprep.subr.mxu0 0.0
    %2195 = vmatpush2.msra.mxu0 0.0
    %2196 = vmatprep.subr.mxu0 0.0
    %2197 = vmatpush2.msra.mxu0 0.0
    %2198 = vmatprep.subr.mxu0 0.0
    %2199 = vmatpush2.msra.mxu0 0.0
    %2200 = vmatprep.subr.mxu0 0.0
    %2201 = vmatpush2.msra.mxu0 0.0
    %2202 = vmatprep.mubr.f32.mxu0 0.0
    %2203 = vmatmul.mubr.f32.gmra.mxu0 %v2136
    %v2204 = vpop.f32.mrf.mxu0
    %v2205 = vadd.f32 0.0, %v2204
    %v2206 = vpop.f32.mrf.mxu0
    %2207 = vdwg.mxu0
    %v2208 = vsel %vm83, %v2118, 0
    %2210 = vmatprep.subr.mxu0 0.0
    %2211 = vmatpush1.msra.mxu0 0.0
    %2212 = vmatprep.subr.mxu0 0.0
    %2213 = vmatpush1.msra.mxu0 0.0
    %2214 = vmatprep.subr.mxu0 0.0
    %2215 = vmatpush1.msra.mxu0 0.0
    %2216 = vmatprep.subr.mxu0 0.0
    %2217 = vmatpush1.msra.mxu0 0.0
    %2218 = vmatprep.subr.mxu0 0.0
    %2219 = vmatpush1.msra.mxu0 0.0
    %2220 = vmatprep.subr.mxu0 0.0
    %2221 = vmatpush1.msra.mxu0 0.0
    %2222 = vmatprep.subr.mxu0 0.0
    %2223 = vmatpush1.msra.mxu0 0.0
    %2224 = vmatprep.subr.mxu0 0.0
    %2225 = vmatpush1.msra.mxu0 0.0
    %2226 = vmatprep.subr.mxu0 0.0
    %2227 = vmatpush1.msra.mxu0 0.0
    %2228 = vmatprep.subr.mxu0 0.0
    %2229 = vmatpush1.msra.mxu0 0.0
    %2230 = vmatprep.subr.mxu0 0.0
    %2231 = vmatpush1.msra.mxu0 0.0
    %2232 = vmatprep.subr.mxu0 0.0
    %2233 = vmatpush1.msra.mxu0 0.0
    %2234 = vmatprep.subr.mxu0 0.0
    %2235 = vmatpush1.msra.mxu0 %v2130
    %2236 = vmatprep.subr.mxu0 0.0
    %2237 = vmatpush1.msra.mxu0 %v2129
    %2238 = vmatprep.subr.mxu0 0.0
    %2239 = vmatpush1.msra.mxu0 %v2128
    %2240 = vmatprep.subr.mxu0 0.0
    %2241 = vmatpush1.msra.mxu0 %v2127
    %2242 = vmatprep.subr.mxu0 0.0
    %2243 = vmatpush2.msra.mxu0 0.0
    %2244 = vmatprep.subr.mxu0 0.0
    %2245 = vmatpush2.msra.mxu0 0.0
    %2246 = vmatprep.subr.mxu0 0.0
    %2247 = vmatpush2.msra.mxu0 0.0
    %2248 = vmatprep.subr.mxu0 0.0
    %2249 = vmatpush2.msra.mxu0 0.0
    %2250 = vmatprep.subr.mxu0 0.0
    %2251 = vmatpush2.msra.mxu0 0.0
    %2252 = vmatprep.subr.mxu0 0.0
    %2253 = vmatpush2.msra.mxu0 0.0
    %2254 = vmatprep.subr.mxu0 0.0
    %2255 = vmatpush2.msra.mxu0 0.0
    %2256 = vmatprep.subr.mxu0 0.0
    %2257 = vmatpush2.msra.mxu0 0.0
    %2258 = vmatprep.subr.mxu0 0.0
    %2259 = vmatpush2.msra.mxu0 0.0
    %2260 = vmatprep.subr.mxu0 0.0
    %2261 = vmatpush2.msra.mxu0 0.0
    %2262 = vmatprep.subr.mxu0 0.0
    %2263 = vmatpush2.msra.mxu0 0.0
    %2264 = vmatprep.subr.mxu0 0.0
    %2265 = vmatpush2.msra.mxu0 0.0
    %2266 = vmatprep.subr.mxu0 0.0
    %2267 = vmatpush2.msra.mxu0 0.0
    %2268 = vmatprep.subr.mxu0 0.0
    %2269 = vmatpush2.msra.mxu0 0.0
    %2270 = vmatprep.subr.mxu0 0.0
    %2271 = vmatpush2.msra.mxu0 0.0
    %2272 = vmatprep.subr.mxu0 0.0
    %2273 = vmatpush2.msra.mxu0 0.0
    %2274 = vmatprep.mubr.f32.mxu0 0.0
    %2275 = vmatmul.mubr.f32.gmra.mxu0 %v2208
    %v2276 = vpop.f32.mrf.mxu0
    %v2277 = vadd.f32 %v2205, %v2276
    %v2278 = vpop.f32.mrf.mxu0
    %2279 = vdwg.mxu0
    %v2280 = vld [vmem:[%s4] sm:$0x1]
    %v2282 = vlaneseq
    %v2283 = vshrl.u32 %v2282, 7
    %v2284 = vsub.s32 0, %v2283
    %v2285 = vrot.slane %v2280, %v2284
    %v2287 = vadd.f32 %v2277, %v2285
    %v2288 = vld [vmem:[%s361] sm:$0x3]
    %v2289 = vxor.u32 %v2287, 2147483648
    %v2290 = vmul.f32 %v2289, 1.442695
    %v2291 = vpow.pop %v2290
    %v2292 = vadd.f32 %v2291, 1.0
    %v2293 = vrcp.pop %v2292
    %v2294 = vmul.f32 1.0, %v2293
    %v2295 = vtanh.pop %v2287
    %2297 = vrot.lane.b32.xlu0 %v2288, 32
    %v2298 = vpop.permute.xlu0 %2297
    %v2300 = vmul.f32 %v2294, %v2298
    %2302 = vrot.lane.b32.xlu0 %v2295, 64
    %v2303 = vpop.permute.xlu0 %2302
    %v2305 = vmul.f32 %v2294, %v2303
    %2307 = vrot.lane.b32.xlu0 %v2305, 32
    %v2308 = vpop.permute.xlu0 %2307
    %v2310 = vadd.f32 %v2300, %v2308
    %v2311 = vtanh.pop %v2310
    %2313 = vrot.lane.b32.xlu0 %v2311, 64
    %v2314 = vpop.permute.xlu0 %2313
    %v2316 = vmul.f32 %v2294, %v2314
    %2318 = vrot.lane.b32.xlu0 %v2316, 32
    %v2319 = vpop.permute.xlu0 %2318
    %2321 = vst.msk [vmem:[%s198] sm:$0x3] %vm191, %v2319
    %2323 = vrot.lane.b32.xlu0 %v2310, 96
    %v2324 = vpop.permute.xlu0 %2323
    %2326 = vst.msk [vmem:[%s361] sm:$0x3] %vm191, %v2324
    %v2327 = vld [vmem:[#allocation2] sm:$0x3]
    %s2328 = scalar_lea.vmem [#allocation4], 14
    %v2329 = vld [vmem:[%s2328] sm:$0x3]
    %v2330 = vld [vmem:[%s1] sm:$0xff]
    %v2331 = vld [vmem:[%s1 + $0x8] sm:$0xff]
    %v2332 = vld [vmem:[%s1 + $0x10] sm:$0xff]
    %v2333 = vld [vmem:[%s1 + $0x18] sm:$0xff]
    %v2335 = vsel %vm83, %v2327, 0
    %2337 = vmatprep.subr.mxu0 0.0
    %2338 = vmatpush1.msra.mxu0 0.0
    %2339 = vmatprep.subr.mxu0 0.0
    %2340 = vmatpush1.msra.mxu0 0.0
    %2341 = vmatprep.subr.mxu0 0.0
    %2342 = vmatpush1.msra.mxu0 0.0
    %2343 = vmatprep.subr.mxu0 0.0
    %2344 = vmatpush1.msra.mxu0 0.0
    %2345 = vmatprep.subr.mxu0 0.0
    %2346 = vmatpush1.msra.mxu0 0.0
    %2347 = vmatprep.subr.mxu0 0.0
    %2348 = vmatpush1.msra.mxu0 0.0
    %2349 = vmatprep.subr.mxu0 0.0
    %2350 = vmatpush1.msra.mxu0 0.0
    %2351 = vmatprep.subr.mxu0 0.0
    %2352 = vmatpush1.msra.mxu0 0.0
    %2353 = vmatprep.subr.mxu0 0.0
    %2354 = vmatpush1.msra.mxu0 0.0
    %2355 = vmatprep.subr.mxu0 0.0
    %2356 = vmatpush1.msra.mxu0 0.0
    %2357 = vmatprep.subr.mxu0 0.0
    %2358 = vmatpush1.msra.mxu0 0.0
    %2359 = vmatprep.subr.mxu0 0.0
    %2360 = vmatpush1.msra.mxu0 0.0
    %2361 = vmatprep.subr.mxu0 0.0
    %2362 = vmatpush1.msra.mxu0 %v2333
    %2363 = vmatprep.subr.mxu0 0.0
    %2364 = vmatpush1.msra.mxu0 %v2332
    %2365 = vmatprep.subr.mxu0 0.0
    %2366 = vmatpush1.msra.mxu0 %v2331
    %2367 = vmatprep.subr.mxu0 0.0
    %2368 = vmatpush1.msra.mxu0 %v2330
    %2369 = vmatprep.subr.mxu0 0.0
    %2370 = vmatpush2.msra.mxu0 0.0
    %2371 = vmatprep.subr.mxu0 0.0
    %2372 = vmatpush2.msra.mxu0 0.0
    %2373 = vmatprep.subr.mxu0 0.0
    %2374 = vmatpush2.msra.mxu0 0.0
    %2375 = vmatprep.subr.mxu0 0.0
    %2376 = vmatpush2.msra.mxu0 0.0
    %2377 = vmatprep.subr.mxu0 0.0
    %2378 = vmatpush2.msra.mxu0 0.0
    %2379 = vmatprep.subr.mxu0 0.0
    %2380 = vmatpush2.msra.mxu0 0.0
    %2381 = vmatprep.subr.mxu0 0.0
    %2382 = vmatpush2.msra.mxu0 0.0
    %2383 = vmatprep.subr.mxu0 0.0
    %2384 = vmatpush2.msra.mxu0 0.0
    %2385 = vmatprep.subr.mxu0 0.0
    %2386 = vmatpush2.msra.mxu0 0.0
    %2387 = vmatprep.subr.mxu0 0.0
    %2388 = vmatpush2.msra.mxu0 0.0
    %2389 = vmatprep.subr.mxu0 0.0
    %2390 = vmatpush2.msra.mxu0 0.0
    %2391 = vmatprep.subr.mxu0 0.0
    %2392 = vmatpush2.msra.mxu0 0.0
    %2393 = vmatprep.subr.mxu0 0.0
    %2394 = vmatpush2.msra.mxu0 0.0
    %2395 = vmatprep.subr.mxu0 0.0
    %2396 = vmatpush2.msra.mxu0 0.0
    %2397 = vmatprep.subr.mxu0 0.0
    %2398 = vmatpush2.msra.mxu0 0.0
    %2399 = vmatprep.subr.mxu0 0.0
    %2400 = vmatpush2.msra.mxu0 0.0
    %2401 = vmatprep.mubr.f32.mxu0 0.0
    %2402 = vmatmul.mubr.f32.gmra.mxu0 %v2335
    %v2403 = vpop.f32.mrf.mxu0
    %v2404 = vadd.f32 0.0, %v2403
    %v2405 = vpop.f32.mrf.mxu0
    %2406 = vdwg.mxu0
    %v2407 = vadd.f32 %v2329, %v2404
    %v2408 = vld [vmem:[#allocation3] sm:$0x3]
    %v2409 = vxor.u32 %v2407, 2147483648
    %v2410 = vmul.f32 %v2409, 1.442695
    %v2411 = vpow.pop %v2410
    %v2412 = vadd.f32 %v2411, 1.0
    %v2413 = vrcp.pop %v2412
    %v2414 = vmul.f32 1.0, %v2413
    %v2415 = vtanh.pop %v2407
    %2417 = vrot.lane.b32.xlu0 %v2408, 32
    %v2418 = vpop.permute.xlu0 %2417
    %v2420 = vmul.f32 %v2414, %v2418
    %2422 = vrot.lane.b32.xlu0 %v2415, 64
    %v2423 = vpop.permute.xlu0 %2422
    %v2425 = vmul.f32 %v2414, %v2423
    %2427 = vrot.lane.b32.xlu0 %v2425, 32
    %v2428 = vpop.permute.xlu0 %2427
    %v2430 = vadd.f32 %v2420, %v2428
    %v2431 = vtanh.pop %v2430
    %2433 = vrot.lane.b32.xlu0 %v2431, 64
    %v2434 = vpop.permute.xlu0 %2433
    %v2436 = vmul.f32 %v2414, %v2434
    %2438 = vrot.lane.b32.xlu0 %v2436, 32
    %v2439 = vpop.permute.xlu0 %2438
    %2441 = vst.msk [vmem:[#allocation2] sm:$0x3] %vm191, %v2439
    %2443 = vrot.lane.b32.xlu0 %v2430, 96
    %v2444 = vpop.permute.xlu0 %2443
    %2446 = vst.msk [vmem:[#allocation3] sm:$0x3] %vm191, %v2444
    %v2447 = vld [vmem:[%s198] sm:$0x3]
    %v2448 = vld [vmem:[#allocation7] sm:$0xff]
    %v2449 = vld [vmem:[#allocation7 + $0x8] sm:$0xff]
    %v2450 = vld [vmem:[#allocation7 + $0x10] sm:$0xff]
    %v2451 = vld [vmem:[#allocation7 + $0x18] sm:$0xff]
    %v2452 = vld [vmem:[#allocation9] sm:$0xff]
    %v2453 = vld [vmem:[#allocation9 + $0x8] sm:$0xff]
    %v2454 = vld [vmem:[#allocation9 + $0x10] sm:$0xff]
    %v2455 = vld [vmem:[#allocation9 + $0x18] sm:$0xff]
    %v2457 = vsel %vm83, %v2447, 0
    %2459 = vmatprep.subr.mxu0 0.0
    %2460 = vmatpush1.msra.mxu0 0.0
    %2461 = vmatprep.subr.mxu0 0.0
    %2462 = vmatpush1.msra.mxu0 0.0
    %2463 = vmatprep.subr.mxu0 0.0
    %2464 = vmatpush1.msra.mxu0 0.0
    %2465 = vmatprep.subr.mxu0 0.0
    %2466 = vmatpush1.msra.mxu0 0.0
    %2467 = vmatprep.subr.mxu0 0.0
    %2468 = vmatpush1.msra.mxu0 0.0
    %2469 = vmatprep.subr.mxu0 0.0
    %2470 = vmatpush1.msra.mxu0 0.0
    %2471 = vmatprep.subr.mxu0 0.0
    %2472 = vmatpush1.msra.mxu0 0.0
    %2473 = vmatprep.subr.mxu0 0.0
    %2474 = vmatpush1.msra.mxu0 0.0
    %2475 = vmatprep.subr.mxu0 0.0
    %2476 = vmatpush1.msra.mxu0 0.0
    %2477 = vmatprep.subr.mxu0 0.0
    %2478 = vmatpush1.msra.mxu0 0.0
    %2479 = vmatprep.subr.mxu0 0.0
    %2480 = vmatpush1.msra.mxu0 0.0
    %2481 = vmatprep.subr.mxu0 0.0
    %2482 = vmatpush1.msra.mxu0 0.0
    %2483 = vmatprep.subr.mxu0 0.0
    %2484 = vmatpush1.msra.mxu0 %v2455
    %2485 = vmatprep.subr.mxu0 0.0
    %2486 = vmatpush1.msra.mxu0 %v2454
    %2487 = vmatprep.subr.mxu0 0.0
    %2488 = vmatpush1.msra.mxu0 %v2453
    %2489 = vmatprep.subr.mxu0 0.0
    %2490 = vmatpush1.msra.mxu0 %v2452
    %2491 = vmatprep.subr.mxu0 0.0
    %2492 = vmatpush2.msra.mxu0 0.0
    %2493 = vmatprep.subr.mxu0 0.0
    %2494 = vmatpush2.msra.mxu0 0.0
    %2495 = vmatprep.subr.mxu0 0.0
    %2496 = vmatpush2.msra.mxu0 0.0
    %2497 = vmatprep.subr.mxu0 0.0
    %2498 = vmatpush2.msra.mxu0 0.0
    %2499 = vmatprep.subr.mxu0 0.0
    %2500 = vmatpush2.msra.mxu0 0.0
    %2501 = vmatprep.subr.mxu0 0.0
    %2502 = vmatpush2.msra.mxu0 0.0
    %2503 = vmatprep.subr.mxu0 0.0
    %2504 = vmatpush2.msra.mxu0 0.0
    %2505 = vmatprep.subr.mxu0 0.0
    %2506 = vmatpush2.msra.mxu0 0.0
    %2507 = vmatprep.subr.mxu0 0.0
    %2508 = vmatpush2.msra.mxu0 0.0
    %2509 = vmatprep.subr.mxu0 0.0
    %2510 = vmatpush2.msra.mxu0 0.0
    %2511 = vmatprep.subr.mxu0 0.0
    %2512 = vmatpush2.msra.mxu0 0.0
    %2513 = vmatprep.subr.mxu0 0.0
    %2514 = vmatpush2.msra.mxu0 0.0
    %2515 = vmatprep.subr.mxu0 0.0
    %2516 = vmatpush2.msra.mxu0 0.0
    %2517 = vmatprep.subr.mxu0 0.0
    %2518 = vmatpush2.msra.mxu0 0.0
    %2519 = vmatprep.subr.mxu0 0.0
    %2520 = vmatpush2.msra.mxu0 0.0
    %2521 = vmatprep.subr.mxu0 0.0
    %2522 = vmatpush2.msra.mxu0 0.0
    %2523 = vmatprep.mubr.f32.mxu0 0.0
    %2524 = vmatmul.mubr.f32.gmra.mxu0 %v2457
    %v2525 = vpop.f32.mrf.mxu0
    %v2526 = vadd.f32 0.0, %v2525
    %v2527 = vpop.f32.mrf.mxu0
    %2528 = vdwg.mxu0
    %v2529 = vsel %vm83, %v2439, 0
    %2531 = vmatprep.subr.mxu0 0.0
    %2532 = vmatpush1.msra.mxu0 0.0
    %2533 = vmatprep.subr.mxu0 0.0
    %2534 = vmatpush1.msra.mxu0 0.0
    %2535 = vmatprep.subr.mxu0 0.0
    %2536 = vmatpush1.msra.mxu0 0.0
    %2537 = vmatprep.subr.mxu0 0.0
    %2538 = vmatpush1.msra.mxu0 0.0
    %2539 = vmatprep.subr.mxu0 0.0
    %2540 = vmatpush1.msra.mxu0 0.0
    %2541 = vmatprep.subr.mxu0 0.0
    %2542 = vmatpush1.msra.mxu0 0.0
    %2543 = vmatprep.subr.mxu0 0.0
    %2544 = vmatpush1.msra.mxu0 0.0
    %2545 = vmatprep.subr.mxu0 0.0
    %2546 = vmatpush1.msra.mxu0 0.0
    %2547 = vmatprep.subr.mxu0 0.0
    %2548 = vmatpush1.msra.mxu0 0.0
    %2549 = vmatprep.subr.mxu0 0.0
    %2550 = vmatpush1.msra.mxu0 0.0
    %2551 = vmatprep.subr.mxu0 0.0
    %2552 = vmatpush1.msra.mxu0 0.0
    %2553 = vmatprep.subr.mxu0 0.0
    %2554 = vmatpush1.msra.mxu0 0.0
    %2555 = vmatprep.subr.mxu0 0.0
    %2556 = vmatpush1.msra.mxu0 %v2451
    %2557 = vmatprep.subr.mxu0 0.0
    %2558 = vmatpush1.msra.mxu0 %v2450
    %2559 = vmatprep.subr.mxu0 0.0
    %2560 = vmatpush1.msra.mxu0 %v2449
    %2561 = vmatprep.subr.mxu0 0.0
    %2562 = vmatpush1.msra.mxu0 %v2448
    %2563 = vmatprep.subr.mxu0 0.0
    %2564 = vmatpush2.msra.mxu0 0.0
    %2565 = vmatprep.subr.mxu0 0.0
    %2566 = vmatpush2.msra.mxu0 0.0
    %2567 = vmatprep.subr.mxu0 0.0
    %2568 = vmatpush2.msra.mxu0 0.0
    %2569 = vmatprep.subr.mxu0 0.0
    %2570 = vmatpush2.msra.mxu0 0.0
    %2571 = vmatprep.subr.mxu0 0.0
    %2572 = vmatpush2.msra.mxu0 0.0
    %2573 = vmatprep.subr.mxu0 0.0
    %2574 = vmatpush2.msra.mxu0 0.0
    %2575 = vmatprep.subr.mxu0 0.0
    %2576 = vmatpush2.msra.mxu0 0.0
    %2577 = vmatprep.subr.mxu0 0.0
    %2578 = vmatpush2.msra.mxu0 0.0
    %2579 = vmatprep.subr.mxu0 0.0
    %2580 = vmatpush2.msra.mxu0 0.0
    %2581 = vmatprep.subr.mxu0 0.0
    %2582 = vmatpush2.msra.mxu0 0.0
    %2583 = vmatprep.subr.mxu0 0.0
    %2584 = vmatpush2.msra.mxu0 0.0
    %2585 = vmatprep.subr.mxu0 0.0
    %2586 = vmatpush2.msra.mxu0 0.0
    %2587 = vmatprep.subr.mxu0 0.0
    %2588 = vmatpush2.msra.mxu0 0.0
    %2589 = vmatprep.subr.mxu0 0.0
    %2590 = vmatpush2.msra.mxu0 0.0
    %2591 = vmatprep.subr.mxu0 0.0
    %2592 = vmatpush2.msra.mxu0 0.0
    %2593 = vmatprep.subr.mxu0 0.0
    %2594 = vmatpush2.msra.mxu0 0.0
    %2595 = vmatprep.mubr.f32.mxu0 0.0
    %2596 = vmatmul.mubr.f32.gmra.mxu0 %v2529
    %v2597 = vpop.f32.mrf.mxu0
    %v2598 = vadd.f32 %v2526, %v2597
    %v2599 = vpop.f32.mrf.mxu0
    %2600 = vdwg.mxu0
    %v2601 = vld [vmem:[%s4] sm:$0x1]
    %v2603 = vlaneseq
    %v2604 = vshrl.u32 %v2603, 7
    %v2605 = vsub.s32 0, %v2604
    %v2606 = vrot.slane %v2601, %v2605
    %v2608 = vadd.f32 %v2598, %v2606
    %v2609 = vld [vmem:[%s361] sm:$0x3]
    %v2610 = vxor.u32 %v2608, 2147483648
    %v2611 = vmul.f32 %v2610, 1.442695
    %v2612 = vpow.pop %v2611
    %v2613 = vadd.f32 %v2612, 1.0
    %v2614 = vrcp.pop %v2613
    %v2615 = vmul.f32 1.0, %v2614
    %v2616 = vtanh.pop %v2608
    %2618 = vrot.lane.b32.xlu0 %v2609, 32
    %v2619 = vpop.permute.xlu0 %2618
    %v2621 = vmul.f32 %v2615, %v2619
    %2623 = vrot.lane.b32.xlu0 %v2616, 64
    %v2624 = vpop.permute.xlu0 %2623
    %v2626 = vmul.f32 %v2615, %v2624
    %2628 = vrot.lane.b32.xlu0 %v2626, 32
    %v2629 = vpop.permute.xlu0 %2628
    %v2631 = vadd.f32 %v2621, %v2629
    %v2632 = vtanh.pop %v2631
    %2634 = vrot.lane.b32.xlu0 %v2632, 64
    %v2635 = vpop.permute.xlu0 %2634
    %v2637 = vmul.f32 %v2615, %v2635
    %2639 = vrot.lane.b32.xlu0 %v2637, 32
    %v2640 = vpop.permute.xlu0 %2639
    %2642 = vst.msk [vmem:[%s198] sm:$0x3] %vm191, %v2640
    %2644 = vrot.lane.b32.xlu0 %v2631, 96
    %v2645 = vpop.permute.xlu0 %2644
    %2647 = vst.msk [vmem:[%s361] sm:$0x3] %vm191, %v2645
    // Predicated region
    $region46: #{tpu_custom_call.1} parent=1 // pred_check
      %p2648 = pneg %p68
    $region47: #{tpu_custom_call.1} parent=1 // pred_check_branch
      %2650 = sbr.rel (%p2648) target = $region49
    $region48: #{tpu_custom_call.1} parent=1 // pred_region
      %v2651 = vld [vmem:[%s5] sm:$0xff]
      %v2652 = vld [vmem:[%s5 + $0x8] sm:$0xff]
      %v2653 = vld [vmem:[%s5 + $0x10] sm:$0xff]
      %v2654 = vld [vmem:[%s5 + $0x18] sm:$0xff]
      %v2655 = vld [vmem:[%s6] sm:$0x1]
      %v2657 = vlaneseq
      %v2658 = vshrl.u32 %v2657, 7
      %v2659 = vsub.s32 0, %v2658
      %v2660 = vrot.slane %v2655, %v2659
      %v2662 = vsel %vm83, %v2640, 0
      %2664 = vmatprep.subr.mxu0 0.0
      %2665 = vmatpush1.msra.mxu0 0.0
      %2666 = vmatprep.subr.mxu0 0.0
      %2667 = vmatpush1.msra.mxu0 0.0
      %2668 = vmatprep.subr.mxu0 0.0
      %2669 = vmatpush1.msra.mxu0 0.0
      %2670 = vmatprep.subr.mxu0 0.0
      %2671 = vmatpush1.msra.mxu0 0.0
      %2672 = vmatprep.subr.mxu0 0.0
      %2673 = vmatpush1.msra.mxu0 0.0
      %2674 = vmatprep.subr.mxu0 0.0
      %2675 = vmatpush1.msra.mxu0 0.0
      %2676 = vmatprep.subr.mxu0 0.0
      %2677 = vmatpush1.msra.mxu0 0.0
      %2678 = vmatprep.subr.mxu0 0.0
      %2679 = vmatpush1.msra.mxu0 0.0
      %2680 = vmatprep.subr.mxu0 0.0
      %2681 = vmatpush1.msra.mxu0 0.0
      %2682 = vmatprep.subr.mxu0 0.0
      %2683 = vmatpush1.msra.mxu0 0.0
      %2684 = vmatprep.subr.mxu0 0.0
      %2685 = vmatpush1.msra.mxu0 0.0
      %2686 = vmatprep.subr.mxu0 0.0
      %2687 = vmatpush1.msra.mxu0 0.0
      %2688 = vmatprep.subr.mxu0 0.0
      %2689 = vmatpush1.msra.mxu0 %v2654
      %2690 = vmatprep.subr.mxu0 0.0
      %2691 = vmatpush1.msra.mxu0 %v2653
      %2692 = vmatprep.subr.mxu0 0.0
      %2693 = vmatpush1.msra.mxu0 %v2652
      %2694 = vmatprep.subr.mxu0 0.0
      %2695 = vmatpush1.msra.mxu0 %v2651
      %2696 = vmatprep.subr.mxu0 0.0
      %2697 = vmatpush2.msra.mxu0 0.0
      %2698 = vmatprep.subr.mxu0 0.0
      %2699 = vmatpush2.msra.mxu0 0.0
      %2700 = vmatprep.subr.mxu0 0.0
      %2701 = vmatpush2.msra.mxu0 0.0
      %2702 = vmatprep.subr.mxu0 0.0
      %2703 = vmatpush2.msra.mxu0 0.0
      %2704 = vmatprep.subr.mxu0 0.0
      %2705 = vmatpush2.msra.mxu0 0.0
      %2706 = vmatprep.subr.mxu0 0.0
      %2707 = vmatpush2.msra.mxu0 0.0
      %2708 = vmatprep.subr.mxu0 0.0
      %2709 = vmatpush2.msra.mxu0 0.0
      %2710 = vmatprep.subr.mxu0 0.0
      %2711 = vmatpush2.msra.mxu0 0.0
      %2712 = vmatprep.subr.mxu0 0.0
      %2713 = vmatpush2.msra.mxu0 0.0
      %2714 = vmatprep.subr.mxu0 0.0
      %2715 = vmatpush2.msra.mxu0 0.0
      %2716 = vmatprep.subr.mxu0 0.0
      %2717 = vmatpush2.msra.mxu0 0.0
      %2718 = vmatprep.subr.mxu0 0.0
      %2719 = vmatpush2.msra.mxu0 0.0
      %2720 = vmatprep.subr.mxu0 0.0
      %2721 = vmatpush2.msra.mxu0 0.0
      %2722 = vmatprep.subr.mxu0 0.0
      %2723 = vmatpush2.msra.mxu0 0.0
      %2724 = vmatprep.subr.mxu0 0.0
      %2725 = vmatpush2.msra.mxu0 0.0
      %2726 = vmatprep.subr.mxu0 0.0
      %2727 = vmatpush2.msra.mxu0 0.0
      %2728 = vmatprep.mubr.f32.mxu0 0.0
      %2729 = vmatmul.mubr.f32.gmra.mxu0 %v2662
      %v2730 = vpop.f32.mrf.mxu0
      %v2731 = vadd.f32 %v2660, %v2730
      %v2732 = vpop.f32.mrf.mxu0
      %2733 = vdwg.mxu0
      %vm2734 = vcmask 58368
      %2735 = vst.msk [vmem:[#allocation10] sm:$0x3] %vm2734, %v2731
    $region49: #{tpu_custom_call.1} parent=1 // pred_fallthru
      _
    // Predicated region
    $region50: #{tpu_custom_call.1} parent=1 // pred_check
      _
    $region51: #{tpu_custom_call.1} parent=1 // pred_check_branch
      %2737 = sbr.rel (0) target = $region53
    $region52: #{tpu_custom_call.1} parent=1 // pred_region
      %s2739 = ssub.s32 32, 32
      %2740 = vsyncadd [#allocation6], %s2739
      %s2742 = sshll.u32 [#allocation10], 4
      %s2743 = int_to_ptr.vmem [resolvable:$true] %s2742
      %2745 = dma.vmem_to_hbm [thread:$0]  %s2743, 32, %s7, [#allocation6]
    $region53: #{tpu_custom_call.1} parent=1 // pred_fallthru
      _
    // Predicated region
    $region54: #{tpu_custom_call.1} parent=1 // pred_check
      _
    $region55: #{tpu_custom_call.1} parent=1 // pred_check_branch
      %2747 = sbr.rel (0) target = $region57
    $region56: #{tpu_custom_call.1} parent=1 // pred_region
      %2748 = dma.done [#allocation6], 32
    $region57: #{tpu_custom_call.1} parent=1 // pred_fallthru
      _
    %2749 = vsyncpa [#allocation5], 1
    %2750 = vsyncpa [#allocation8], 1
    %2751 = vsyncpa [#allocation6], 1

</llo_original>
